<compile_context>
chip_gen: v6e
topology: v6e:2x2x1
jax: 0.10.0
libtpu: 0.0.40
codegen_flags: <defaults>
</compile_context>

<pallas_src>
import functools

import jax
import jax.numpy as jnp
from jax.experimental import pallas as pl
from jax.experimental.pallas import tpu as pltpu


# ----------------------------------------------------------------------------
# Fused kernel: 2 GRU layers + attention pooling + fc.
#
# Layouts (Hp = padded hidden, multiple of 128; B = padded batch, mult. of 8):
#   x_ref   : (T*B, D)    time-major; rows [t*B, (t+1)*B) are timestep t (f32)
#   w1_ref  : (D,  3*Hp)  layer-1 input weights, gate order r|z|n   (bf16)
#   u1_ref  : (Hp, 3*Hp)  layer-1 recurrent weights                 (bf16)
#   bi1_ref : (1,  3*Hp)  [b_ir+b_hr | b_iz+b_hz | b_in]            (f32)
#   bhn1_ref: (1,  Hp)    b_hn of layer 1 (stays inside r*(...))    (f32)
#   w2/u2/bi2/bhn2 : same for layer 2 (layer-2 input dim is Hp)
#   wa_ref  : (1, Hp), ba_ref: (1, 1)     attention Linear(H -> 1)  (f32)
#   wf_ref  : (Hp, Op), bf_ref: (1, Op)   final Linear(H -> O)      (f32)
#   out_ref : (B, Op)
# Scratch:
#   gi_ref  : (T*B, 3*Hp) f32 -- hoisted layer-1 input projection.
# ----------------------------------------------------------------------------
def _fused_gru_attn_kernel(x_ref,
                           w1_ref, u1_ref, bi1_ref, bhn1_ref,
                           w2_ref, u2_ref, bi2_ref, bhn2_ref,
                           wa_ref, ba_ref, wf_ref, bf_ref,
                           out_ref,
                           gi_ref):
    f32 = jnp.float32
    bf16 = jnp.bfloat16
    B = out_ref.shape[0]            # padded batch (multiple of 8)
    H = bhn1_ref.shape[-1]          # padded hidden (multiple of 128)
    T = x_ref.shape[0] // B         # timesteps

    # ---- Phase 1: hoisted layer-1 input projection, all gates fused along
    #      lanes: one (T*B, D) @ (D, 3*Hp) MXU matmul, bias folded in once.
    gi_ref[...] = (jnp.dot(x_ref[...].astype(bf16), w1_ref[...],
                           preferred_element_type=f32)
                   + bi1_ref[...])

    # Small constants pre-broadcast once (not re-emitted per unrolled step).
    bi2_b = jnp.broadcast_to(bi2_ref[...], (B, 3 * H))
    bhn1_b = jnp.broadcast_to(bhn1_ref[...], (B, H))
    bhn2_b = jnp.broadcast_to(bhn2_ref[...], (B, H))
    wa = wa_ref[...]
    ba = ba_ref[...]

    # ---- Phase 2: serial recurrence over time (layers 1+2 fused) with
    #      online-softmax attention accumulation.  Only 3 matmuls per step.
    def step(t, carry):
        h1, h2, m, l, acc = carry
        row = pl.multiple_of(t * B, B)                 # sublane-aligned offset

        # layer 1: input half precomputed in gi_ref; recurrent half is one
        # fused (B, Hp) @ (Hp, 3*Hp) matmul.  Weights are read from the VMEM
        # ref *inside* the loop body to keep live ranges short (no spills).
        gi1 = gi_ref[pl.ds(row, B), :]                               # (B, 3H)
        gh1 = jnp.dot(h1.astype(bf16), u1_ref[...],
                      preferred_element_type=f32)                    # (B, 3H)
        r1 = jax.nn.sigmoid(gi1[:, 0:H] + gh1[:, 0:H])
        z1 = jax.nn.sigmoid(gi1[:, H:2 * H] + gh1[:, H:2 * H])
        n1 = jnp.tanh(gi1[:, 2 * H:] + r1 * (gh1[:, 2 * H:] + bhn1_b))
        h1n = (1.0 - z1) * n1 + z1 * h1

        # layer 2: its input projection depends on h1_t, so both matmuls stay
        # in-loop, each fused over the 3 gates.
        gi2 = jnp.dot(h1n.astype(bf16), w2_ref[...],
                      preferred_element_type=f32) + bi2_b
        gh2 = jnp.dot(h2.astype(bf16), u2_ref[...],
                      preferred_element_type=f32)
        r2 = jax.nn.sigmoid(gi2[:, 0:H] + gh2[:, 0:H])
        z2 = jax.nn.sigmoid(gi2[:, H:2 * H] + gh2[:, H:2 * H])
        n2 = jnp.tanh(gi2[:, 2 * H:] + r2 * (gh2[:, 2 * H:] + bhn2_b))
        h2n = (1.0 - z2) * n2 + z2 * h2

        # attention: online softmax over time.  XLU lane-reduce + VPU/EUP
        # updates are free filler while the MXU chain is the bottleneck.
        s = jnp.sum(h2n * wa, axis=-1, keepdims=True) + ba          # (B, 1)
        m_new = jnp.maximum(m, s)
        alpha = jnp.exp(m - m_new)
        p = jnp.exp(s - m_new)
        l_new = alpha * l + p
        acc_new = alpha * acc + p * h2n
        return h1n, h2n, m_new, l_new, acc_new

    zeros_bh = jnp.zeros((B, H), f32)                 # h0 = 0, as in the module
    carry0 = (zeros_bh, zeros_bh,
              jnp.full((B, 1), -jnp.inf, f32),
              jnp.zeros((B, 1), f32),
              jnp.zeros((B, H), f32))
    unroll = True if T <= 16 else 4                   # full unroll only at small T
    _, _, _, l, acc = jax.lax.fori_loop(0, T, step, carry0, unroll=unroll)

    # finalize: exact softmax normalization + final Linear (f32, one-off).
    weighted = acc / l                                               # (B, H)
    out = jnp.dot(weighted, wf_ref[...], preferred_element_type=f32) + bf_ref[...]
    out_ref[...] = out.astype(out_ref.dtype)


def _full_spec(shape):
    zeros = (0,) * len(shape)
    return pl.BlockSpec(shape, lambda: zeros)


def _round_up(n, m):
    return ((n + m - 1) // m) * m


def _pad_to(a, shape):
    return jnp.pad(a, [(0, s - d) for d, s in zip(a.shape, shape)])


# ----------------------------------------------------------------------------
# Parameter packing: PyTorch-layout params -> padded, gate-fused kernel layout.
# Each gate block is padded to Hp BEFORE concatenation so gate g starts at
# lane offset g*Hp (a vreg boundary).  Padded weight/bias entries are zero, so
# padded hidden lanes stay exactly 0 through the recurrence
# (r_pad = z_pad = 0.5, n_pad = 0  =>  h_pad stays 0).
# ----------------------------------------------------------------------------
def pack_params(params, hidden, num_outputs, lane=128):
    H = hidden
    Hp = _round_up(H, lane)
    Op = _round_up(num_outputs, lane)

    def pack_layer(layer, in_pad):
        wih, whh = layer["weight_ih"], layer["weight_hh"]     # (3H, Din), (3H, H)
        bih, bhh = layer["bias_ih"], layer["bias_hh"]         # (3H,), (3H,)
        d_in = wih.shape[1]
        in_p = d_in if in_pad is None else in_pad

        wcat = jnp.concatenate(
            [_pad_to(wih[g * H:(g + 1) * H].T, (in_p, Hp)) for g in range(3)],
            axis=1).astype(jnp.bfloat16)                      # (in_p, 3*Hp)
        ucat = jnp.concatenate(
            [_pad_to(whh[g * H:(g + 1) * H].T, (Hp, Hp)) for g in range(3)],
            axis=1).astype(jnp.bfloat16)                      # (Hp, 3*Hp)
        bicat = jnp.concatenate(
            [_pad_to(bih[0:H] + bhh[0:H], (Hp,)),             # r: b_ir + b_hr
             _pad_to(bih[H:2 * H] + bhh[H:2 * H], (Hp,)),     # z: b_iz + b_hz
             _pad_to(bih[2 * H:3 * H], (Hp,))]                # n: b_in only
        ).reshape(1, 3 * Hp).astype(jnp.float32)
        bhn = _pad_to(bhh[2 * H:3 * H], (Hp,)).reshape(1, Hp).astype(jnp.float32)
        return wcat, ucat, bicat, bhn

    w1, u1, bi1, bhn1 = pack_layer(params["gru"][0], in_pad=None)
    w2, u2, bi2, bhn2 = pack_layer(params["gru"][1], in_pad=Hp)   # layer-2 input is padded h1

    return {
        "w1": w1, "u1": u1, "bi1": bi1, "bhn1": bhn1,
        "w2": w2, "u2": u2, "bi2": bi2, "bhn2": bhn2,
        "wa": _pad_to(params["att_w"], (1, Hp)).astype(jnp.float32),
        "ba": params["att_b"].reshape(1, 1).astype(jnp.float32),
        "wf": _pad_to(params["fc_w"].T, (Hp, Op)).astype(jnp.float32),
        "bf": _pad_to(params["fc_b"].reshape(1, -1), (1, Op)).astype(jnp.float32),
    }


# ----------------------------------------------------------------------------
# Forward (eval mode: inter-layer GRU dropout inactive; exogenous_data=None).
# ----------------------------------------------------------------------------
@functools.partial(jax.jit, static_argnames=("num_outputs",))
def gru_with_attention_forward(x, packed, *, num_outputs):
    # x: (B, T, D) batch-first, as in PyTorch.
    B, T, D = x.shape
    Bp = _round_up(B, 8)
    Hp = packed["bhn1"].shape[-1]
    Op = packed["wf"].shape[-1]

    # time-major + pad batch to a sublane multiple, flatten to (T*Bp, D)
    x_tm = jnp.transpose(x, (1, 0, 2)).astype(jnp.float32)    # (T, B, D)
    x_tm = jnp.pad(x_tm, ((0, 0), (0, Bp - B), (0, 0)))
    x2d = x_tm.reshape(T * Bp, D)

    inputs = (x2d,
              packed["w1"], packed["u1"], packed["bi1"], packed["bhn1"],
              packed["w2"], packed["u2"], packed["bi2"], packed["bhn2"],
              packed["wa"], packed["ba"], packed["wf"], packed["bf"])

    out_p = pl.pallas_call(
        _fused_gru_attn_kernel,
        out_shape=jax.ShapeDtypeStruct((Bp, Op), jnp.float32),
        in_specs=[_full_spec(a.shape) for a in inputs],
        out_specs=_full_spec((Bp, Op)),
        scratch_shapes=[pltpu.VMEM((T * Bp, 3 * Hp), jnp.float32)],
    )(*inputs)

    return out_p[:B, :num_outputs]


# ----------------------------------------------------------------------------
# Deterministic init (xavier-uniform weights as in the module).  The module
# zero-fills biases; small nonzero biases are used here so the correctness
# check actually exercises the bias handling (forward semantics identical).
# ----------------------------------------------------------------------------
def _xavier(key, out_dim, in_dim):
    limit = (6.0 / (in_dim + out_dim)) ** 0.5
    return jax.random.uniform(key, (out_dim, in_dim), jnp.float32, -limit, limit)


def init_params(key, input_dim, hidden, num_layers, num_outputs, bias_scale=0.1):
    params = {"gru": []}
    for layer in range(num_layers):
        d_in = input_dim if layer == 0 else hidden
        key, k1, k2, k3, k4 = jax.random.split(key, 5)
        params["gru"].append({
            "weight_ih": _xavier(k1, 3 * hidden, d_in),
            "weight_hh": _xavier(k2, 3 * hidden, hidden),
            "bias_ih": bias_scale * jax.random.normal(k3, (3 * hidden,), jnp.float32),
            "bias_hh": bias_scale * jax.random.normal(k4, (3 * hidden,), jnp.float32),
        })
    key, ka, kab, kf, kfb = jax.random.split(key, 5)
    params["att_w"] = _xavier(ka, 1, hidden)                  # (1, H)
    params["att_b"] = bias_scale * jax.random.normal(kab, (1,), jnp.float32)
    params["fc_w"] = _xavier(kf, num_outputs, hidden)         # (O, H)
    params["fc_b"] = bias_scale * jax.random.normal(kfb, (num_outputs,), jnp.float32)
    return params


# ----------------------------------------------------------------------------
# Pure-JAX reference (unpadded, f32, PyTorch gate order r,z,n) for correctness.
# ----------------------------------------------------------------------------
def reference_forward(x, params):
    B, T, _ = x.shape
    h_seq = x.astype(jnp.float32)
    for layer in params["gru"]:
        wih, whh = layer["weight_ih"], layer["weight_hh"]
        bih, bhh = layer["bias_ih"], layer["bias_hh"]
        H = whh.shape[1]
        h = jnp.zeros((B, H), jnp.float32)
        outs = []
        for t in range(T):
            xt = h_seq[:, t, :]
            gi = xt @ wih.T + bih
            gh = h @ whh.T + bhh
            r = jax.nn.sigmoid(gi[:, :H] + gh[:, :H])
            z = jax.nn.sigmoid(gi[:, H:2 * H] + gh[:, H:2 * H])
            n = jnp.tanh(gi[:, 2 * H:] + r * gh[:, 2 * H:])
            h = (1.0 - z) * n + z * h
            outs.append(h)
        h_seq = jnp.stack(outs, axis=1)
    scores = h_seq @ params["att_w"].T + params["att_b"]      # (B, T, 1)
    p = jax.nn.softmax(scores, axis=1)
    weighted = jnp.sum(h_seq * p, axis=1)                     # (B, H)
    return weighted @ params["fc_w"].T + params["fc_b"]


if __name__ == "__main__":
    B, T, D = 2, 8, 16
    HIDDEN, LAYERS, OUT = 32, 2, 2

    key = jax.random.PRNGKey(0)
    kx, kp = jax.random.split(key)
    x = jax.random.normal(kx, (B, T, D), jnp.float32)
    params = init_params(kp, D, HIDDEN, LAYERS, OUT)
    packed = pack_params(params, HIDDEN, OUT)

    out = gru_with_attention_forward(x, packed, num_outputs=OUT)
    out = jax.block_until_ready(out)

    ref = reference_forward(x, params)
    assert out.shape == (B, OUT)
    # Tolerance covers the bf16 matmul operands on the recurrence (all
    # elementwise math and the softmax/fc stay f32); real bugs are >> this.
    err = float(jnp.max(jnp.abs(out - ref)))
    assert err < 2e-2, f"mismatch vs reference: {err}"

    print("KERNEL_OK")
</pallas_src>

<mosaic_0001>
module attributes {stable_mosaic.version = 11 : i64} {
  func.func @_fused_gru_attn_kernel(%arg0: memref<64x16xf32, #tpu.memory_space<vmem>>, %arg1: memref<16x384xbf16, #tpu.memory_space<vmem>>, %arg2: memref<128x384xbf16, #tpu.memory_space<vmem>>, %arg3: memref<1x384xf32, #tpu.memory_space<vmem>>, %arg4: memref<1x128xf32, #tpu.memory_space<vmem>>, %arg5: memref<128x384xbf16, #tpu.memory_space<vmem>>, %arg6: memref<128x384xbf16, #tpu.memory_space<vmem>>, %arg7: memref<1x384xf32, #tpu.memory_space<vmem>>, %arg8: memref<1x128xf32, #tpu.memory_space<vmem>>, %arg9: memref<1x128xf32, #tpu.memory_space<vmem>>, %arg10: memref<1x1xf32, #tpu.memory_space<vmem>>, %arg11: memref<128x128xf32, #tpu.memory_space<vmem>>, %arg12: memref<1x128xf32, #tpu.memory_space<vmem>>, %arg13: memref<8x128xf32, #tpu.memory_space<vmem>>, %arg14: memref<64x384xf32, #tpu.memory_space<vmem>>) attributes {dimension_semantics = [], scalar_prefetch = 0 : i64, scratch_operands = 1 : i64, tpu.core_type = #tpu.core_type<tc>} {
    %c0 = arith.constant 0 : index
    %c0_0 = arith.constant 0 : index
    %0 = vector.load %arg0[%c0, %c0_0] : memref<64x16xf32, #tpu.memory_space<vmem>>, vector<64x16xf32>
    %1 = arith.truncf %0 : vector<64x16xf32> to vector<64x16xbf16>
    %c0_1 = arith.constant 0 : index
    %c0_2 = arith.constant 0 : index
    %2 = vector.load %arg1[%c0_1, %c0_2] : memref<16x384xbf16, #tpu.memory_space<vmem>>, vector<16x384xbf16>
    %cst = arith.constant dense<0.000000e+00> : vector<64x384xf32>
    %3 = tpu.matmul %1, %2, %cst {dimension_numbers = #tpu.dot_dimension_numbers<[1], [0], [0], [1], [0, 0, 1, 1], [], []>} : vector<64x16xbf16>, vector<16x384xbf16>, vector<64x384xf32> -> vector<64x384xf32>
    %c0_3 = arith.constant 0 : index
    %c0_4 = arith.constant 0 : index
    %4 = vector.load %arg3[%c0_3, %c0_4] : memref<1x384xf32, #tpu.memory_space<vmem>>, vector<1x384xf32>
    %5 = vector.broadcast %4 : vector<1x384xf32> to vector<64x384xf32>
    %6 = arith.addf %3, %5 : vector<64x384xf32>
    %c0_5 = arith.constant 0 : index
    %c0_6 = arith.constant 0 : index
    %7 = vector.load %arg14[%c0_5, %c0_6] : memref<64x384xf32, #tpu.memory_space<vmem>>, vector<64x384xf32>
    tpu.vector_store %arg14[%c0_5, %c0_6], %6 {strides = array<i32>} : memref<64x384xf32, #tpu.memory_space<vmem>>, vector<64x384xf32>,
    %c0_7 = arith.constant 0 : index
    %c0_8 = arith.constant 0 : index
    %8 = vector.load %arg7[%c0_7, %c0_8] : memref<1x384xf32, #tpu.memory_space<vmem>>, vector<1x384xf32>
    %9 = vector.shape_cast %8 : vector<1x384xf32> to vector<1x384xf32>
    %10 = vector.broadcast %9 : vector<1x384xf32> to vector<8x384xf32>
    %c0_9 = arith.constant 0 : index
    %c0_10 = arith.constant 0 : index
    %11 = vector.load %arg4[%c0_9, %c0_10] : memref<1x128xf32, #tpu.memory_space<vmem>>, vector<1x128xf32>
    %12 = vector.shape_cast %11 : vector<1x128xf32> to vector<1x128xf32>
    %13 = vector.broadcast %12 : vector<1x128xf32> to vector<8x128xf32>
    %c0_11 = arith.constant 0 : index
    %c0_12 = arith.constant 0 : index
    %14 = vector.load %arg8[%c0_11, %c0_12] : memref<1x128xf32, #tpu.memory_space<vmem>>, vector<1x128xf32>
    %15 = vector.shape_cast %14 : vector<1x128xf32> to vector<1x128xf32>
    %16 = vector.broadcast %15 : vector<1x128xf32> to vector<8x128xf32>
    %c0_13 = arith.constant 0 : index
    %c0_14 = arith.constant 0 : index
    %17 = vector.load %arg9[%c0_13, %c0_14] : memref<1x128xf32, #tpu.memory_space<vmem>>, vector<1x128xf32>
    %c0_15 = arith.constant 0 : index
    %c0_16 = arith.constant 0 : index
    %18 = vector.load %arg10[%c0_15, %c0_16] : memref<1x1xf32, #tpu.memory_space<vmem>>, vector<1x1xf32>
    %cst_17 = arith.constant 0.000000e+00 : f32
    %19 = vector.broadcast %cst_17 : f32 to vector<8x128xf32>
    %cst_18 = arith.constant 0xFF800000 : f32
    %20 = vector.broadcast %cst_18 : f32 to vector<8x1xf32>
    %cst_19 = arith.constant 0.000000e+00 : f32
    %21 = vector.broadcast %cst_19 : f32 to vector<8x1xf32>
    %cst_20 = arith.constant 0.000000e+00 : f32
    %22 = vector.broadcast %cst_20 : f32 to vector<8x128xf32>
    %c0_i32 = arith.constant 0 : i32
    %c8_i32 = arith.constant 8 : i32
    %23 = arith.muli %c0_i32, %c8_i32 : i32
    %24 = tpu.assume_multiple %23, 8 : i32
    %25 = arith.index_cast %24 : i32 to index
    %c0_21 = arith.constant 0 : index
    %26 = vector.load %arg14[%25, %c0_21] : memref<64x384xf32, #tpu.memory_space<vmem>>, vector<8x384xf32>
    %27 = arith.truncf %19 : vector<8x128xf32> to vector<8x128xbf16>
    %c0_22 = arith.constant 0 : index
    %c0_23 = arith.constant 0 : index
    %28 = vector.load %arg2[%c0_22, %c0_23] : memref<128x384xbf16, #tpu.memory_space<vmem>>, vector<128x384xbf16>
    %cst_24 = arith.constant dense<0.000000e+00> : vector<8x384xf32>
    %29 = tpu.matmul %27, %28, %cst_24 {dimension_numbers = #tpu.dot_dimension_numbers<[1], [0], [0], [1], [0, 0, 1, 1], [], []>} : vector<8x128xbf16>, vector<128x384xbf16>, vector<8x384xf32> -> vector<8x384xf32>
    %30 = vector.extract_strided_slice %26 {offsets = [0, 0], sizes = [8, 128], strides = [1, 1]} : vector<8x384xf32> to vector<8x128xf32>
    %31 = vector.extract_strided_slice %29 {offsets = [0, 0], sizes = [8, 128], strides = [1, 1]} : vector<8x384xf32> to vector<8x128xf32>
    %32 = arith.addf %30, %31 : vector<8x128xf32>
    %33 = arith.negf %32 : vector<8x128xf32>
    %34 = math.exp %33 : vector<8x128xf32>
    %cst_25 = arith.constant 1.000000e+00 : f32
    %35 = vector.broadcast %cst_25 : f32 to vector<8x128xf32>
    %36 = arith.addf %35, %34 : vector<8x128xf32>
    %37 = arith.divf %35, %36 : vector<8x128xf32>
    %38 = vector.extract_strided_slice %26 {offsets = [0, 128], sizes = [8, 128], strides = [1, 1]} : vector<8x384xf32> to vector<8x128xf32>
    %39 = vector.extract_strided_slice %29 {offsets = [0, 128], sizes = [8, 128], strides = [1, 1]} : vector<8x384xf32> to vector<8x128xf32>
    %40 = arith.addf %38, %39 : vector<8x128xf32>
    %41 = arith.negf %40 : vector<8x128xf32>
    %42 = math.exp %41 : vector<8x128xf32>
    %cst_26 = arith.constant 1.000000e+00 : f32
    %43 = vector.broadcast %cst_26 : f32 to vector<8x128xf32>
    %44 = arith.addf %43, %42 : vector<8x128xf32>
    %45 = arith.divf %43, %44 : vector<8x128xf32>
    %46 = vector.extract_strided_slice %26 {offsets = [0, 256], sizes = [8, 128], strides = [1, 1]} : vector<8x384xf32> to vector<8x128xf32>
    %47 = vector.extract_strided_slice %29 {offsets = [0, 256], sizes = [8, 128], strides = [1, 1]} : vector<8x384xf32> to vector<8x128xf32>
    %48 = arith.addf %47, %13 : vector<8x128xf32>
    %49 = arith.mulf %37, %48 : vector<8x128xf32>
    %50 = arith.addf %46, %49 : vector<8x128xf32>
    %51 = math.tanh %50 : vector<8x128xf32>
    %cst_27 = arith.constant 1.000000e+00 : f32
    %52 = vector.broadcast %cst_27 : f32 to vector<8x128xf32>
    %53 = arith.subf %52, %45 : vector<8x128xf32>
    %54 = arith.mulf %53, %51 : vector<8x128xf32>
    %55 = arith.mulf %45, %19 : vector<8x128xf32>
    %56 = arith.addf %54, %55 : vector<8x128xf32>
    %57 = arith.truncf %56 : vector<8x128xf32> to vector<8x128xbf16>
    %c0_28 = arith.constant 0 : index
    %c0_29 = arith.constant 0 : index
    %58 = vector.load %arg5[%c0_28, %c0_29] : memref<128x384xbf16, #tpu.memory_space<vmem>>, vector<128x384xbf16>
    %cst_30 = arith.constant dense<0.000000e+00> : vector<8x384xf32>
    %59 = tpu.matmul %57, %58, %cst_30 {dimension_numbers = #tpu.dot_dimension_numbers<[1], [0], [0], [1], [0, 0, 1, 1], [], []>} : vector<8x128xbf16>, vector<128x384xbf16>, vector<8x384xf32> -> vector<8x384xf32>
    %60 = arith.addf %59, %10 : vector<8x384xf32>
    %61 = arith.truncf %19 : vector<8x128xf32> to vector<8x128xbf16>
    %c0_31 = arith.constant 0 : index
    %c0_32 = arith.constant 0 : index
    %62 = vector.load %arg6[%c0_31, %c0_32] : memref<128x384xbf16, #tpu.memory_space<vmem>>, vector<128x384xbf16>
    %cst_33 = arith.constant dense<0.000000e+00> : vector<8x384xf32>
    %63 = tpu.matmul %61, %62, %cst_33 {dimension_numbers = #tpu.dot_dimension_numbers<[1], [0], [0], [1], [0, 0, 1, 1], [], []>} : vector<8x128xbf16>, vector<128x384xbf16>, vector<8x384xf32> -> vector<8x384xf32>
    %64 = vector.extract_strided_slice %60 {offsets = [0, 0], sizes = [8, 128], strides = [1, 1]} : vector<8x384xf32> to vector<8x128xf32>
    %65 = vector.extract_strided_slice %63 {offsets = [0, 0], sizes = [8, 128], strides = [1, 1]} : vector<8x384xf32> to vector<8x128xf32>
    %66 = arith.addf %64, %65 : vector<8x128xf32>
    %67 = arith.negf %66 : vector<8x128xf32>
    %68 = math.exp %67 : vector<8x128xf32>
    %cst_34 = arith.constant 1.000000e+00 : f32
    %69 = vector.broadcast %cst_34 : f32 to vector<8x128xf32>
    %70 = arith.addf %69, %68 : vector<8x128xf32>
    %71 = arith.divf %69, %70 : vector<8x128xf32>
    %72 = vector.extract_strided_slice %60 {offsets = [0, 128], sizes = [8, 128], strides = [1, 1]} : vector<8x384xf32> to vector<8x128xf32>
    %73 = vector.extract_strided_slice %63 {offsets = [0, 128], sizes = [8, 128], strides = [1, 1]} : vector<8x384xf32> to vector<8x128xf32>
    %74 = arith.addf %72, %73 : vector<8x128xf32>
    %75 = arith.negf %74 : vector<8x128xf32>
    %76 = math.exp %75 : vector<8x128xf32>
    %cst_35 = arith.constant 1.000000e+00 : f32
    %77 = vector.broadcast %cst_35 : f32 to vector<8x128xf32>
    %78 = arith.addf %77, %76 : vector<8x128xf32>
    %79 = arith.divf %77, %78 : vector<8x128xf32>
    %80 = vector.extract_strided_slice %60 {offsets = [0, 256], sizes = [8, 128], strides = [1, 1]} : vector<8x384xf32> to vector<8x128xf32>
    %81 = vector.extract_strided_slice %63 {offsets = [0, 256], sizes = [8, 128], strides = [1, 1]} : vector<8x384xf32> to vector<8x128xf32>
    %82 = arith.addf %81, %16 : vector<8x128xf32>
    %83 = arith.mulf %71, %82 : vector<8x128xf32>
    %84 = arith.addf %80, %83 : vector<8x128xf32>
    %85 = math.tanh %84 : vector<8x128xf32>
    %cst_36 = arith.constant 1.000000e+00 : f32
    %86 = vector.broadcast %cst_36 : f32 to vector<8x128xf32>
    %87 = arith.subf %86, %79 : vector<8x128xf32>
    %88 = arith.mulf %87, %85 : vector<8x128xf32>
    %89 = arith.mulf %79, %19 : vector<8x128xf32>
    %90 = arith.addf %88, %89 : vector<8x128xf32>
    %91 = vector.broadcast %17 : vector<1x128xf32> to vector<8x128xf32>
    %92 = arith.mulf %90, %91 : vector<8x128xf32>
    %cst_37 = arith.constant dense<0.000000e+00> : vector<8xf32>
    %93 = vector.multi_reduction <add>, %92, %cst_37 [1] : vector<8x128xf32> to vector<8xf32>
    %94 = vector.shape_cast %93 : vector<8xf32> to vector<8x1xf32>
    %95 = vector.broadcast %18 : vector<1x1xf32> to vector<8x1xf32>
    %96 = arith.addf %94, %95 : vector<8x1xf32>
    %97 = arith.maximumf %20, %96 : vector<8x1xf32>
    %98 = arith.subf %20, %97 : vector<8x1xf32>
    %99 = math.exp %98 : vector<8x1xf32>
    %100 = arith.subf %96, %97 : vector<8x1xf32>
    %101 = math.exp %100 : vector<8x1xf32>
    %102 = arith.mulf %99, %21 : vector<8x1xf32>
    %103 = arith.addf %102, %101 : vector<8x1xf32>
    %104 = vector.broadcast %99 : vector<8x1xf32> to vector<8x128xf32>
    %105 = arith.mulf %104, %22 : vector<8x128xf32>
    %106 = vector.broadcast %101 : vector<8x1xf32> to vector<8x128xf32>
    %107 = arith.mulf %106, %90 : vector<8x128xf32>
    %108 = arith.addf %105, %107 : vector<8x128xf32>
    %c1_i32 = arith.constant 1 : i32
    %c8_i32_38 = arith.constant 8 : i32
    %109 = arith.muli %c1_i32, %c8_i32_38 : i32
    %110 = tpu.assume_multiple %109, 8 : i32
    %111 = arith.index_cast %110 : i32 to index
    %c0_39 = arith.constant 0 : index
    %112 = vector.load %arg14[%111, %c0_39] : memref<64x384xf32, #tpu.memory_space<vmem>>, vector<8x384xf32>
    %113 = arith.truncf %56 : vector<8x128xf32> to vector<8x128xbf16>
    %c0_40 = arith.constant 0 : index
    %c0_41 = arith.constant 0 : index
    %114 = vector.load %arg2[%c0_40, %c0_41] : memref<128x384xbf16, #tpu.memory_space<vmem>>, vector<128x384xbf16>
    %cst_42 = arith.constant dense<0.000000e+00> : vector<8x384xf32>
    %115 = tpu.matmul %113, %114, %cst_42 {dimension_numbers = #tpu.dot_dimension_numbers<[1], [0], [0], [1], [0, 0, 1, 1], [], []>} : vector<8x128xbf16>, vector<128x384xbf16>, vector<8x384xf32> -> vector<8x384xf32>
    %116 = vector.extract_strided_slice %112 {offsets = [0, 0], sizes = [8, 128], strides = [1, 1]} : vector<8x384xf32> to vector<8x128xf32>
    %117 = vector.extract_strided_slice %115 {offsets = [0, 0], sizes = [8, 128], strides = [1, 1]} : vector<8x384xf32> to vector<8x128xf32>
    %118 = arith.addf %116, %117 : vector<8x128xf32>
    %119 = arith.negf %118 : vector<8x128xf32>
    %120 = math.exp %119 : vector<8x128xf32>
    %cst_43 = arith.constant 1.000000e+00 : f32
    %121 = vector.broadcast %cst_43 : f32 to vector<8x128xf32>
    %122 = arith.addf %121, %120 : vector<8x128xf32>
    %123 = arith.divf %121, %122 : vector<8x128xf32>
    %124 = vector.extract_strided_slice %112 {offsets = [0, 128], sizes = [8, 128], strides = [1, 1]} : vector<8x384xf32> to vector<8x128xf32>
    %125 = vector.extract_strided_slice %115 {offsets = [0, 128], sizes = [8, 128], strides = [1, 1]} : vector<8x384xf32> to vector<8x128xf32>
    %126 = arith.addf %124, %125 : vector<8x128xf32>
    %127 = arith.negf %126 : vector<8x128xf32>
    %128 = math.exp %127 : vector<8x128xf32>
    %cst_44 = arith.constant 1.000000e+00 : f32
    %129 = vector.broadcast %cst_44 : f32 to vector<8x128xf32>
    %130 = arith.addf %129, %128 : vector<8x128xf32>
    %131 = arith.divf %129, %130 : vector<8x128xf32>
    %132 = vector.extract_strided_slice %112 {offsets = [0, 256], sizes = [8, 128], strides = [1, 1]} : vector<8x384xf32> to vector<8x128xf32>
    %133 = vector.extract_strided_slice %115 {offsets = [0, 256], sizes = [8, 128], strides = [1, 1]} : vector<8x384xf32> to vector<8x128xf32>
    %134 = arith.addf %133, %13 : vector<8x128xf32>
    %135 = arith.mulf %123, %134 : vector<8x128xf32>
    %136 = arith.addf %132, %135 : vector<8x128xf32>
    %137 = math.tanh %136 : vector<8x128xf32>
    %cst_45 = arith.constant 1.000000e+00 : f32
    %138 = vector.broadcast %cst_45 : f32 to vector<8x128xf32>
    %139 = arith.subf %138, %131 : vector<8x128xf32>
    %140 = arith.mulf %139, %137 : vector<8x128xf32>
    %141 = arith.mulf %131, %56 : vector<8x128xf32>
    %142 = arith.addf %140, %141 : vector<8x128xf32>
    %143 = arith.truncf %142 : vector<8x128xf32> to vector<8x128xbf16>
    %c0_46 = arith.constant 0 : index
    %c0_47 = arith.constant 0 : index
    %144 = vector.load %arg5[%c0_46, %c0_47] : memref<128x384xbf16, #tpu.memory_space<vmem>>, vector<128x384xbf16>
    %cst_48 = arith.constant dense<0.000000e+00> : vector<8x384xf32>
    %145 = tpu.matmul %143, %144, %cst_48 {dimension_numbers = #tpu.dot_dimension_numbers<[1], [0], [0], [1], [0, 0, 1, 1], [], []>} : vector<8x128xbf16>, vector<128x384xbf16>, vector<8x384xf32> -> vector<8x384xf32>
    %146 = arith.addf %145, %10 : vector<8x384xf32>
    %147 = arith.truncf %90 : vector<8x128xf32> to vector<8x128xbf16>
    %c0_49 = arith.constant 0 : index
    %c0_50 = arith.constant 0 : index
    %148 = vector.load %arg6[%c0_49, %c0_50] : memref<128x384xbf16, #tpu.memory_space<vmem>>, vector<128x384xbf16>
    %cst_51 = arith.constant dense<0.000000e+00> : vector<8x384xf32>
    %149 = tpu.matmul %147, %148, %cst_51 {dimension_numbers = #tpu.dot_dimension_numbers<[1], [0], [0], [1], [0, 0, 1, 1], [], []>} : vector<8x128xbf16>, vector<128x384xbf16>, vector<8x384xf32> -> vector<8x384xf32>
    %150 = vector.extract_strided_slice %146 {offsets = [0, 0], sizes = [8, 128], strides = [1, 1]} : vector<8x384xf32> to vector<8x128xf32>
    %151 = vector.extract_strided_slice %149 {offsets = [0, 0], sizes = [8, 128], strides = [1, 1]} : vector<8x384xf32> to vector<8x128xf32>
    %152 = arith.addf %150, %151 : vector<8x128xf32>
    %153 = arith.negf %152 : vector<8x128xf32>
    %154 = math.exp %153 : vector<8x128xf32>
    %cst_52 = arith.constant 1.000000e+00 : f32
    %155 = vector.broadcast %cst_52 : f32 to vector<8x128xf32>
    %156 = arith.addf %155, %154 : vector<8x128xf32>
    %157 = arith.divf %155, %156 : vector<8x128xf32>
    %158 = vector.extract_strided_slice %146 {offsets = [0, 128], sizes = [8, 128], strides = [1, 1]} : vector<8x384xf32> to vector<8x128xf32>
    %159 = vector.extract_strided_slice %149 {offsets = [0, 128], sizes = [8, 128], strides = [1, 1]} : vector<8x384xf32> to vector<8x128xf32>
    %160 = arith.addf %158, %159 : vector<8x128xf32>
    %161 = arith.negf %160 : vector<8x128xf32>
    %162 = math.exp %161 : vector<8x128xf32>
    %cst_53 = arith.constant 1.000000e+00 : f32
    %163 = vector.broadcast %cst_53 : f32 to vector<8x128xf32>
    %164 = arith.addf %163, %162 : vector<8x128xf32>
    %165 = arith.divf %163, %164 : vector<8x128xf32>
    %166 = vector.extract_strided_slice %146 {offsets = [0, 256], sizes = [8, 128], strides = [1, 1]} : vector<8x384xf32> to vector<8x128xf32>
    %167 = vector.extract_strided_slice %149 {offsets = [0, 256], sizes = [8, 128], strides = [1, 1]} : vector<8x384xf32> to vector<8x128xf32>
    %168 = arith.addf %167, %16 : vector<8x128xf32>
    %169 = arith.mulf %157, %168 : vector<8x128xf32>
    %170 = arith.addf %166, %169 : vector<8x128xf32>
    %171 = math.tanh %170 : vector<8x128xf32>
    %cst_54 = arith.constant 1.000000e+00 : f32
    %172 = vector.broadcast %cst_54 : f32 to vector<8x128xf32>
    %173 = arith.subf %172, %165 : vector<8x128xf32>
    %174 = arith.mulf %173, %171 : vector<8x128xf32>
    %175 = arith.mulf %165, %90 : vector<8x128xf32>
    %176 = arith.addf %174, %175 : vector<8x128xf32>
    %177 = vector.broadcast %17 : vector<1x128xf32> to vector<8x128xf32>
    %178 = arith.mulf %176, %177 : vector<8x128xf32>
    %cst_55 = arith.constant dense<0.000000e+00> : vector<8xf32>
    %179 = vector.multi_reduction <add>, %178, %cst_55 [1] : vector<8x128xf32> to vector<8xf32>
    %180 = vector.shape_cast %179 : vector<8xf32> to vector<8x1xf32>
    %181 = vector.broadcast %18 : vector<1x1xf32> to vector<8x1xf32>
    %182 = arith.addf %180, %181 : vector<8x1xf32>
    %183 = arith.maximumf %97, %182 : vector<8x1xf32>
    %184 = arith.subf %97, %183 : vector<8x1xf32>
    %185 = math.exp %184 : vector<8x1xf32>
    %186 = arith.subf %182, %183 : vector<8x1xf32>
    %187 = math.exp %186 : vector<8x1xf32>
    %188 = arith.mulf %185, %103 : vector<8x1xf32>
    %189 = arith.addf %188, %187 : vector<8x1xf32>
    %190 = vector.broadcast %185 : vector<8x1xf32> to vector<8x128xf32>
    %191 = arith.mulf %190, %108 : vector<8x128xf32>
    %192 = vector.broadcast %187 : vector<8x1xf32> to vector<8x128xf32>
    %193 = arith.mulf %192, %176 : vector<8x128xf32>
    %194 = arith.addf %191, %193 : vector<8x128xf32>
    %c2_i32 = arith.constant 2 : i32
    %c8_i32_56 = arith.constant 8 : i32
    %195 = arith.muli %c2_i32, %c8_i32_56 : i32
    %196 = tpu.assume_multiple %195, 8 : i32
    %197 = arith.index_cast %196 : i32 to index
    %c0_57 = arith.constant 0 : index
    %198 = vector.load %arg14[%197, %c0_57] : memref<64x384xf32, #tpu.memory_space<vmem>>, vector<8x384xf32>
    %199 = arith.truncf %142 : vector<8x128xf32> to vector<8x128xbf16>
    %c0_58 = arith.constant 0 : index
    %c0_59 = arith.constant 0 : index
    %200 = vector.load %arg2[%c0_58, %c0_59] : memref<128x384xbf16, #tpu.memory_space<vmem>>, vector<128x384xbf16>
    %cst_60 = arith.constant dense<0.000000e+00> : vector<8x384xf32>
    %201 = tpu.matmul %199, %200, %cst_60 {dimension_numbers = #tpu.dot_dimension_numbers<[1], [0], [0], [1], [0, 0, 1, 1], [], []>} : vector<8x128xbf16>, vector<128x384xbf16>, vector<8x384xf32> -> vector<8x384xf32>
    %202 = vector.extract_strided_slice %198 {offsets = [0, 0], sizes = [8, 128], strides = [1, 1]} : vector<8x384xf32> to vector<8x128xf32>
    %203 = vector.extract_strided_slice %201 {offsets = [0, 0], sizes = [8, 128], strides = [1, 1]} : vector<8x384xf32> to vector<8x128xf32>
    %204 = arith.addf %202, %203 : vector<8x128xf32>
    %205 = arith.negf %204 : vector<8x128xf32>
    %206 = math.exp %205 : vector<8x128xf32>
    %cst_61 = arith.constant 1.000000e+00 : f32
    %207 = vector.broadcast %cst_61 : f32 to vector<8x128xf32>
    %208 = arith.addf %207, %206 : vector<8x128xf32>
    %209 = arith.divf %207, %208 : vector<8x128xf32>
    %210 = vector.extract_strided_slice %198 {offsets = [0, 128], sizes = [8, 128], strides = [1, 1]} : vector<8x384xf32> to vector<8x128xf32>
    %211 = vector.extract_strided_slice %201 {offsets = [0, 128], sizes = [8, 128], strides = [1, 1]} : vector<8x384xf32> to vector<8x128xf32>
    %212 = arith.addf %210, %211 : vector<8x128xf32>
    %213 = arith.negf %212 : vector<8x128xf32>
    %214 = math.exp %213 : vector<8x128xf32>
    %cst_62 = arith.constant 1.000000e+00 : f32
    %215 = vector.broadcast %cst_62 : f32 to vector<8x128xf32>
    %216 = arith.addf %215, %214 : vector<8x128xf32>
    %217 = arith.divf %215, %216 : vector<8x128xf32>
    %218 = vector.extract_strided_slice %198 {offsets = [0, 256], sizes = [8, 128], strides = [1, 1]} : vector<8x384xf32> to vector<8x128xf32>
    %219 = vector.extract_strided_slice %201 {offsets = [0, 256], sizes = [8, 128], strides = [1, 1]} : vector<8x384xf32> to vector<8x128xf32>
    %220 = arith.addf %219, %13 : vector<8x128xf32>
    %221 = arith.mulf %209, %220 : vector<8x128xf32>
    %222 = arith.addf %218, %221 : vector<8x128xf32>
    %223 = math.tanh %222 : vector<8x128xf32>
    %cst_63 = arith.constant 1.000000e+00 : f32
    %224 = vector.broadcast %cst_63 : f32 to vector<8x128xf32>
    %225 = arith.subf %224, %217 : vector<8x128xf32>
    %226 = arith.mulf %225, %223 : vector<8x128xf32>
    %227 = arith.mulf %217, %142 : vector<8x128xf32>
    %228 = arith.addf %226, %227 : vector<8x128xf32>
    %229 = arith.truncf %228 : vector<8x128xf32> to vector<8x128xbf16>
    %c0_64 = arith.constant 0 : index
    %c0_65 = arith.constant 0 : index
    %230 = vector.load %arg5[%c0_64, %c0_65] : memref<128x384xbf16, #tpu.memory_space<vmem>>, vector<128x384xbf16>
    %cst_66 = arith.constant dense<0.000000e+00> : vector<8x384xf32>
    %231 = tpu.matmul %229, %230, %cst_66 {dimension_numbers = #tpu.dot_dimension_numbers<[1], [0], [0], [1], [0, 0, 1, 1], [], []>} : vector<8x128xbf16>, vector<128x384xbf16>, vector<8x384xf32> -> vector<8x384xf32>
    %232 = arith.addf %231, %10 : vector<8x384xf32>
    %233 = arith.truncf %176 : vector<8x128xf32> to vector<8x128xbf16>
    %c0_67 = arith.constant 0 : index
    %c0_68 = arith.constant 0 : index
    %234 = vector.load %arg6[%c0_67, %c0_68] : memref<128x384xbf16, #tpu.memory_space<vmem>>, vector<128x384xbf16>
    %cst_69 = arith.constant dense<0.000000e+00> : vector<8x384xf32>
    %235 = tpu.matmul %233, %234, %cst_69 {dimension_numbers = #tpu.dot_dimension_numbers<[1], [0], [0], [1], [0, 0, 1, 1], [], []>} : vector<8x128xbf16>, vector<128x384xbf16>, vector<8x384xf32> -> vector<8x384xf32>
    %236 = vector.extract_strided_slice %232 {offsets = [0, 0], sizes = [8, 128], strides = [1, 1]} : vector<8x384xf32> to vector<8x128xf32>
    %237 = vector.extract_strided_slice %235 {offsets = [0, 0], sizes = [8, 128], strides = [1, 1]} : vector<8x384xf32> to vector<8x128xf32>
    %238 = arith.addf %236, %237 : vector<8x128xf32>
    %239 = arith.negf %238 : vector<8x128xf32>
    %240 = math.exp %239 : vector<8x128xf32>
    %cst_70 = arith.constant 1.000000e+00 : f32
    %241 = vector.broadcast %cst_70 : f32 to vector<8x128xf32>
    %242 = arith.addf %241, %240 : vector<8x128xf32>
    %243 = arith.divf %241, %242 : vector<8x128xf32>
    %244 = vector.extract_strided_slice %232 {offsets = [0, 128], sizes = [8, 128], strides = [1, 1]} : vector<8x384xf32> to vector<8x128xf32>
    %245 = vector.extract_strided_slice %235 {offsets = [0, 128], sizes = [8, 128], strides = [1, 1]} : vector<8x384xf32> to vector<8x128xf32>
    %246 = arith.addf %244, %245 : vector<8x128xf32>
    %247 = arith.negf %246 : vector<8x128xf32>
    %248 = math.exp %247 : vector<8x128xf32>
    %cst_71 = arith.constant 1.000000e+00 : f32
    %249 = vector.broadcast %cst_71 : f32 to vector<8x128xf32>
    %250 = arith.addf %249, %248 : vector<8x128xf32>
    %251 = arith.divf %249, %250 : vector<8x128xf32>
    %252 = vector.extract_strided_slice %232 {offsets = [0, 256], sizes = [8, 128], strides = [1, 1]} : vector<8x384xf32> to vector<8x128xf32>
    %253 = vector.extract_strided_slice %235 {offsets = [0, 256], sizes = [8, 128], strides = [1, 1]} : vector<8x384xf32> to vector<8x128xf32>
    %254 = arith.addf %253, %16 : vector<8x128xf32>
    %255 = arith.mulf %243, %254 : vector<8x128xf32>
    %256 = arith.addf %252, %255 : vector<8x128xf32>
    %257 = math.tanh %256 : vector<8x128xf32>
    %cst_72 = arith.constant 1.000000e+00 : f32
    %258 = vector.broadcast %cst_72 : f32 to vector<8x128xf32>
    %259 = arith.subf %258, %251 : vector<8x128xf32>
    %260 = arith.mulf %259, %257 : vector<8x128xf32>
    %261 = arith.mulf %251, %176 : vector<8x128xf32>
    %262 = arith.addf %260, %261 : vector<8x128xf32>
    %263 = vector.broadcast %17 : vector<1x128xf32> to vector<8x128xf32>
    %264 = arith.mulf %262, %263 : vector<8x128xf32>
    %cst_73 = arith.constant dense<0.000000e+00> : vector<8xf32>
    %265 = vector.multi_reduction <add>, %264, %cst_73 [1] : vector<8x128xf32> to vector<8xf32>
    %266 = vector.shape_cast %265 : vector<8xf32> to vector<8x1xf32>
    %267 = vector.broadcast %18 : vector<1x1xf32> to vector<8x1xf32>
    %268 = arith.addf %266, %267 : vector<8x1xf32>
    %269 = arith.maximumf %183, %268 : vector<8x1xf32>
    %270 = arith.subf %183, %269 : vector<8x1xf32>
    %271 = math.exp %270 : vector<8x1xf32>
    %272 = arith.subf %268, %269 : vector<8x1xf32>
    %273 = math.exp %272 : vector<8x1xf32>
    %274 = arith.mulf %271, %189 : vector<8x1xf32>
    %275 = arith.addf %274, %273 : vector<8x1xf32>
    %276 = vector.broadcast %271 : vector<8x1xf32> to vector<8x128xf32>
    %277 = arith.mulf %276, %194 : vector<8x128xf32>
    %278 = vector.broadcast %273 : vector<8x1xf32> to vector<8x128xf32>
    %279 = arith.mulf %278, %262 : vector<8x128xf32>
    %280 = arith.addf %277, %279 : vector<8x128xf32>
    %c3_i32 = arith.constant 3 : i32
    %c8_i32_74 = arith.constant 8 : i32
    %281 = arith.muli %c3_i32, %c8_i32_74 : i32
    %282 = tpu.assume_multiple %281, 8 : i32
    %283 = arith.index_cast %282 : i32 to index
    %c0_75 = arith.constant 0 : index
    %284 = vector.load %arg14[%283, %c0_75] : memref<64x384xf32, #tpu.memory_space<vmem>>, vector<8x384xf32>
    %285 = arith.truncf %228 : vector<8x128xf32> to vector<8x128xbf16>
    %c0_76 = arith.constant 0 : index
    %c0_77 = arith.constant 0 : index
    %286 = vector.load %arg2[%c0_76, %c0_77] : memref<128x384xbf16, #tpu.memory_space<vmem>>, vector<128x384xbf16>
    %cst_78 = arith.constant dense<0.000000e+00> : vector<8x384xf32>
    %287 = tpu.matmul %285, %286, %cst_78 {dimension_numbers = #tpu.dot_dimension_numbers<[1], [0], [0], [1], [0, 0, 1, 1], [], []>} : vector<8x128xbf16>, vector<128x384xbf16>, vector<8x384xf32> -> vector<8x384xf32>
    %288 = vector.extract_strided_slice %284 {offsets = [0, 0], sizes = [8, 128], strides = [1, 1]} : vector<8x384xf32> to vector<8x128xf32>
    %289 = vector.extract_strided_slice %287 {offsets = [0, 0], sizes = [8, 128], strides = [1, 1]} : vector<8x384xf32> to vector<8x128xf32>
    %290 = arith.addf %288, %289 : vector<8x128xf32>
    %291 = arith.negf %290 : vector<8x128xf32>
    %292 = math.exp %291 : vector<8x128xf32>
    %cst_79 = arith.constant 1.000000e+00 : f32
    %293 = vector.broadcast %cst_79 : f32 to vector<8x128xf32>
    %294 = arith.addf %293, %292 : vector<8x128xf32>
    %295 = arith.divf %293, %294 : vector<8x128xf32>
    %296 = vector.extract_strided_slice %284 {offsets = [0, 128], sizes = [8, 128], strides = [1, 1]} : vector<8x384xf32> to vector<8x128xf32>
    %297 = vector.extract_strided_slice %287 {offsets = [0, 128], sizes = [8, 128], strides = [1, 1]} : vector<8x384xf32> to vector<8x128xf32>
    %298 = arith.addf %296, %297 : vector<8x128xf32>
    %299 = arith.negf %298 : vector<8x128xf32>
    %300 = math.exp %299 : vector<8x128xf32>
    %cst_80 = arith.constant 1.000000e+00 : f32
    %301 = vector.broadcast %cst_80 : f32 to vector<8x128xf32>
    %302 = arith.addf %301, %300 : vector<8x128xf32>
    %303 = arith.divf %301, %302 : vector<8x128xf32>
    %304 = vector.extract_strided_slice %284 {offsets = [0, 256], sizes = [8, 128], strides = [1, 1]} : vector<8x384xf32> to vector<8x128xf32>
    %305 = vector.extract_strided_slice %287 {offsets = [0, 256], sizes = [8, 128], strides = [1, 1]} : vector<8x384xf32> to vector<8x128xf32>
    %306 = arith.addf %305, %13 : vector<8x128xf32>
    %307 = arith.mulf %295, %306 : vector<8x128xf32>
    %308 = arith.addf %304, %307 : vector<8x128xf32>
    %309 = math.tanh %308 : vector<8x128xf32>
    %cst_81 = arith.constant 1.000000e+00 : f32
    %310 = vector.broadcast %cst_81 : f32 to vector<8x128xf32>
    %311 = arith.subf %310, %303 : vector<8x128xf32>
    %312 = arith.mulf %311, %309 : vector<8x128xf32>
    %313 = arith.mulf %303, %228 : vector<8x128xf32>
    %314 = arith.addf %312, %313 : vector<8x128xf32>
    %315 = arith.truncf %314 : vector<8x128xf32> to vector<8x128xbf16>
    %c0_82 = arith.constant 0 : index
    %c0_83 = arith.constant 0 : index
    %316 = vector.load %arg5[%c0_82, %c0_83] : memref<128x384xbf16, #tpu.memory_space<vmem>>, vector<128x384xbf16>
    %cst_84 = arith.constant dense<0.000000e+00> : vector<8x384xf32>
    %317 = tpu.matmul %315, %316, %cst_84 {dimension_numbers = #tpu.dot_dimension_numbers<[1], [0], [0], [1], [0, 0, 1, 1], [], []>} : vector<8x128xbf16>, vector<128x384xbf16>, vector<8x384xf32> -> vector<8x384xf32>
    %318 = arith.addf %317, %10 : vector<8x384xf32>
    %319 = arith.truncf %262 : vector<8x128xf32> to vector<8x128xbf16>
    %c0_85 = arith.constant 0 : index
    %c0_86 = arith.constant 0 : index
    %320 = vector.load %arg6[%c0_85, %c0_86] : memref<128x384xbf16, #tpu.memory_space<vmem>>, vector<128x384xbf16>
    %cst_87 = arith.constant dense<0.000000e+00> : vector<8x384xf32>
    %321 = tpu.matmul %319, %320, %cst_87 {dimension_numbers = #tpu.dot_dimension_numbers<[1], [0], [0], [1], [0, 0, 1, 1], [], []>} : vector<8x128xbf16>, vector<128x384xbf16>, vector<8x384xf32> -> vector<8x384xf32>
    %322 = vector.extract_strided_slice %318 {offsets = [0, 0], sizes = [8, 128], strides = [1, 1]} : vector<8x384xf32> to vector<8x128xf32>
    %323 = vector.extract_strided_slice %321 {offsets = [0, 0], sizes = [8, 128], strides = [1, 1]} : vector<8x384xf32> to vector<8x128xf32>
    %324 = arith.addf %322, %323 : vector<8x128xf32>
    %325 = arith.negf %324 : vector<8x128xf32>
    %326 = math.exp %325 : vector<8x128xf32>
    %cst_88 = arith.constant 1.000000e+00 : f32
    %327 = vector.broadcast %cst_88 : f32 to vector<8x128xf32>
    %328 = arith.addf %327, %326 : vector<8x128xf32>
    %329 = arith.divf %327, %328 : vector<8x128xf32>
    %330 = vector.extract_strided_slice %318 {offsets = [0, 128], sizes = [8, 128], strides = [1, 1]} : vector<8x384xf32> to vector<8x128xf32>
    %331 = vector.extract_strided_slice %321 {offsets = [0, 128], sizes = [8, 128], strides = [1, 1]} : vector<8x384xf32> to vector<8x128xf32>
    %332 = arith.addf %330, %331 : vector<8x128xf32>
    %333 = arith.negf %332 : vector<8x128xf32>
    %334 = math.exp %333 : vector<8x128xf32>
    %cst_89 = arith.constant 1.000000e+00 : f32
    %335 = vector.broadcast %cst_89 : f32 to vector<8x128xf32>
    %336 = arith.addf %335, %334 : vector<8x128xf32>
    %337 = arith.divf %335, %336 : vector<8x128xf32>
    %338 = vector.extract_strided_slice %318 {offsets = [0, 256], sizes = [8, 128], strides = [1, 1]} : vector<8x384xf32> to vector<8x128xf32>
    %339 = vector.extract_strided_slice %321 {offsets = [0, 256], sizes = [8, 128], strides = [1, 1]} : vector<8x384xf32> to vector<8x128xf32>
    %340 = arith.addf %339, %16 : vector<8x128xf32>
    %341 = arith.mulf %329, %340 : vector<8x128xf32>
    %342 = arith.addf %338, %341 : vector<8x128xf32>
    %343 = math.tanh %342 : vector<8x128xf32>
    %cst_90 = arith.constant 1.000000e+00 : f32
    %344 = vector.broadcast %cst_90 : f32 to vector<8x128xf32>
    %345 = arith.subf %344, %337 : vector<8x128xf32>
    %346 = arith.mulf %345, %343 : vector<8x128xf32>
    %347 = arith.mulf %337, %262 : vector<8x128xf32>
    %348 = arith.addf %346, %347 : vector<8x128xf32>
    %349 = vector.broadcast %17 : vector<1x128xf32> to vector<8x128xf32>
    %350 = arith.mulf %348, %349 : vector<8x128xf32>
    %cst_91 = arith.constant dense<0.000000e+00> : vector<8xf32>
    %351 = vector.multi_reduction <add>, %350, %cst_91 [1] : vector<8x128xf32> to vector<8xf32>
    %352 = vector.shape_cast %351 : vector<8xf32> to vector<8x1xf32>
    %353 = vector.broadcast %18 : vector<1x1xf32> to vector<8x1xf32>
    %354 = arith.addf %352, %353 : vector<8x1xf32>
    %355 = arith.maximumf %269, %354 : vector<8x1xf32>
    %356 = arith.subf %269, %355 : vector<8x1xf32>
    %357 = math.exp %356 : vector<8x1xf32>
    %358 = arith.subf %354, %355 : vector<8x1xf32>
    %359 = math.exp %358 : vector<8x1xf32>
    %360 = arith.mulf %357, %275 : vector<8x1xf32>
    %361 = arith.addf %360, %359 : vector<8x1xf32>
    %362 = vector.broadcast %357 : vector<8x1xf32> to vector<8x128xf32>
    %363 = arith.mulf %362, %280 : vector<8x128xf32>
    %364 = vector.broadcast %359 : vector<8x1xf32> to vector<8x128xf32>
    %365 = arith.mulf %364, %348 : vector<8x128xf32>
    %366 = arith.addf %363, %365 : vector<8x128xf32>
    %c4_i32 = arith.constant 4 : i32
    %c8_i32_92 = arith.constant 8 : i32
    %367 = arith.muli %c4_i32, %c8_i32_92 : i32
    %368 = tpu.assume_multiple %367, 8 : i32
    %369 = arith.index_cast %368 : i32 to index
    %c0_93 = arith.constant 0 : index
    %370 = vector.load %arg14[%369, %c0_93] : memref<64x384xf32, #tpu.memory_space<vmem>>, vector<8x384xf32>
    %371 = arith.truncf %314 : vector<8x128xf32> to vector<8x128xbf16>
    %c0_94 = arith.constant 0 : index
    %c0_95 = arith.constant 0 : index
    %372 = vector.load %arg2[%c0_94, %c0_95] : memref<128x384xbf16, #tpu.memory_space<vmem>>, vector<128x384xbf16>
    %cst_96 = arith.constant dense<0.000000e+00> : vector<8x384xf32>
    %373 = tpu.matmul %371, %372, %cst_96 {dimension_numbers = #tpu.dot_dimension_numbers<[1], [0], [0], [1], [0, 0, 1, 1], [], []>} : vector<8x128xbf16>, vector<128x384xbf16>, vector<8x384xf32> -> vector<8x384xf32>
    %374 = vector.extract_strided_slice %370 {offsets = [0, 0], sizes = [8, 128], strides = [1, 1]} : vector<8x384xf32> to vector<8x128xf32>
    %375 = vector.extract_strided_slice %373 {offsets = [0, 0], sizes = [8, 128], strides = [1, 1]} : vector<8x384xf32> to vector<8x128xf32>
    %376 = arith.addf %374, %375 : vector<8x128xf32>
    %377 = arith.negf %376 : vector<8x128xf32>
    %378 = math.exp %377 : vector<8x128xf32>
    %cst_97 = arith.constant 1.000000e+00 : f32
    %379 = vector.broadcast %cst_97 : f32 to vector<8x128xf32>
    %380 = arith.addf %379, %378 : vector<8x128xf32>
    %381 = arith.divf %379, %380 : vector<8x128xf32>
    %382 = vector.extract_strided_slice %370 {offsets = [0, 128], sizes = [8, 128], strides = [1, 1]} : vector<8x384xf32> to vector<8x128xf32>
    %383 = vector.extract_strided_slice %373 {offsets = [0, 128], sizes = [8, 128], strides = [1, 1]} : vector<8x384xf32> to vector<8x128xf32>
    %384 = arith.addf %382, %383 : vector<8x128xf32>
    %385 = arith.negf %384 : vector<8x128xf32>
    %386 = math.exp %385 : vector<8x128xf32>
    %cst_98 = arith.constant 1.000000e+00 : f32
    %387 = vector.broadcast %cst_98 : f32 to vector<8x128xf32>
    %388 = arith.addf %387, %386 : vector<8x128xf32>
    %389 = arith.divf %387, %388 : vector<8x128xf32>
    %390 = vector.extract_strided_slice %370 {offsets = [0, 256], sizes = [8, 128], strides = [1, 1]} : vector<8x384xf32> to vector<8x128xf32>
    %391 = vector.extract_strided_slice %373 {offsets = [0, 256], sizes = [8, 128], strides = [1, 1]} : vector<8x384xf32> to vector<8x128xf32>
    %392 = arith.addf %391, %13 : vector<8x128xf32>
    %393 = arith.mulf %381, %392 : vector<8x128xf32>
    %394 = arith.addf %390, %393 : vector<8x128xf32>
    %395 = math.tanh %394 : vector<8x128xf32>
    %cst_99 = arith.constant 1.000000e+00 : f32
    %396 = vector.broadcast %cst_99 : f32 to vector<8x128xf32>
    %397 = arith.subf %396, %389 : vector<8x128xf32>
    %398 = arith.mulf %397, %395 : vector<8x128xf32>
    %399 = arith.mulf %389, %314 : vector<8x128xf32>
    %400 = arith.addf %398, %399 : vector<8x128xf32>
    %401 = arith.truncf %400 : vector<8x128xf32> to vector<8x128xbf16>
    %c0_100 = arith.constant 0 : index
    %c0_101 = arith.constant 0 : index
    %402 = vector.load %arg5[%c0_100, %c0_101] : memref<128x384xbf16, #tpu.memory_space<vmem>>, vector<128x384xbf16>
    %cst_102 = arith.constant dense<0.000000e+00> : vector<8x384xf32>
    %403 = tpu.matmul %401, %402, %cst_102 {dimension_numbers = #tpu.dot_dimension_numbers<[1], [0], [0], [1], [0, 0, 1, 1], [], []>} : vector<8x128xbf16>, vector<128x384xbf16>, vector<8x384xf32> -> vector<8x384xf32>
    %404 = arith.addf %403, %10 : vector<8x384xf32>
    %405 = arith.truncf %348 : vector<8x128xf32> to vector<8x128xbf16>
    %c0_103 = arith.constant 0 : index
    %c0_104 = arith.constant 0 : index
    %406 = vector.load %arg6[%c0_103, %c0_104] : memref<128x384xbf16, #tpu.memory_space<vmem>>, vector<128x384xbf16>
    %cst_105 = arith.constant dense<0.000000e+00> : vector<8x384xf32>
    %407 = tpu.matmul %405, %406, %cst_105 {dimension_numbers = #tpu.dot_dimension_numbers<[1], [0], [0], [1], [0, 0, 1, 1], [], []>} : vector<8x128xbf16>, vector<128x384xbf16>, vector<8x384xf32> -> vector<8x384xf32>
    %408 = vector.extract_strided_slice %404 {offsets = [0, 0], sizes = [8, 128], strides = [1, 1]} : vector<8x384xf32> to vector<8x128xf32>
    %409 = vector.extract_strided_slice %407 {offsets = [0, 0], sizes = [8, 128], strides = [1, 1]} : vector<8x384xf32> to vector<8x128xf32>
    %410 = arith.addf %408, %409 : vector<8x128xf32>
    %411 = arith.negf %410 : vector<8x128xf32>
    %412 = math.exp %411 : vector<8x128xf32>
    %cst_106 = arith.constant 1.000000e+00 : f32
    %413 = vector.broadcast %cst_106 : f32 to vector<8x128xf32>
    %414 = arith.addf %413, %412 : vector<8x128xf32>
    %415 = arith.divf %413, %414 : vector<8x128xf32>
    %416 = vector.extract_strided_slice %404 {offsets = [0, 128], sizes = [8, 128], strides = [1, 1]} : vector<8x384xf32> to vector<8x128xf32>
    %417 = vector.extract_strided_slice %407 {offsets = [0, 128], sizes = [8, 128], strides = [1, 1]} : vector<8x384xf32> to vector<8x128xf32>
    %418 = arith.addf %416, %417 : vector<8x128xf32>
    %419 = arith.negf %418 : vector<8x128xf32>
    %420 = math.exp %419 : vector<8x128xf32>
    %cst_107 = arith.constant 1.000000e+00 : f32
    %421 = vector.broadcast %cst_107 : f32 to vector<8x128xf32>
    %422 = arith.addf %421, %420 : vector<8x128xf32>
    %423 = arith.divf %421, %422 : vector<8x128xf32>
    %424 = vector.extract_strided_slice %404 {offsets = [0, 256], sizes = [8, 128], strides = [1, 1]} : vector<8x384xf32> to vector<8x128xf32>
    %425 = vector.extract_strided_slice %407 {offsets = [0, 256], sizes = [8, 128], strides = [1, 1]} : vector<8x384xf32> to vector<8x128xf32>
    %426 = arith.addf %425, %16 : vector<8x128xf32>
    %427 = arith.mulf %415, %426 : vector<8x128xf32>
    %428 = arith.addf %424, %427 : vector<8x128xf32>
    %429 = math.tanh %428 : vector<8x128xf32>
    %cst_108 = arith.constant 1.000000e+00 : f32
    %430 = vector.broadcast %cst_108 : f32 to vector<8x128xf32>
    %431 = arith.subf %430, %423 : vector<8x128xf32>
    %432 = arith.mulf %431, %429 : vector<8x128xf32>
    %433 = arith.mulf %423, %348 : vector<8x128xf32>
    %434 = arith.addf %432, %433 : vector<8x128xf32>
    %435 = vector.broadcast %17 : vector<1x128xf32> to vector<8x128xf32>
    %436 = arith.mulf %434, %435 : vector<8x128xf32>
    %cst_109 = arith.constant dense<0.000000e+00> : vector<8xf32>
    %437 = vector.multi_reduction <add>, %436, %cst_109 [1] : vector<8x128xf32> to vector<8xf32>
    %438 = vector.shape_cast %437 : vector<8xf32> to vector<8x1xf32>
    %439 = vector.broadcast %18 : vector<1x1xf32> to vector<8x1xf32>
    %440 = arith.addf %438, %439 : vector<8x1xf32>
    %441 = arith.maximumf %355, %440 : vector<8x1xf32>
    %442 = arith.subf %355, %441 : vector<8x1xf32>
    %443 = math.exp %442 : vector<8x1xf32>
    %444 = arith.subf %440, %441 : vector<8x1xf32>
    %445 = math.exp %444 : vector<8x1xf32>
    %446 = arith.mulf %443, %361 : vector<8x1xf32>
    %447 = arith.addf %446, %445 : vector<8x1xf32>
    %448 = vector.broadcast %443 : vector<8x1xf32> to vector<8x128xf32>
    %449 = arith.mulf %448, %366 : vector<8x128xf32>
    %450 = vector.broadcast %445 : vector<8x1xf32> to vector<8x128xf32>
    %451 = arith.mulf %450, %434 : vector<8x128xf32>
    %452 = arith.addf %449, %451 : vector<8x128xf32>
    %c5_i32 = arith.constant 5 : i32
    %c8_i32_110 = arith.constant 8 : i32
    %453 = arith.muli %c5_i32, %c8_i32_110 : i32
    %454 = tpu.assume_multiple %453, 8 : i32
    %455 = arith.index_cast %454 : i32 to index
    %c0_111 = arith.constant 0 : index
    %456 = vector.load %arg14[%455, %c0_111] : memref<64x384xf32, #tpu.memory_space<vmem>>, vector<8x384xf32>
    %457 = arith.truncf %400 : vector<8x128xf32> to vector<8x128xbf16>
    %c0_112 = arith.constant 0 : index
    %c0_113 = arith.constant 0 : index
    %458 = vector.load %arg2[%c0_112, %c0_113] : memref<128x384xbf16, #tpu.memory_space<vmem>>, vector<128x384xbf16>
    %cst_114 = arith.constant dense<0.000000e+00> : vector<8x384xf32>
    %459 = tpu.matmul %457, %458, %cst_114 {dimension_numbers = #tpu.dot_dimension_numbers<[1], [0], [0], [1], [0, 0, 1, 1], [], []>} : vector<8x128xbf16>, vector<128x384xbf16>, vector<8x384xf32> -> vector<8x384xf32>
    %460 = vector.extract_strided_slice %456 {offsets = [0, 0], sizes = [8, 128], strides = [1, 1]} : vector<8x384xf32> to vector<8x128xf32>
    %461 = vector.extract_strided_slice %459 {offsets = [0, 0], sizes = [8, 128], strides = [1, 1]} : vector<8x384xf32> to vector<8x128xf32>
    %462 = arith.addf %460, %461 : vector<8x128xf32>
    %463 = arith.negf %462 : vector<8x128xf32>
    %464 = math.exp %463 : vector<8x128xf32>
    %cst_115 = arith.constant 1.000000e+00 : f32
    %465 = vector.broadcast %cst_115 : f32 to vector<8x128xf32>
    %466 = arith.addf %465, %464 : vector<8x128xf32>
    %467 = arith.divf %465, %466 : vector<8x128xf32>
    %468 = vector.extract_strided_slice %456 {offsets = [0, 128], sizes = [8, 128], strides = [1, 1]} : vector<8x384xf32> to vector<8x128xf32>
    %469 = vector.extract_strided_slice %459 {offsets = [0, 128], sizes = [8, 128], strides = [1, 1]} : vector<8x384xf32> to vector<8x128xf32>
    %470 = arith.addf %468, %469 : vector<8x128xf32>
    %471 = arith.negf %470 : vector<8x128xf32>
    %472 = math.exp %471 : vector<8x128xf32>
    %cst_116 = arith.constant 1.000000e+00 : f32
    %473 = vector.broadcast %cst_116 : f32 to vector<8x128xf32>
    %474 = arith.addf %473, %472 : vector<8x128xf32>
    %475 = arith.divf %473, %474 : vector<8x128xf32>
    %476 = vector.extract_strided_slice %456 {offsets = [0, 256], sizes = [8, 128], strides = [1, 1]} : vector<8x384xf32> to vector<8x128xf32>
    %477 = vector.extract_strided_slice %459 {offsets = [0, 256], sizes = [8, 128], strides = [1, 1]} : vector<8x384xf32> to vector<8x128xf32>
    %478 = arith.addf %477, %13 : vector<8x128xf32>
    %479 = arith.mulf %467, %478 : vector<8x128xf32>
    %480 = arith.addf %476, %479 : vector<8x128xf32>
    %481 = math.tanh %480 : vector<8x128xf32>
    %cst_117 = arith.constant 1.000000e+00 : f32
    %482 = vector.broadcast %cst_117 : f32 to vector<8x128xf32>
    %483 = arith.subf %482, %475 : vector<8x128xf32>
    %484 = arith.mulf %483, %481 : vector<8x128xf32>
    %485 = arith.mulf %475, %400 : vector<8x128xf32>
    %486 = arith.addf %484, %485 : vector<8x128xf32>
    %487 = arith.truncf %486 : vector<8x128xf32> to vector<8x128xbf16>
    %c0_118 = arith.constant 0 : index
    %c0_119 = arith.constant 0 : index
    %488 = vector.load %arg5[%c0_118, %c0_119] : memref<128x384xbf16, #tpu.memory_space<vmem>>, vector<128x384xbf16>
    %cst_120 = arith.constant dense<0.000000e+00> : vector<8x384xf32>
    %489 = tpu.matmul %487, %488, %cst_120 {dimension_numbers = #tpu.dot_dimension_numbers<[1], [0], [0], [1], [0, 0, 1, 1], [], []>} : vector<8x128xbf16>, vector<128x384xbf16>, vector<8x384xf32> -> vector<8x384xf32>
    %490 = arith.addf %489, %10 : vector<8x384xf32>
    %491 = arith.truncf %434 : vector<8x128xf32> to vector<8x128xbf16>
    %c0_121 = arith.constant 0 : index
    %c0_122 = arith.constant 0 : index
    %492 = vector.load %arg6[%c0_121, %c0_122] : memref<128x384xbf16, #tpu.memory_space<vmem>>, vector<128x384xbf16>
    %cst_123 = arith.constant dense<0.000000e+00> : vector<8x384xf32>
    %493 = tpu.matmul %491, %492, %cst_123 {dimension_numbers = #tpu.dot_dimension_numbers<[1], [0], [0], [1], [0, 0, 1, 1], [], []>} : vector<8x128xbf16>, vector<128x384xbf16>, vector<8x384xf32> -> vector<8x384xf32>
    %494 = vector.extract_strided_slice %490 {offsets = [0, 0], sizes = [8, 128], strides = [1, 1]} : vector<8x384xf32> to vector<8x128xf32>
    %495 = vector.extract_strided_slice %493 {offsets = [0, 0], sizes = [8, 128], strides = [1, 1]} : vector<8x384xf32> to vector<8x128xf32>
    %496 = arith.addf %494, %495 : vector<8x128xf32>
    %497 = arith.negf %496 : vector<8x128xf32>
    %498 = math.exp %497 : vector<8x128xf32>
    %cst_124 = arith.constant 1.000000e+00 : f32
    %499 = vector.broadcast %cst_124 : f32 to vector<8x128xf32>
    %500 = arith.addf %499, %498 : vector<8x128xf32>
    %501 = arith.divf %499, %500 : vector<8x128xf32>
    %502 = vector.extract_strided_slice %490 {offsets = [0, 128], sizes = [8, 128], strides = [1, 1]} : vector<8x384xf32> to vector<8x128xf32>
    %503 = vector.extract_strided_slice %493 {offsets = [0, 128], sizes = [8, 128], strides = [1, 1]} : vector<8x384xf32> to vector<8x128xf32>
    %504 = arith.addf %502, %503 : vector<8x128xf32>
    %505 = arith.negf %504 : vector<8x128xf32>
    %506 = math.exp %505 : vector<8x128xf32>
    %cst_125 = arith.constant 1.000000e+00 : f32
    %507 = vector.broadcast %cst_125 : f32 to vector<8x128xf32>
    %508 = arith.addf %507, %506 : vector<8x128xf32>
    %509 = arith.divf %507, %508 : vector<8x128xf32>
    %510 = vector.extract_strided_slice %490 {offsets = [0, 256], sizes = [8, 128], strides = [1, 1]} : vector<8x384xf32> to vector<8x128xf32>
    %511 = vector.extract_strided_slice %493 {offsets = [0, 256], sizes = [8, 128], strides = [1, 1]} : vector<8x384xf32> to vector<8x128xf32>
    %512 = arith.addf %511, %16 : vector<8x128xf32>
    %513 = arith.mulf %501, %512 : vector<8x128xf32>
    %514 = arith.addf %510, %513 : vector<8x128xf32>
    %515 = math.tanh %514 : vector<8x128xf32>
    %cst_126 = arith.constant 1.000000e+00 : f32
    %516 = vector.broadcast %cst_126 : f32 to vector<8x128xf32>
    %517 = arith.subf %516, %509 : vector<8x128xf32>
    %518 = arith.mulf %517, %515 : vector<8x128xf32>
    %519 = arith.mulf %509, %434 : vector<8x128xf32>
    %520 = arith.addf %518, %519 : vector<8x128xf32>
    %521 = vector.broadcast %17 : vector<1x128xf32> to vector<8x128xf32>
    %522 = arith.mulf %520, %521 : vector<8x128xf32>
    %cst_127 = arith.constant dense<0.000000e+00> : vector<8xf32>
    %523 = vector.multi_reduction <add>, %522, %cst_127 [1] : vector<8x128xf32> to vector<8xf32>
    %524 = vector.shape_cast %523 : vector<8xf32> to vector<8x1xf32>
    %525 = vector.broadcast %18 : vector<1x1xf32> to vector<8x1xf32>
    %526 = arith.addf %524, %525 : vector<8x1xf32>
    %527 = arith.maximumf %441, %526 : vector<8x1xf32>
    %528 = arith.subf %441, %527 : vector<8x1xf32>
    %529 = math.exp %528 : vector<8x1xf32>
    %530 = arith.subf %526, %527 : vector<8x1xf32>
    %531 = math.exp %530 : vector<8x1xf32>
    %532 = arith.mulf %529, %447 : vector<8x1xf32>
    %533 = arith.addf %532, %531 : vector<8x1xf32>
    %534 = vector.broadcast %529 : vector<8x1xf32> to vector<8x128xf32>
    %535 = arith.mulf %534, %452 : vector<8x128xf32>
    %536 = vector.broadcast %531 : vector<8x1xf32> to vector<8x128xf32>
    %537 = arith.mulf %536, %520 : vector<8x128xf32>
    %538 = arith.addf %535, %537 : vector<8x128xf32>
    %c6_i32 = arith.constant 6 : i32
    %c8_i32_128 = arith.constant 8 : i32
    %539 = arith.muli %c6_i32, %c8_i32_128 : i32
    %540 = tpu.assume_multiple %539, 8 : i32
    %541 = arith.index_cast %540 : i32 to index
    %c0_129 = arith.constant 0 : index
    %542 = vector.load %arg14[%541, %c0_129] : memref<64x384xf32, #tpu.memory_space<vmem>>, vector<8x384xf32>
    %543 = arith.truncf %486 : vector<8x128xf32> to vector<8x128xbf16>
    %c0_130 = arith.constant 0 : index
    %c0_131 = arith.constant 0 : index
    %544 = vector.load %arg2[%c0_130, %c0_131] : memref<128x384xbf16, #tpu.memory_space<vmem>>, vector<128x384xbf16>
    %cst_132 = arith.constant dense<0.000000e+00> : vector<8x384xf32>
    %545 = tpu.matmul %543, %544, %cst_132 {dimension_numbers = #tpu.dot_dimension_numbers<[1], [0], [0], [1], [0, 0, 1, 1], [], []>} : vector<8x128xbf16>, vector<128x384xbf16>, vector<8x384xf32> -> vector<8x384xf32>
    %546 = vector.extract_strided_slice %542 {offsets = [0, 0], sizes = [8, 128], strides = [1, 1]} : vector<8x384xf32> to vector<8x128xf32>
    %547 = vector.extract_strided_slice %545 {offsets = [0, 0], sizes = [8, 128], strides = [1, 1]} : vector<8x384xf32> to vector<8x128xf32>
    %548 = arith.addf %546, %547 : vector<8x128xf32>
    %549 = arith.negf %548 : vector<8x128xf32>
    %550 = math.exp %549 : vector<8x128xf32>
    %cst_133 = arith.constant 1.000000e+00 : f32
    %551 = vector.broadcast %cst_133 : f32 to vector<8x128xf32>
    %552 = arith.addf %551, %550 : vector<8x128xf32>
    %553 = arith.divf %551, %552 : vector<8x128xf32>
    %554 = vector.extract_strided_slice %542 {offsets = [0, 128], sizes = [8, 128], strides = [1, 1]} : vector<8x384xf32> to vector<8x128xf32>
    %555 = vector.extract_strided_slice %545 {offsets = [0, 128], sizes = [8, 128], strides = [1, 1]} : vector<8x384xf32> to vector<8x128xf32>
    %556 = arith.addf %554, %555 : vector<8x128xf32>
    %557 = arith.negf %556 : vector<8x128xf32>
    %558 = math.exp %557 : vector<8x128xf32>
    %cst_134 = arith.constant 1.000000e+00 : f32
    %559 = vector.broadcast %cst_134 : f32 to vector<8x128xf32>
    %560 = arith.addf %559, %558 : vector<8x128xf32>
    %561 = arith.divf %559, %560 : vector<8x128xf32>
    %562 = vector.extract_strided_slice %542 {offsets = [0, 256], sizes = [8, 128], strides = [1, 1]} : vector<8x384xf32> to vector<8x128xf32>
    %563 = vector.extract_strided_slice %545 {offsets = [0, 256], sizes = [8, 128], strides = [1, 1]} : vector<8x384xf32> to vector<8x128xf32>
    %564 = arith.addf %563, %13 : vector<8x128xf32>
    %565 = arith.mulf %553, %564 : vector<8x128xf32>
    %566 = arith.addf %562, %565 : vector<8x128xf32>
    %567 = math.tanh %566 : vector<8x128xf32>
    %cst_135 = arith.constant 1.000000e+00 : f32
    %568 = vector.broadcast %cst_135 : f32 to vector<8x128xf32>
    %569 = arith.subf %568, %561 : vector<8x128xf32>
    %570 = arith.mulf %569, %567 : vector<8x128xf32>
    %571 = arith.mulf %561, %486 : vector<8x128xf32>
    %572 = arith.addf %570, %571 : vector<8x128xf32>
    %573 = arith.truncf %572 : vector<8x128xf32> to vector<8x128xbf16>
    %c0_136 = arith.constant 0 : index
    %c0_137 = arith.constant 0 : index
    %574 = vector.load %arg5[%c0_136, %c0_137] : memref<128x384xbf16, #tpu.memory_space<vmem>>, vector<128x384xbf16>
    %cst_138 = arith.constant dense<0.000000e+00> : vector<8x384xf32>
    %575 = tpu.matmul %573, %574, %cst_138 {dimension_numbers = #tpu.dot_dimension_numbers<[1], [0], [0], [1], [0, 0, 1, 1], [], []>} : vector<8x128xbf16>, vector<128x384xbf16>, vector<8x384xf32> -> vector<8x384xf32>
    %576 = arith.addf %575, %10 : vector<8x384xf32>
    %577 = arith.truncf %520 : vector<8x128xf32> to vector<8x128xbf16>
    %c0_139 = arith.constant 0 : index
    %c0_140 = arith.constant 0 : index
    %578 = vector.load %arg6[%c0_139, %c0_140] : memref<128x384xbf16, #tpu.memory_space<vmem>>, vector<128x384xbf16>
    %cst_141 = arith.constant dense<0.000000e+00> : vector<8x384xf32>
    %579 = tpu.matmul %577, %578, %cst_141 {dimension_numbers = #tpu.dot_dimension_numbers<[1], [0], [0], [1], [0, 0, 1, 1], [], []>} : vector<8x128xbf16>, vector<128x384xbf16>, vector<8x384xf32> -> vector<8x384xf32>
    %580 = vector.extract_strided_slice %576 {offsets = [0, 0], sizes = [8, 128], strides = [1, 1]} : vector<8x384xf32> to vector<8x128xf32>
    %581 = vector.extract_strided_slice %579 {offsets = [0, 0], sizes = [8, 128], strides = [1, 1]} : vector<8x384xf32> to vector<8x128xf32>
    %582 = arith.addf %580, %581 : vector<8x128xf32>
    %583 = arith.negf %582 : vector<8x128xf32>
    %584 = math.exp %583 : vector<8x128xf32>
    %cst_142 = arith.constant 1.000000e+00 : f32
    %585 = vector.broadcast %cst_142 : f32 to vector<8x128xf32>
    %586 = arith.addf %585, %584 : vector<8x128xf32>
    %587 = arith.divf %585, %586 : vector<8x128xf32>
    %588 = vector.extract_strided_slice %576 {offsets = [0, 128], sizes = [8, 128], strides = [1, 1]} : vector<8x384xf32> to vector<8x128xf32>
    %589 = vector.extract_strided_slice %579 {offsets = [0, 128], sizes = [8, 128], strides = [1, 1]} : vector<8x384xf32> to vector<8x128xf32>
    %590 = arith.addf %588, %589 : vector<8x128xf32>
    %591 = arith.negf %590 : vector<8x128xf32>
    %592 = math.exp %591 : vector<8x128xf32>
    %cst_143 = arith.constant 1.000000e+00 : f32
    %593 = vector.broadcast %cst_143 : f32 to vector<8x128xf32>
    %594 = arith.addf %593, %592 : vector<8x128xf32>
    %595 = arith.divf %593, %594 : vector<8x128xf32>
    %596 = vector.extract_strided_slice %576 {offsets = [0, 256], sizes = [8, 128], strides = [1, 1]} : vector<8x384xf32> to vector<8x128xf32>
    %597 = vector.extract_strided_slice %579 {offsets = [0, 256], sizes = [8, 128], strides = [1, 1]} : vector<8x384xf32> to vector<8x128xf32>
    %598 = arith.addf %597, %16 : vector<8x128xf32>
    %599 = arith.mulf %587, %598 : vector<8x128xf32>
    %600 = arith.addf %596, %599 : vector<8x128xf32>
    %601 = math.tanh %600 : vector<8x128xf32>
    %cst_144 = arith.constant 1.000000e+00 : f32
    %602 = vector.broadcast %cst_144 : f32 to vector<8x128xf32>
    %603 = arith.subf %602, %595 : vector<8x128xf32>
    %604 = arith.mulf %603, %601 : vector<8x128xf32>
    %605 = arith.mulf %595, %520 : vector<8x128xf32>
    %606 = arith.addf %604, %605 : vector<8x128xf32>
    %607 = vector.broadcast %17 : vector<1x128xf32> to vector<8x128xf32>
    %608 = arith.mulf %606, %607 : vector<8x128xf32>
    %cst_145 = arith.constant dense<0.000000e+00> : vector<8xf32>
    %609 = vector.multi_reduction <add>, %608, %cst_145 [1] : vector<8x128xf32> to vector<8xf32>
    %610 = vector.shape_cast %609 : vector<8xf32> to vector<8x1xf32>
    %611 = vector.broadcast %18 : vector<1x1xf32> to vector<8x1xf32>
    %612 = arith.addf %610, %611 : vector<8x1xf32>
    %613 = arith.maximumf %527, %612 : vector<8x1xf32>
    %614 = arith.subf %527, %613 : vector<8x1xf32>
    %615 = math.exp %614 : vector<8x1xf32>
    %616 = arith.subf %612, %613 : vector<8x1xf32>
    %617 = math.exp %616 : vector<8x1xf32>
    %618 = arith.mulf %615, %533 : vector<8x1xf32>
    %619 = arith.addf %618, %617 : vector<8x1xf32>
    %620 = vector.broadcast %615 : vector<8x1xf32> to vector<8x128xf32>
    %621 = arith.mulf %620, %538 : vector<8x128xf32>
    %622 = vector.broadcast %617 : vector<8x1xf32> to vector<8x128xf32>
    %623 = arith.mulf %622, %606 : vector<8x128xf32>
    %624 = arith.addf %621, %623 : vector<8x128xf32>
    %c7_i32 = arith.constant 7 : i32
    %c8_i32_146 = arith.constant 8 : i32
    %625 = arith.muli %c7_i32, %c8_i32_146 : i32
    %626 = tpu.assume_multiple %625, 8 : i32
    %627 = arith.index_cast %626 : i32 to index
    %c0_147 = arith.constant 0 : index
    %628 = vector.load %arg14[%627, %c0_147] : memref<64x384xf32, #tpu.memory_space<vmem>>, vector<8x384xf32>
    %629 = arith.truncf %572 : vector<8x128xf32> to vector<8x128xbf16>
    %c0_148 = arith.constant 0 : index
    %c0_149 = arith.constant 0 : index
    %630 = vector.load %arg2[%c0_148, %c0_149] : memref<128x384xbf16, #tpu.memory_space<vmem>>, vector<128x384xbf16>
    %cst_150 = arith.constant dense<0.000000e+00> : vector<8x384xf32>
    %631 = tpu.matmul %629, %630, %cst_150 {dimension_numbers = #tpu.dot_dimension_numbers<[1], [0], [0], [1], [0, 0, 1, 1], [], []>} : vector<8x128xbf16>, vector<128x384xbf16>, vector<8x384xf32> -> vector<8x384xf32>
    %632 = vector.extract_strided_slice %628 {offsets = [0, 0], sizes = [8, 128], strides = [1, 1]} : vector<8x384xf32> to vector<8x128xf32>
    %633 = vector.extract_strided_slice %631 {offsets = [0, 0], sizes = [8, 128], strides = [1, 1]} : vector<8x384xf32> to vector<8x128xf32>
    %634 = arith.addf %632, %633 : vector<8x128xf32>
    %635 = arith.negf %634 : vector<8x128xf32>
    %636 = math.exp %635 : vector<8x128xf32>
    %cst_151 = arith.constant 1.000000e+00 : f32
    %637 = vector.broadcast %cst_151 : f32 to vector<8x128xf32>
    %638 = arith.addf %637, %636 : vector<8x128xf32>
    %639 = arith.divf %637, %638 : vector<8x128xf32>
    %640 = vector.extract_strided_slice %628 {offsets = [0, 128], sizes = [8, 128], strides = [1, 1]} : vector<8x384xf32> to vector<8x128xf32>
    %641 = vector.extract_strided_slice %631 {offsets = [0, 128], sizes = [8, 128], strides = [1, 1]} : vector<8x384xf32> to vector<8x128xf32>
    %642 = arith.addf %640, %641 : vector<8x128xf32>
    %643 = arith.negf %642 : vector<8x128xf32>
    %644 = math.exp %643 : vector<8x128xf32>
    %cst_152 = arith.constant 1.000000e+00 : f32
    %645 = vector.broadcast %cst_152 : f32 to vector<8x128xf32>
    %646 = arith.addf %645, %644 : vector<8x128xf32>
    %647 = arith.divf %645, %646 : vector<8x128xf32>
    %648 = vector.extract_strided_slice %628 {offsets = [0, 256], sizes = [8, 128], strides = [1, 1]} : vector<8x384xf32> to vector<8x128xf32>
    %649 = vector.extract_strided_slice %631 {offsets = [0, 256], sizes = [8, 128], strides = [1, 1]} : vector<8x384xf32> to vector<8x128xf32>
    %650 = arith.addf %649, %13 : vector<8x128xf32>
    %651 = arith.mulf %639, %650 : vector<8x128xf32>
    %652 = arith.addf %648, %651 : vector<8x128xf32>
    %653 = math.tanh %652 : vector<8x128xf32>
    %cst_153 = arith.constant 1.000000e+00 : f32
    %654 = vector.broadcast %cst_153 : f32 to vector<8x128xf32>
    %655 = arith.subf %654, %647 : vector<8x128xf32>
    %656 = arith.mulf %655, %653 : vector<8x128xf32>
    %657 = arith.mulf %647, %572 : vector<8x128xf32>
    %658 = arith.addf %656, %657 : vector<8x128xf32>
    %659 = arith.truncf %658 : vector<8x128xf32> to vector<8x128xbf16>
    %c0_154 = arith.constant 0 : index
    %c0_155 = arith.constant 0 : index
    %660 = vector.load %arg5[%c0_154, %c0_155] : memref<128x384xbf16, #tpu.memory_space<vmem>>, vector<128x384xbf16>
    %cst_156 = arith.constant dense<0.000000e+00> : vector<8x384xf32>
    %661 = tpu.matmul %659, %660, %cst_156 {dimension_numbers = #tpu.dot_dimension_numbers<[1], [0], [0], [1], [0, 0, 1, 1], [], []>} : vector<8x128xbf16>, vector<128x384xbf16>, vector<8x384xf32> -> vector<8x384xf32>
    %662 = arith.addf %661, %10 : vector<8x384xf32>
    %663 = arith.truncf %606 : vector<8x128xf32> to vector<8x128xbf16>
    %c0_157 = arith.constant 0 : index
    %c0_158 = arith.constant 0 : index
    %664 = vector.load %arg6[%c0_157, %c0_158] : memref<128x384xbf16, #tpu.memory_space<vmem>>, vector<128x384xbf16>
    %cst_159 = arith.constant dense<0.000000e+00> : vector<8x384xf32>
    %665 = tpu.matmul %663, %664, %cst_159 {dimension_numbers = #tpu.dot_dimension_numbers<[1], [0], [0], [1], [0, 0, 1, 1], [], []>} : vector<8x128xbf16>, vector<128x384xbf16>, vector<8x384xf32> -> vector<8x384xf32>
    %666 = vector.extract_strided_slice %662 {offsets = [0, 0], sizes = [8, 128], strides = [1, 1]} : vector<8x384xf32> to vector<8x128xf32>
    %667 = vector.extract_strided_slice %665 {offsets = [0, 0], sizes = [8, 128], strides = [1, 1]} : vector<8x384xf32> to vector<8x128xf32>
    %668 = arith.addf %666, %667 : vector<8x128xf32>
    %669 = arith.negf %668 : vector<8x128xf32>
    %670 = math.exp %669 : vector<8x128xf32>
    %cst_160 = arith.constant 1.000000e+00 : f32
    %671 = vector.broadcast %cst_160 : f32 to vector<8x128xf32>
    %672 = arith.addf %671, %670 : vector<8x128xf32>
    %673 = arith.divf %671, %672 : vector<8x128xf32>
    %674 = vector.extract_strided_slice %662 {offsets = [0, 128], sizes = [8, 128], strides = [1, 1]} : vector<8x384xf32> to vector<8x128xf32>
    %675 = vector.extract_strided_slice %665 {offsets = [0, 128], sizes = [8, 128], strides = [1, 1]} : vector<8x384xf32> to vector<8x128xf32>
    %676 = arith.addf %674, %675 : vector<8x128xf32>
    %677 = arith.negf %676 : vector<8x128xf32>
    %678 = math.exp %677 : vector<8x128xf32>
    %cst_161 = arith.constant 1.000000e+00 : f32
    %679 = vector.broadcast %cst_161 : f32 to vector<8x128xf32>
    %680 = arith.addf %679, %678 : vector<8x128xf32>
    %681 = arith.divf %679, %680 : vector<8x128xf32>
    %682 = vector.extract_strided_slice %662 {offsets = [0, 256], sizes = [8, 128], strides = [1, 1]} : vector<8x384xf32> to vector<8x128xf32>
    %683 = vector.extract_strided_slice %665 {offsets = [0, 256], sizes = [8, 128], strides = [1, 1]} : vector<8x384xf32> to vector<8x128xf32>
    %684 = arith.addf %683, %16 : vector<8x128xf32>
    %685 = arith.mulf %673, %684 : vector<8x128xf32>
    %686 = arith.addf %682, %685 : vector<8x128xf32>
    %687 = math.tanh %686 : vector<8x128xf32>
    %cst_162 = arith.constant 1.000000e+00 : f32
    %688 = vector.broadcast %cst_162 : f32 to vector<8x128xf32>
    %689 = arith.subf %688, %681 : vector<8x128xf32>
    %690 = arith.mulf %689, %687 : vector<8x128xf32>
    %691 = arith.mulf %681, %606 : vector<8x128xf32>
    %692 = arith.addf %690, %691 : vector<8x128xf32>
    %693 = vector.broadcast %17 : vector<1x128xf32> to vector<8x128xf32>
    %694 = arith.mulf %692, %693 : vector<8x128xf32>
    %cst_163 = arith.constant dense<0.000000e+00> : vector<8xf32>
    %695 = vector.multi_reduction <add>, %694, %cst_163 [1] : vector<8x128xf32> to vector<8xf32>
    %696 = vector.shape_cast %695 : vector<8xf32> to vector<8x1xf32>
    %697 = vector.broadcast %18 : vector<1x1xf32> to vector<8x1xf32>
    %698 = arith.addf %696, %697 : vector<8x1xf32>
    %699 = arith.maximumf %613, %698 : vector<8x1xf32>
    %700 = arith.subf %613, %699 : vector<8x1xf32>
    %701 = math.exp %700 : vector<8x1xf32>
    %702 = arith.subf %698, %699 : vector<8x1xf32>
    %703 = math.exp %702 : vector<8x1xf32>
    %704 = arith.mulf %701, %619 : vector<8x1xf32>
    %705 = arith.addf %704, %703 : vector<8x1xf32>
    %706 = vector.broadcast %701 : vector<8x1xf32> to vector<8x128xf32>
    %707 = arith.mulf %706, %624 : vector<8x128xf32>
    %708 = vector.broadcast %703 : vector<8x1xf32> to vector<8x128xf32>
    %709 = arith.mulf %708, %692 : vector<8x128xf32>
    %710 = arith.addf %707, %709 : vector<8x128xf32>
    %c8_i32_164 = arith.constant 8 : i32
    %711 = vector.broadcast %705 : vector<8x1xf32> to vector<8x128xf32>
    %712 = arith.divf %710, %711 : vector<8x128xf32>
    %c0_165 = arith.constant 0 : index
    %c0_166 = arith.constant 0 : index
    %713 = vector.load %arg11[%c0_165, %c0_166] : memref<128x128xf32, #tpu.memory_space<vmem>>, vector<128x128xf32>
    %cst_167 = arith.constant dense<0.000000e+00> : vector<8x128xf32>
    %714 = tpu.matmul %712, %713, %cst_167 {dimension_numbers = #tpu.dot_dimension_numbers<[1], [0], [0], [1], [0, 0, 1, 1], [], []>} : vector<8x128xf32>, vector<128x128xf32>, vector<8x128xf32> -> vector<8x128xf32>
    %c0_168 = arith.constant 0 : index
    %c0_169 = arith.constant 0 : index
    %715 = vector.load %arg12[%c0_168, %c0_169] : memref<1x128xf32, #tpu.memory_space<vmem>>, vector<1x128xf32>
    %716 = vector.broadcast %715 : vector<1x128xf32> to vector<8x128xf32>
    %717 = arith.addf %714, %716 : vector<8x128xf32>
    %c0_170 = arith.constant 0 : index
    %c0_171 = arith.constant 0 : index
    %718 = vector.load %arg13[%c0_170, %c0_171] : memref<8x128xf32, #tpu.memory_space<vmem>>, vector<8x128xf32>
    tpu.vector_store %arg13[%c0_170, %c0_171], %717 {strides = array<i32>} : memref<8x128xf32, #tpu.memory_space<vmem>>, vector<8x128xf32>,
    return
  }
}

</mosaic_0001>

<llo_original>
// kernel: gru_with_attention_forward.1
$region0: #{gru_with_attention_forward.1}
  #allocation0 [shape = 'u32[]', space=smem, size = 0x4, offset = 0x4, fixed_abs, tag = 'smem constant byte address 0x4 - core index']
  #allocation1 [shape = 'u32[144,128]{1,0:T(1,128)}', space=vmem, size = 0x12000, scoped, tag = 'internal scratch']
  #allocation2 [shape = 'f32[64,384]{1,0:T(8,128)}', space=vmem, size = 0x18000, scoped, tag = 'scratch operand']
  #allocation3 [shape = 'f32[1,1]{1,0:T(1,128)S(1)}', space=vmem, size = 0x200, scoped, tag = 'scoped memory for gru_with_attention_forward.1']
  %s0 = inlined_call_operand.vmem [shape: f32[64,16], index: 0, kind: input, shape index: {}]
  %s1 = inlined_call_operand.vmem [shape: bf16[16,384], index: 1, kind: input, shape index: {}]
  %s2 = inlined_call_operand.hbm [shape: bf16[128,384], index: 2, kind: input, shape index: {}]
  %s3 = inlined_call_operand.vmem [shape: f32[1,384], index: 3, kind: input, shape index: {}]
  %s4 = inlined_call_operand.vmem [shape: f32[1,128], index: 4, kind: input, shape index: {}]
  %s5 = inlined_call_operand.hbm [shape: bf16[128,384], index: 5, kind: input, shape index: {}]
  %s6 = inlined_call_operand.hbm [shape: bf16[128,384], index: 6, kind: input, shape index: {}]
  %s7 = inlined_call_operand.vmem [shape: f32[1,384], index: 7, kind: input, shape index: {}]
  %s8 = inlined_call_operand.vmem [shape: f32[1,128], index: 8, kind: input, shape index: {}]
  %s9 = inlined_call_operand.vmem [shape: f32[1,128], index: 9, kind: input, shape index: {}]
  %s10 = inlined_call_operand.<no memory space> [shape: f32[1,1], index: 10, kind: input, shape index: {}]
  %s11 = inlined_call_operand.hbm [shape: f32[128,128], index: 11, kind: input, shape index: {}]
  %s12 = inlined_call_operand.vmem [shape: f32[1,128], index: 12, kind: input, shape index: {}]
  %s13 = inlined_call_operand.vmem [shape: f32[8,128], index: 13, kind: output, shape index: {}]
  %s14 = sld [smem:[#allocation0]]
  $region78: #{gru_with_attention_forward.1} parent=0
    _
  %s16 = ssub.s32 1, %s14
  %s17 = scalar_select 0, %s16, %s14
  %v18 = vstv %s10
  %19 = vst [vmem:[#allocation3] sm:$0x1] %v18
  $region1: #{gru_with_attention_forward.1} parent=0
    #allocation4 [shape = 'u8[98304]{0}', space=vmem, size = 0x18000, scoped, tag = 'input window, operand 2, single buffered']
    #allocation5 [shape = 's32[1]{0}', space=sflag, size = 0x4, scoped, tag = 'scoped memory for gru_with_attention_forward.1']
    #allocation6 [shape = 'u8[98304]{0}', space=vmem, size = 0x18000, scoped, tag = 'input window, operand 5, single buffered']
    #allocation7 [shape = 's32[1]{0}', space=sflag, size = 0x4, scoped, tag = 'scoped memory for gru_with_attention_forward.1']
    #allocation8 [shape = 'u8[98304]{0}', space=vmem, size = 0x18000, scoped, tag = 'input window, operand 6, single buffered']
    #allocation9 [shape = 'u8[65536]{0}', space=vmem, size = 0x10000, scoped, tag = 'input window, operand 11, single buffered']
    #allocation10 [shape = 's32[1]{0}', space=sflag, size = 0x4, scoped, tag = 'scoped memory for gru_with_attention_forward.1']
    %20 = vsyncpa [#allocation5], 0
    %21 = vsyncpa [#allocation7], 0
    %22 = vsyncpa [#allocation10], 0
    // Predicated region
    $region2: #{gru_with_attention_forward.1} parent=1 // pred_check
      _
    $region3: #{gru_with_attention_forward.1} parent=1 // pred_check_branch
      %24 = sbr.rel (0) target = $region5
    $region4: #{gru_with_attention_forward.1} parent=1 // pred_region
      _
    $region5: #{gru_with_attention_forward.1} parent=1 // pred_fallthru
      _
    // Predicated region
    $region6: #{gru_with_attention_forward.1} parent=1 // pred_check
      _
    $region7: #{gru_with_attention_forward.1} parent=1 // pred_check_branch
      %26 = sbr.rel (0) target = $region9
    $region8: #{gru_with_attention_forward.1} parent=1 // pred_region
      _
    $region9: #{gru_with_attention_forward.1} parent=1 // pred_fallthru
      _
    // Predicated region
    $region10: #{gru_with_attention_forward.1} parent=1 // pred_check
      _
    $region11: #{gru_with_attention_forward.1} parent=1 // pred_check_branch
      %28 = sbr.rel (0) target = $region13
    $region12: #{gru_with_attention_forward.1} parent=1 // pred_region
      %s30 = ssub.s32 3072, 3072
      %31 = vsyncadd [#allocation5], %s30
      %s32 = sshll.u32 [#allocation4], 4
      %s33 = int_to_ptr.vmem [resolvable:$true] %s32
      %38 = dma.hbm_to_vmem [thread:$0]  %s2, 3072, %s33, [#allocation5], 192, 192, 12
    $region13: #{gru_with_attention_forward.1} parent=1 // pred_fallthru
      _
    // Predicated region
    $region14: #{gru_with_attention_forward.1} parent=1 // pred_check
      _
    $region15: #{gru_with_attention_forward.1} parent=1 // pred_check_branch
      %40 = sbr.rel (0) target = $region17
    $region16: #{gru_with_attention_forward.1} parent=1 // pred_region
      _
    $region17: #{gru_with_attention_forward.1} parent=1 // pred_fallthru
      _
    // Predicated region
    $region18: #{gru_with_attention_forward.1} parent=1 // pred_check
      _
    $region19: #{gru_with_attention_forward.1} parent=1 // pred_check_branch
      %42 = sbr.rel (0) target = $region21
    $region20: #{gru_with_attention_forward.1} parent=1 // pred_region
      _
    $region21: #{gru_with_attention_forward.1} parent=1 // pred_fallthru
      _
    // Predicated region
    $region22: #{gru_with_attention_forward.1} parent=1 // pred_check
      _
    $region23: #{gru_with_attention_forward.1} parent=1 // pred_check_branch
      %44 = sbr.rel (0) target = $region25
    $region24: #{gru_with_attention_forward.1} parent=1 // pred_region
      %s46 = ssub.s32 3072, 3072
      %47 = vsyncadd [#allocation7], %s46
      %s48 = sshll.u32 [#allocation6], 4
      %s49 = int_to_ptr.vmem [resolvable:$true] %s48
      %54 = dma.hbm_to_vmem [thread:$0]  %s5, 3072, %s49, [#allocation7], 192, 192, 12
    $region25: #{gru_with_attention_forward.1} parent=1 // pred_fallthru
      _
    // Predicated region
    $region26: #{gru_with_attention_forward.1} parent=1 // pred_check
      _
    $region27: #{gru_with_attention_forward.1} parent=1 // pred_check_branch
      %56 = sbr.rel (0) target = $region29
    $region28: #{gru_with_attention_forward.1} parent=1 // pred_region
      %s58 = ssub.s32 3072, 3072
      %59 = vsyncadd [#allocation7], %s58
      %s60 = sshll.u32 [#allocation8], 4
      %s61 = int_to_ptr.vmem [resolvable:$true] %s60
      %66 = dma.hbm_to_vmem [thread:$0]  %s6, 3072, %s61, [#allocation7], 192, 192, 12
    $region29: #{gru_with_attention_forward.1} parent=1 // pred_fallthru
      _
    // Predicated region
    $region30: #{gru_with_attention_forward.1} parent=1 // pred_check
      _
    $region31: #{gru_with_attention_forward.1} parent=1 // pred_check_branch
      %68 = sbr.rel (0) target = $region33
    $region32: #{gru_with_attention_forward.1} parent=1 // pred_region
      _
    $region33: #{gru_with_attention_forward.1} parent=1 // pred_fallthru
      _
    // Predicated region
    $region34: #{gru_with_attention_forward.1} parent=1 // pred_check
      _
    $region35: #{gru_with_attention_forward.1} parent=1 // pred_check_branch
      %70 = sbr.rel (0) target = $region37
    $region36: #{gru_with_attention_forward.1} parent=1 // pred_region
      _
    $region37: #{gru_with_attention_forward.1} parent=1 // pred_fallthru
      _
    // Predicated region
    $region38: #{gru_with_attention_forward.1} parent=1 // pred_check
      _
    $region39: #{gru_with_attention_forward.1} parent=1 // pred_check_branch
      %72 = sbr.rel (0) target = $region41
    $region40: #{gru_with_attention_forward.1} parent=1 // pred_region
      _
    $region41: #{gru_with_attention_forward.1} parent=1 // pred_fallthru
      _
    // Predicated region
    $region42: #{gru_with_attention_forward.1} parent=1 // pred_check
      _
    $region43: #{gru_with_attention_forward.1} parent=1 // pred_check_branch
      %74 = sbr.rel (0) target = $region45
    $region44: #{gru_with_attention_forward.1} parent=1 // pred_region
      _
    $region45: #{gru_with_attention_forward.1} parent=1 // pred_fallthru
      _
    // Predicated region
    $region46: #{gru_with_attention_forward.1} parent=1 // pred_check
      _
    $region47: #{gru_with_attention_forward.1} parent=1 // pred_check_branch
      %76 = sbr.rel (0) target = $region49
    $region48: #{gru_with_attention_forward.1} parent=1 // pred_region
      %s78 = ssub.s32 2048, 2048
      %79 = vsyncadd [#allocation10], %s78
      %s80 = sshll.u32 [#allocation9], 4
      %s81 = int_to_ptr.vmem [resolvable:$true] %s80
      %86 = dma.hbm_to_vmem [thread:$0]  %s11, 2048, %s81, [#allocation10], 128, 128, 8
    $region49: #{gru_with_attention_forward.1} parent=1 // pred_fallthru
      _
    // Predicated region
    $region50: #{gru_with_attention_forward.1} parent=1 // pred_check
      _
    $region51: #{gru_with_attention_forward.1} parent=1 // pred_check_branch
      %88 = sbr.rel (0) target = $region53
    $region52: #{gru_with_attention_forward.1} parent=1 // pred_region
      _
    $region53: #{gru_with_attention_forward.1} parent=1 // pred_fallthru
      _
    // Predicated region
    $region54: #{gru_with_attention_forward.1} parent=1 // pred_check
      _
    $region55: #{gru_with_attention_forward.1} parent=1 // pred_check_branch
      %90 = sbr.rel (0) target = $region57
    $region56: #{gru_with_attention_forward.1} parent=1 // pred_region
      %91 = dma.done [#allocation5], 3072
    $region57: #{gru_with_attention_forward.1} parent=1 // pred_fallthru
      _
    // Predicated region
    $region58: #{gru_with_attention_forward.1} parent=1 // pred_check
      _
    $region59: #{gru_with_attention_forward.1} parent=1 // pred_check_branch
      %93 = sbr.rel (0) target = $region61
    $region60: #{gru_with_attention_forward.1} parent=1 // pred_region
      %94 = dma.done [#allocation7], 3072
    $region61: #{gru_with_attention_forward.1} parent=1 // pred_fallthru
      _
    // Predicated region
    $region62: #{gru_with_attention_forward.1} parent=1 // pred_check
      _
    $region63: #{gru_with_attention_forward.1} parent=1 // pred_check_branch
      %96 = sbr.rel (0) target = $region65
    $region64: #{gru_with_attention_forward.1} parent=1 // pred_region
      %97 = dma.done [#allocation7], 3072
    $region65: #{gru_with_attention_forward.1} parent=1 // pred_fallthru
      _
    // Predicated region
    $region66: #{gru_with_attention_forward.1} parent=1 // pred_check
      _
    $region67: #{gru_with_attention_forward.1} parent=1 // pred_check_branch
      %99 = sbr.rel (0) target = $region69
    $region68: #{gru_with_attention_forward.1} parent=1 // pred_region
      %100 = dma.done [#allocation10], 2048
    $region69: #{gru_with_attention_forward.1} parent=1 // pred_fallthru
      _
    %v102 = vld [vmem:[%s0] sm:$0xff]
    %v103 = vld [vmem:[%s0 + $0x8] sm:$0xff]
    %v104 = vld [vmem:[%s0 + $0x10] sm:$0xff]
    %v105 = vld [vmem:[%s0 + $0x18] sm:$0xff]
    %v106 = vld [vmem:[%s0 + $0x20] sm:$0xff]
    %v107 = vld [vmem:[%s0 + $0x28] sm:$0xff]
    %v108 = vld [vmem:[%s0 + $0x30] sm:$0xff]
    %v109 = vld [vmem:[%s0 + $0x38] sm:$0xff]
    %v110 = vpack.c.bf16 %v103, %v102
    %v111 = vpack.c.bf16 %v105, %v104
    %v112 = vpack.c.bf16 %v107, %v106
    %v113 = vpack.c.bf16 %v109, %v108
    %v114 = vld [vmem:[%s1] sm:$0xff]
    %v115 = vld [vmem:[%s1 + $0x8] sm:$0xf]
    %v116 = vld [vmem:[%s1 + $0xc] sm:$0xff]
    %v117 = vld [vmem:[%s1 + $0x14] sm:$0xf]
    %v118 = vld [vmem:[%s3] sm:$0x7]
    %v120 = vlaneseq
    %v121 = vshrl.u32 %v120, 7
    %v122 = vsub.s32 0, %v121
    %v123 = vrot.slane %v118, %v122
    %v124 = vlaneseq
    %v125 = vshrl.u32 %v124, 7
    %v126 = vsub.s32 1, %v125
    %v127 = vrot.slane %v118, %v126
    %v128 = vlaneseq
    %v129 = vshrl.u32 %v128, 7
    %v130 = vsub.s32 2, %v129
    %v131 = vrot.slane %v118, %v130
    %v139 = vunpack.c.l.b16 %v114
    %v140 = vunpack.c.h.b16 %v114
    %v141 = vunpack.c.l.b16 %v115
    %v142 = vunpack.c.l.b16 %v116
    %v143 = vunpack.c.h.b16 %v116
    %v144 = vunpack.c.l.b16 %v117
    %v145 = vpack.c.b16 %v142, %v139
    %v146 = vpack.c.b16 %v143, %v140
    %v147 = vpack.c.b16 %v144, %v141
    %vm151 = vcmask 130048
    %v153 = vsel %vm151, %v110, 0
    %v156 = vsel %vm151, %v111, 0
    %v159 = vsel %vm151, %v112, 0
    %v162 = vsel %vm151, %v113, 0
    %164 = vmatprep.subr.bf16.mxu0 0
    %165 = vmatpush1.bf16.msra.mxu0 0
    %166 = vmatprep.subr.bf16.mxu0 0
    %167 = vmatpush1.bf16.msra.mxu0 0
    %168 = vmatprep.subr.bf16.mxu0 0
    %169 = vmatpush1.bf16.msra.mxu0 0
    %170 = vmatprep.subr.bf16.mxu0 0
    %171 = vmatpush1.bf16.msra.mxu0 0
    %172 = vmatprep.subr.bf16.mxu0 0
    %173 = vmatpush1.bf16.msra.mxu0 0
    %174 = vmatprep.subr.bf16.mxu0 0
    %175 = vmatpush1.bf16.msra.mxu0 0
    %176 = vmatprep.subr.bf16.mxu0 0
    %177 = vmatpush1.bf16.msra.mxu0 0
    %178 = vmatprep.subr.bf16.mxu0 %v146
    %179 = vmatpush1.bf16.msra.mxu0 %v145
    %180 = vmatprep.subr.bf16.mxu0 0
    %181 = vmatpush2.bf16.msra.mxu0 0
    %182 = vmatprep.subr.bf16.mxu0 0
    %183 = vmatpush2.bf16.msra.mxu0 0
    %184 = vmatprep.subr.bf16.mxu0 0
    %185 = vmatpush2.bf16.msra.mxu0 0
    %186 = vmatprep.subr.bf16.mxu0 0
    %187 = vmatpush2.bf16.msra.mxu0 0
    %188 = vmatprep.subr.bf16.mxu0 0
    %189 = vmatpush2.bf16.msra.mxu0 0
    %190 = vmatprep.subr.bf16.mxu0 0
    %191 = vmatpush2.bf16.msra.mxu0 0
    %192 = vmatprep.subr.bf16.mxu0 0
    %193 = vmatpush2.bf16.msra.mxu0 0
    %194 = vmatprep.subr.bf16.mxu0 0
    %195 = vmatpush2.bf16.msra.mxu0 0
    %196 = vmatprep.mubr.bf16.mxu0 0
    %197 = vmatmul.mubr.bf16.gmra.mxu0 %v153
    %v198 = vpop.f32.mrf.mxu0
    %v199 = vadd.f32 %v123, %v198
    %v200 = vpop.f32.mrf.mxu0
    %v201 = vadd.f32 %v127, %v200
    %v202 = vpop.f32.mrf.mxu0
    %v203 = vadd.f32 %v123, %v202
    %v204 = vpop.f32.mrf.mxu0
    %v205 = vadd.f32 %v127, %v204
    %206 = vmatprep.mubr.bf16.mxu0 0
    %207 = vmatmul.mubr.bf16.gmra.mxu0 %v156
    %v208 = vpop.f32.mrf.mxu0
    %v209 = vadd.f32 %v123, %v208
    %v210 = vpop.f32.mrf.mxu0
    %v211 = vadd.f32 %v127, %v210
    %v212 = vpop.f32.mrf.mxu0
    %v213 = vadd.f32 %v123, %v212
    %v214 = vpop.f32.mrf.mxu0
    %v215 = vadd.f32 %v127, %v214
    %216 = vmatprep.mubr.bf16.mxu0 0
    %217 = vmatmul.mubr.bf16.gmra.mxu0 %v159
    %v218 = vpop.f32.mrf.mxu0
    %v219 = vadd.f32 %v123, %v218
    %v220 = vpop.f32.mrf.mxu0
    %v221 = vadd.f32 %v127, %v220
    %v222 = vpop.f32.mrf.mxu0
    %v223 = vadd.f32 %v123, %v222
    %v224 = vpop.f32.mrf.mxu0
    %v225 = vadd.f32 %v127, %v224
    %226 = vmatprep.mubr.bf16.mxu0 0
    %227 = vmatmul.mubr.bf16.gmra.mxu0 %v162
    %v228 = vpop.f32.mrf.mxu0
    %v229 = vadd.f32 %v123, %v228
    %v230 = vpop.f32.mrf.mxu0
    %v231 = vadd.f32 %v127, %v230
    %v232 = vpop.f32.mrf.mxu0
    %v233 = vadd.f32 %v123, %v232
    %v234 = vpop.f32.mrf.mxu0
    %v235 = vadd.f32 %v127, %v234
    %236 = vdwg.mxu0
    %237 = vmatprep.subr.bf16.mxu0 0
    %238 = vmatpush1.bf16.msra.mxu0 0
    %239 = vmatprep.subr.bf16.mxu0 0
    %240 = vmatpush1.bf16.msra.mxu0 0
    %241 = vmatprep.subr.bf16.mxu0 0
    %242 = vmatpush1.bf16.msra.mxu0 0
    %243 = vmatprep.subr.bf16.mxu0 0
    %244 = vmatpush1.bf16.msra.mxu0 0
    %245 = vmatprep.subr.bf16.mxu0 0
    %246 = vmatpush1.bf16.msra.mxu0 0
    %247 = vmatprep.subr.bf16.mxu0 0
    %248 = vmatpush1.bf16.msra.mxu0 0
    %249 = vmatprep.subr.bf16.mxu0 0
    %250 = vmatpush1.bf16.msra.mxu0 0
    %251 = vmatprep.subr.bf16.mxu0 0
    %252 = vmatpush1.bf16.msra.mxu0 %v147
    %253 = vmatprep.subr.bf16.mxu0 0
    %254 = vmatpush2.bf16.msra.mxu0 0
    %255 = vmatprep.subr.bf16.mxu0 0
    %256 = vmatpush2.bf16.msra.mxu0 0
    %257 = vmatprep.subr.bf16.mxu0 0
    %258 = vmatpush2.bf16.msra.mxu0 0
    %259 = vmatprep.subr.bf16.mxu0 0
    %260 = vmatpush2.bf16.msra.mxu0 0
    %261 = vmatprep.subr.bf16.mxu0 0
    %262 = vmatpush2.bf16.msra.mxu0 0
    %263 = vmatprep.subr.bf16.mxu0 0
    %264 = vmatpush2.bf16.msra.mxu0 0
    %265 = vmatprep.subr.bf16.mxu0 0
    %266 = vmatpush2.bf16.msra.mxu0 0
    %267 = vmatprep.subr.bf16.mxu0 0
    %268 = vmatpush2.bf16.msra.mxu0 0
    %269 = vmatprep.mubr.bf16.mxu0 0
    %270 = vmatmul.mubr.bf16.gmra.mxu0 %v153
    %v271 = vpop.f32.mrf.mxu0
    %v272 = vadd.f32 %v131, %v271
    %v273 = vpop.f32.mrf.mxu0
    %v274 = vpop.f32.mrf.mxu0
    %v275 = vadd.f32 %v131, %v274
    %v276 = vpop.f32.mrf.mxu0
    %277 = vmatprep.mubr.bf16.mxu0 0
    %278 = vmatmul.mubr.bf16.gmra.mxu0 %v156
    %v279 = vpop.f32.mrf.mxu0
    %v280 = vadd.f32 %v131, %v279
    %v281 = vpop.f32.mrf.mxu0
    %v282 = vpop.f32.mrf.mxu0
    %v283 = vadd.f32 %v131, %v282
    %v284 = vpop.f32.mrf.mxu0
    %285 = vmatprep.mubr.bf16.mxu0 0
    %286 = vmatmul.mubr.bf16.gmra.mxu0 %v159
    %v287 = vpop.f32.mrf.mxu0
    %v288 = vadd.f32 %v131, %v287
    %v289 = vpop.f32.mrf.mxu0
    %v290 = vpop.f32.mrf.mxu0
    %v291 = vadd.f32 %v131, %v290
    %v292 = vpop.f32.mrf.mxu0
    %293 = vmatprep.mubr.bf16.mxu0 0
    %294 = vmatmul.mubr.bf16.gmra.mxu0 %v162
    %v295 = vpop.f32.mrf.mxu0
    %v296 = vadd.f32 %v131, %v295
    %v297 = vpop.f32.mrf.mxu0
    %v298 = vpop.f32.mrf.mxu0
    %v299 = vadd.f32 %v131, %v298
    %v300 = vpop.f32.mrf.mxu0
    %301 = vdwg.mxu0
    %302 = vst [vmem:[#allocation2] sm:$0xff] %v199
    %303 = vst [vmem:[#allocation2 + $0x8] sm:$0xff] %v201
    %304 = vst [vmem:[#allocation2 + $0x10] sm:$0xff] %v272
    %305 = vst [vmem:[#allocation2 + $0x18] sm:$0xff] %v203
    %306 = vst [vmem:[#allocation2 + $0x20] sm:$0xff] %v205
    %307 = vst [vmem:[#allocation2 + $0x28] sm:$0xff] %v275
    %308 = vst [vmem:[#allocation2 + $0x30] sm:$0xff] %v209
    %309 = vst [vmem:[#allocation2 + $0x38] sm:$0xff] %v211
    %310 = vst [vmem:[#allocation2 + $0x40] sm:$0xff] %v280
    %311 = vst [vmem:[#allocation2 + $0x48] sm:$0xff] %v213
    %312 = vst [vmem:[#allocation2 + $0x50] sm:$0xff] %v215
    %313 = vst [vmem:[#allocation2 + $0x58] sm:$0xff] %v283
    %314 = vst [vmem:[#allocation2 + $0x60] sm:$0xff] %v219
    %315 = vst [vmem:[#allocation2 + $0x68] sm:$0xff] %v221
    %316 = vst [vmem:[#allocation2 + $0x70] sm:$0xff] %v288
    %317 = vst [vmem:[#allocation2 + $0x78] sm:$0xff] %v223
    %318 = vst [vmem:[#allocation2 + $0x80] sm:$0xff] %v225
    %319 = vst [vmem:[#allocation2 + $0x88] sm:$0xff] %v291
    %320 = vst [vmem:[#allocation2 + $0x90] sm:$0xff] %v229
    %321 = vst [vmem:[#allocation2 + $0x98] sm:$0xff] %v231
    %322 = vst [vmem:[#allocation2 + $0xa0] sm:$0xff] %v296
    %323 = vst [vmem:[#allocation2 + $0xa8] sm:$0xff] %v233
    %324 = vst [vmem:[#allocation2 + $0xb0] sm:$0xff] %v235
    %325 = vst [vmem:[#allocation2 + $0xb8] sm:$0xff] %v299
    %v326 = vld [vmem:[%s7] sm:$0x7]
    %v328 = vlaneseq
    %v329 = vshrl.u32 %v328, 7
    %v330 = vsub.s32 0, %v329
    %v331 = vrot.slane %v326, %v330
    %v332 = vlaneseq
    %v333 = vshrl.u32 %v332, 7
    %v334 = vsub.s32 1, %v333
    %v335 = vrot.slane %v326, %v334
    %v336 = vlaneseq
    %v337 = vshrl.u32 %v336, 7
    %v338 = vsub.s32 2, %v337
    %v339 = vrot.slane %v326, %v338
    %v343 = vld [vmem:[%s4] sm:$0x1]
    %v345 = vlaneseq
    %v346 = vshrl.u32 %v345, 7
    %v347 = vsub.s32 0, %v346
    %v348 = vrot.slane %v343, %v347
    %v350 = vld [vmem:[%s8] sm:$0x1]
    %v352 = vlaneseq
    %v353 = vshrl.u32 %v352, 7
    %v354 = vsub.s32 0, %v353
    %v355 = vrot.slane %v350, %v354
    %v357 = vld [vmem:[%s9] sm:$0x1]
    %v358 = vld [vmem:[#allocation3] sm:$0x1]
    %s359 = smul.u32 0, 3
    %s360 = smul.addr %s359, 8
    %s361 = scalar_lea.vmem [#allocation2], %s360
    %v362 = vld [vmem:[%s361] sm:$0xff]
    %v363 = vld [vmem:[%s361 + $0x8] sm:$0xff]
    %v364 = vld [vmem:[%s361 + $0x10] sm:$0xff]
    %v365 = vld [vmem:[#allocation4] sm:$0xff]
    %v366 = vld [vmem:[#allocation4 + $0x8] sm:$0xf]
    %v367 = vld [vmem:[#allocation4 + $0xc] sm:$0xff]
    %v368 = vld [vmem:[#allocation4 + $0x14] sm:$0xf]
    %v369 = vld [vmem:[#allocation4 + $0x18] sm:$0xff]
    %v370 = vld [vmem:[#allocation4 + $0x20] sm:$0xf]
    %v371 = vld [vmem:[#allocation4 + $0x24] sm:$0xff]
    %v372 = vld [vmem:[#allocation4 + $0x2c] sm:$0xf]
    %v373 = vld [vmem:[#allocation4 + $0x30] sm:$0xff]
    %v374 = vld [vmem:[#allocation4 + $0x38] sm:$0xf]
    %v375 = vld [vmem:[#allocation4 + $0x3c] sm:$0xff]
    %v376 = vld [vmem:[#allocation4 + $0x44] sm:$0xf]
    %v377 = vld [vmem:[#allocation4 + $0x48] sm:$0xff]
    %v378 = vld [vmem:[#allocation4 + $0x50] sm:$0xf]
    %v379 = vld [vmem:[#allocation4 + $0x54] sm:$0xff]
    %v380 = vld [vmem:[#allocation4 + $0x5c] sm:$0xf]
    %v381 = vld [vmem:[#allocation4 + $0x60] sm:$0xff]
    %v382 = vld [vmem:[#allocation4 + $0x68] sm:$0xf]
    %v383 = vld [vmem:[#allocation4 + $0x6c] sm:$0xff]
    %v384 = vld [vmem:[#allocation4 + $0x74] sm:$0xf]
    %v385 = vld [vmem:[#allocation4 + $0x78] sm:$0xff]
    %v386 = vld [vmem:[#allocation4 + $0x80] sm:$0xf]
    %v387 = vld [vmem:[#allocation4 + $0x84] sm:$0xff]
    %v388 = vld [vmem:[#allocation4 + $0x8c] sm:$0xf]
    %v389 = vld [vmem:[#allocation4 + $0x90] sm:$0xff]
    %v390 = vld [vmem:[#allocation4 + $0x98] sm:$0xf]
    %v391 = vld [vmem:[#allocation4 + $0x9c] sm:$0xff]
    %v392 = vld [vmem:[#allocation4 + $0xa4] sm:$0xf]
    %v393 = vld [vmem:[#allocation4 + $0xa8] sm:$0xff]
    %v394 = vld [vmem:[#allocation4 + $0xb0] sm:$0xf]
    %v395 = vld [vmem:[#allocation4 + $0xb4] sm:$0xff]
    %v396 = vld [vmem:[#allocation4 + $0xbc] sm:$0xf]
    %v429 = vunpack.c.l.b16 %v365
    %v430 = vunpack.c.h.b16 %v365
    %v431 = vunpack.c.l.b16 %v366
    %v432 = vunpack.c.l.b16 %v367
    %v433 = vunpack.c.h.b16 %v367
    %v434 = vunpack.c.l.b16 %v368
    %v435 = vunpack.c.l.b16 %v369
    %v436 = vunpack.c.h.b16 %v369
    %v437 = vunpack.c.l.b16 %v370
    %v438 = vunpack.c.l.b16 %v371
    %v439 = vunpack.c.h.b16 %v371
    %v440 = vunpack.c.l.b16 %v372
    %v441 = vunpack.c.l.b16 %v373
    %v442 = vunpack.c.h.b16 %v373
    %v443 = vunpack.c.l.b16 %v374
    %v444 = vunpack.c.l.b16 %v375
    %v445 = vunpack.c.h.b16 %v375
    %v446 = vunpack.c.l.b16 %v376
    %v447 = vunpack.c.l.b16 %v377
    %v448 = vunpack.c.h.b16 %v377
    %v449 = vunpack.c.l.b16 %v378
    %v450 = vunpack.c.l.b16 %v379
    %v451 = vunpack.c.h.b16 %v379
    %v452 = vunpack.c.l.b16 %v380
    %v453 = vunpack.c.l.b16 %v381
    %v454 = vunpack.c.h.b16 %v381
    %v455 = vunpack.c.l.b16 %v382
    %v456 = vunpack.c.l.b16 %v383
    %v457 = vunpack.c.h.b16 %v383
    %v458 = vunpack.c.l.b16 %v384
    %v459 = vunpack.c.l.b16 %v385
    %v460 = vunpack.c.h.b16 %v385
    %v461 = vunpack.c.l.b16 %v386
    %v462 = vunpack.c.l.b16 %v387
    %v463 = vunpack.c.h.b16 %v387
    %v464 = vunpack.c.l.b16 %v388
    %v465 = vunpack.c.l.b16 %v389
    %v466 = vunpack.c.h.b16 %v389
    %v467 = vunpack.c.l.b16 %v390
    %v468 = vunpack.c.l.b16 %v391
    %v469 = vunpack.c.h.b16 %v391
    %v470 = vunpack.c.l.b16 %v392
    %v471 = vunpack.c.l.b16 %v393
    %v472 = vunpack.c.h.b16 %v393
    %v473 = vunpack.c.l.b16 %v394
    %v474 = vunpack.c.l.b16 %v395
    %v475 = vunpack.c.h.b16 %v395
    %v476 = vunpack.c.l.b16 %v396
    %v477 = vpack.c.b16 %v432, %v429
    %v478 = vpack.c.b16 %v433, %v430
    %v479 = vpack.c.b16 %v434, %v431
    %v480 = vpack.c.b16 %v438, %v435
    %v481 = vpack.c.b16 %v439, %v436
    %v482 = vpack.c.b16 %v440, %v437
    %v483 = vpack.c.b16 %v444, %v441
    %v484 = vpack.c.b16 %v445, %v442
    %v485 = vpack.c.b16 %v446, %v443
    %v486 = vpack.c.b16 %v450, %v447
    %v487 = vpack.c.b16 %v451, %v448
    %v488 = vpack.c.b16 %v452, %v449
    %v489 = vpack.c.b16 %v456, %v453
    %v490 = vpack.c.b16 %v457, %v454
    %v491 = vpack.c.b16 %v458, %v455
    %v492 = vpack.c.b16 %v462, %v459
    %v493 = vpack.c.b16 %v463, %v460
    %v494 = vpack.c.b16 %v464, %v461
    %v495 = vpack.c.b16 %v468, %v465
    %v496 = vpack.c.b16 %v469, %v466
    %v497 = vpack.c.b16 %v470, %v467
    %v498 = vpack.c.b16 %v474, %v471
    %v499 = vpack.c.b16 %v475, %v472
    %v500 = vpack.c.b16 %v476, %v473
    %525 = vmatprep.subr.bf16.mxu0 %v499
    %526 = vmatpush1.bf16.msra.mxu0 %v498
    %527 = vmatprep.subr.bf16.mxu0 %v496
    %528 = vmatpush1.bf16.msra.mxu0 %v495
    %529 = vmatprep.subr.bf16.mxu0 %v493
    %530 = vmatpush1.bf16.msra.mxu0 %v492
    %531 = vmatprep.subr.bf16.mxu0 %v490
    %532 = vmatpush1.bf16.msra.mxu0 %v489
    %533 = vmatprep.subr.bf16.mxu0 %v487
    %534 = vmatpush1.bf16.msra.mxu0 %v486
    %535 = vmatprep.subr.bf16.mxu0 %v484
    %536 = vmatpush1.bf16.msra.mxu0 %v483
    %537 = vmatprep.subr.bf16.mxu0 %v481
    %538 = vmatpush1.bf16.msra.mxu0 %v480
    %539 = vmatprep.subr.bf16.mxu0 %v478
    %540 = vmatpush1.bf16.msra.mxu0 %v477
    %541 = vmatprep.subr.bf16.mxu0 0
    %542 = vmatpush2.bf16.msra.mxu0 0
    %543 = vmatprep.subr.bf16.mxu0 0
    %544 = vmatpush2.bf16.msra.mxu0 0
    %545 = vmatprep.subr.bf16.mxu0 0
    %546 = vmatpush2.bf16.msra.mxu0 0
    %547 = vmatprep.subr.bf16.mxu0 0
    %548 = vmatpush2.bf16.msra.mxu0 0
    %549 = vmatprep.subr.bf16.mxu0 0
    %550 = vmatpush2.bf16.msra.mxu0 0
    %551 = vmatprep.subr.bf16.mxu0 0
    %552 = vmatpush2.bf16.msra.mxu0 0
    %553 = vmatprep.subr.bf16.mxu0 0
    %554 = vmatpush2.bf16.msra.mxu0 0
    %555 = vmatprep.subr.bf16.mxu0 0
    %556 = vmatpush2.bf16.msra.mxu0 0
    %557 = vmatprep.mubr.bf16.mxu0 0
    %558 = vmatmul.mubr.bf16.gmra.mxu0 0
    %v559 = vpop.f32.mrf.mxu0
    %v560 = vadd.f32 0.0, %v559
    %v561 = vpop.f32.mrf.mxu0
    %v562 = vadd.f32 0.0, %v561
    %v563 = vpop.f32.mrf.mxu0
    %v564 = vpop.f32.mrf.mxu0
    %565 = vdwg.mxu0
    %566 = vmatprep.subr.bf16.mxu0 0
    %567 = vmatpush1.bf16.msra.mxu0 %v500
    %568 = vmatprep.subr.bf16.mxu0 0
    %569 = vmatpush1.bf16.msra.mxu0 %v497
    %570 = vmatprep.subr.bf16.mxu0 0
    %571 = vmatpush1.bf16.msra.mxu0 %v494
    %572 = vmatprep.subr.bf16.mxu0 0
    %573 = vmatpush1.bf16.msra.mxu0 %v491
    %574 = vmatprep.subr.bf16.mxu0 0
    %575 = vmatpush1.bf16.msra.mxu0 %v488
    %576 = vmatprep.subr.bf16.mxu0 0
    %577 = vmatpush1.bf16.msra.mxu0 %v485
    %578 = vmatprep.subr.bf16.mxu0 0
    %579 = vmatpush1.bf16.msra.mxu0 %v482
    %580 = vmatprep.subr.bf16.mxu0 0
    %581 = vmatpush1.bf16.msra.mxu0 %v479
    %582 = vmatprep.subr.bf16.mxu0 0
    %583 = vmatpush2.bf16.msra.mxu0 0
    %584 = vmatprep.subr.bf16.mxu0 0
    %585 = vmatpush2.bf16.msra.mxu0 0
    %586 = vmatprep.subr.bf16.mxu0 0
    %587 = vmatpush2.bf16.msra.mxu0 0
    %588 = vmatprep.subr.bf16.mxu0 0
    %589 = vmatpush2.bf16.msra.mxu0 0
    %590 = vmatprep.subr.bf16.mxu0 0
    %591 = vmatpush2.bf16.msra.mxu0 0
    %592 = vmatprep.subr.bf16.mxu0 0
    %593 = vmatpush2.bf16.msra.mxu0 0
    %594 = vmatprep.subr.bf16.mxu0 0
    %595 = vmatpush2.bf16.msra.mxu0 0
    %596 = vmatprep.subr.bf16.mxu0 0
    %597 = vmatpush2.bf16.msra.mxu0 0
    %598 = vmatprep.mubr.bf16.mxu0 0
    %599 = vmatmul.mubr.bf16.gmra.mxu0 0
    %v600 = vpop.f32.mrf.mxu0
    %v601 = vadd.f32 0.0, %v600
    %v602 = vpop.f32.mrf.mxu0
    %v603 = vpop.f32.mrf.mxu0
    %v604 = vpop.f32.mrf.mxu0
    %605 = vdwg.mxu0
    %v606 = vadd.f32 %v362, %v560
    %v607 = vxor.u32 %v606, 2147483648
    %v608 = vmul.f32 %v607, 1.442695
    %v609 = vpow.pop %v608
    %v610 = vadd.f32 %v609, 1.0
    %v611 = vrcp.pop %v610
    %v612 = vmul.f32 1.0, %v611
    %v613 = vadd.f32 %v363, %v562
    %v614 = vxor.u32 %v613, 2147483648
    %v615 = vmul.f32 %v614, 1.442695
    %v616 = vpow.pop %v615
    %v617 = vadd.f32 %v616, 1.0
    %v618 = vrcp.pop %v617
    %v619 = vmul.f32 1.0, %v618
    %v620 = vadd.f32 %v601, %v348
    %v621 = vmul.f32 %v612, %v620
    %v622 = vadd.f32 %v364, %v621
    %v623 = vtanh.pop %v622
    %v624 = vsub.f32 1.0, %v619
    %v625 = vmul.f32 %v624, %v623
    %v626 = vmul.f32 %v619, 0.0
    %v627 = vadd.f32 %v625, %v626
    %v628 = vpack.c.bf16 %v627, %v627
    %v629 = vld [vmem:[#allocation6] sm:$0xff]
    %v630 = vld [vmem:[#allocation6 + $0x8] sm:$0xf]
    %v631 = vld [vmem:[#allocation6 + $0xc] sm:$0xff]
    %v632 = vld [vmem:[#allocation6 + $0x14] sm:$0xf]
    %v633 = vld [vmem:[#allocation6 + $0x18] sm:$0xff]
    %v634 = vld [vmem:[#allocation6 + $0x20] sm:$0xf]
    %v635 = vld [vmem:[#allocation6 + $0x24] sm:$0xff]
    %v636 = vld [vmem:[#allocation6 + $0x2c] sm:$0xf]
    %v637 = vld [vmem:[#allocation6 + $0x30] sm:$0xff]
    %v638 = vld [vmem:[#allocation6 + $0x38] sm:$0xf]
    %v639 = vld [vmem:[#allocation6 + $0x3c] sm:$0xff]
    %v640 = vld [vmem:[#allocation6 + $0x44] sm:$0xf]
    %v641 = vld [vmem:[#allocation6 + $0x48] sm:$0xff]
    %v642 = vld [vmem:[#allocation6 + $0x50] sm:$0xf]
    %v643 = vld [vmem:[#allocation6 + $0x54] sm:$0xff]
    %v644 = vld [vmem:[#allocation6 + $0x5c] sm:$0xf]
    %v645 = vld [vmem:[#allocation6 + $0x60] sm:$0xff]
    %v646 = vld [vmem:[#allocation6 + $0x68] sm:$0xf]
    %v647 = vld [vmem:[#allocation6 + $0x6c] sm:$0xff]
    %v648 = vld [vmem:[#allocation6 + $0x74] sm:$0xf]
    %v649 = vld [vmem:[#allocation6 + $0x78] sm:$0xff]
    %v650 = vld [vmem:[#allocation6 + $0x80] sm:$0xf]
    %v651 = vld [vmem:[#allocation6 + $0x84] sm:$0xff]
    %v652 = vld [vmem:[#allocation6 + $0x8c] sm:$0xf]
    %v653 = vld [vmem:[#allocation6 + $0x90] sm:$0xff]
    %v654 = vld [vmem:[#allocation6 + $0x98] sm:$0xf]
    %v655 = vld [vmem:[#allocation6 + $0x9c] sm:$0xff]
    %v656 = vld [vmem:[#allocation6 + $0xa4] sm:$0xf]
    %v657 = vld [vmem:[#allocation6 + $0xa8] sm:$0xff]
    %v658 = vld [vmem:[#allocation6 + $0xb0] sm:$0xf]
    %v659 = vld [vmem:[#allocation6 + $0xb4] sm:$0xff]
    %v660 = vld [vmem:[#allocation6 + $0xbc] sm:$0xf]
    %v693 = vunpack.c.l.b16 %v629
    %v694 = vunpack.c.h.b16 %v629
    %v695 = vunpack.c.l.b16 %v630
    %v696 = vunpack.c.l.b16 %v631
    %v697 = vunpack.c.h.b16 %v631
    %v698 = vunpack.c.l.b16 %v632
    %v699 = vunpack.c.l.b16 %v633
    %v700 = vunpack.c.h.b16 %v633
    %v701 = vunpack.c.l.b16 %v634
    %v702 = vunpack.c.l.b16 %v635
    %v703 = vunpack.c.h.b16 %v635
    %v704 = vunpack.c.l.b16 %v636
    %v705 = vunpack.c.l.b16 %v637
    %v706 = vunpack.c.h.b16 %v637
    %v707 = vunpack.c.l.b16 %v638
    %v708 = vunpack.c.l.b16 %v639
    %v709 = vunpack.c.h.b16 %v639
    %v710 = vunpack.c.l.b16 %v640
    %v711 = vunpack.c.l.b16 %v641
    %v712 = vunpack.c.h.b16 %v641
    %v713 = vunpack.c.l.b16 %v642
    %v714 = vunpack.c.l.b16 %v643
    %v715 = vunpack.c.h.b16 %v643
    %v716 = vunpack.c.l.b16 %v644
    %v717 = vunpack.c.l.b16 %v645
    %v718 = vunpack.c.h.b16 %v645
    %v719 = vunpack.c.l.b16 %v646
    %v720 = vunpack.c.l.b16 %v647
    %v721 = vunpack.c.h.b16 %v647
    %v722 = vunpack.c.l.b16 %v648
    %v723 = vunpack.c.l.b16 %v649
    %v724 = vunpack.c.h.b16 %v649
    %v725 = vunpack.c.l.b16 %v650
    %v726 = vunpack.c.l.b16 %v651
    %v727 = vunpack.c.h.b16 %v651
    %v728 = vunpack.c.l.b16 %v652
    %v729 = vunpack.c.l.b16 %v653
    %v730 = vunpack.c.h.b16 %v653
    %v731 = vunpack.c.l.b16 %v654
    %v732 = vunpack.c.l.b16 %v655
    %v733 = vunpack.c.h.b16 %v655
    %v734 = vunpack.c.l.b16 %v656
    %v735 = vunpack.c.l.b16 %v657
    %v736 = vunpack.c.h.b16 %v657
    %v737 = vunpack.c.l.b16 %v658
    %v738 = vunpack.c.l.b16 %v659
    %v739 = vunpack.c.h.b16 %v659
    %v740 = vunpack.c.l.b16 %v660
    %v741 = vpack.c.b16 %v696, %v693
    %v742 = vpack.c.b16 %v697, %v694
    %v743 = vpack.c.b16 %v698, %v695
    %v744 = vpack.c.b16 %v702, %v699
    %v745 = vpack.c.b16 %v703, %v700
    %v746 = vpack.c.b16 %v704, %v701
    %v747 = vpack.c.b16 %v708, %v705
    %v748 = vpack.c.b16 %v709, %v706
    %v749 = vpack.c.b16 %v710, %v707
    %v750 = vpack.c.b16 %v714, %v711
    %v751 = vpack.c.b16 %v715, %v712
    %v752 = vpack.c.b16 %v716, %v713
    %v753 = vpack.c.b16 %v720, %v717
    %v754 = vpack.c.b16 %v721, %v718
    %v755 = vpack.c.b16 %v722, %v719
    %v756 = vpack.c.b16 %v726, %v723
    %v757 = vpack.c.b16 %v727, %v724
    %v758 = vpack.c.b16 %v728, %v725
    %v759 = vpack.c.b16 %v732, %v729
    %v760 = vpack.c.b16 %v733, %v730
    %v761 = vpack.c.b16 %v734, %v731
    %v762 = vpack.c.b16 %v738, %v735
    %v763 = vpack.c.b16 %v739, %v736
    %v764 = vpack.c.b16 %v740, %v737
    %789 = vmatprep.subr.bf16.mxu0 %v763
    %790 = vmatpush1.bf16.msra.mxu0 %v762
    %791 = vmatprep.subr.bf16.mxu0 %v760
    %792 = vmatpush1.bf16.msra.mxu0 %v759
    %793 = vmatprep.subr.bf16.mxu0 %v757
    %794 = vmatpush1.bf16.msra.mxu0 %v756
    %795 = vmatprep.subr.bf16.mxu0 %v754
    %796 = vmatpush1.bf16.msra.mxu0 %v753
    %797 = vmatprep.subr.bf16.mxu0 %v751
    %798 = vmatpush1.bf16.msra.mxu0 %v750
    %799 = vmatprep.subr.bf16.mxu0 %v748
    %800 = vmatpush1.bf16.msra.mxu0 %v747
    %801 = vmatprep.subr.bf16.mxu0 %v745
    %802 = vmatpush1.bf16.msra.mxu0 %v744
    %803 = vmatprep.subr.bf16.mxu0 %v742
    %804 = vmatpush1.bf16.msra.mxu0 %v741
    %805 = vmatprep.subr.bf16.mxu0 0
    %806 = vmatpush2.bf16.msra.mxu0 0
    %807 = vmatprep.subr.bf16.mxu0 0
    %808 = vmatpush2.bf16.msra.mxu0 0
    %809 = vmatprep.subr.bf16.mxu0 0
    %810 = vmatpush2.bf16.msra.mxu0 0
    %811 = vmatprep.subr.bf16.mxu0 0
    %812 = vmatpush2.bf16.msra.mxu0 0
    %813 = vmatprep.subr.bf16.mxu0 0
    %814 = vmatpush2.bf16.msra.mxu0 0
    %815 = vmatprep.subr.bf16.mxu0 0
    %816 = vmatpush2.bf16.msra.mxu0 0
    %817 = vmatprep.subr.bf16.mxu0 0
    %818 = vmatpush2.bf16.msra.mxu0 0
    %819 = vmatprep.subr.bf16.mxu0 0
    %820 = vmatpush2.bf16.msra.mxu0 0
    %821 = vmatprep.mubr.bf16.mxu0 0
    %822 = vmatmul.mubr.bf16.gmra.mxu0 %v628
    %v823 = vpop.f32.mrf.mxu0
    %v824 = vadd.f32 %v331, %v823
    %v825 = vpop.f32.mrf.mxu0
    %v826 = vadd.f32 %v335, %v825
    %v827 = vpop.f32.mrf.mxu0
    %v828 = vpop.f32.mrf.mxu0
    %829 = vdwg.mxu0
    %830 = vmatprep.subr.bf16.mxu0 0
    %831 = vmatpush1.bf16.msra.mxu0 %v764
    %832 = vmatprep.subr.bf16.mxu0 0
    %833 = vmatpush1.bf16.msra.mxu0 %v761
    %834 = vmatprep.subr.bf16.mxu0 0
    %835 = vmatpush1.bf16.msra.mxu0 %v758
    %836 = vmatprep.subr.bf16.mxu0 0
    %837 = vmatpush1.bf16.msra.mxu0 %v755
    %838 = vmatprep.subr.bf16.mxu0 0
    %839 = vmatpush1.bf16.msra.mxu0 %v752
    %840 = vmatprep.subr.bf16.mxu0 0
    %841 = vmatpush1.bf16.msra.mxu0 %v749
    %842 = vmatprep.subr.bf16.mxu0 0
    %843 = vmatpush1.bf16.msra.mxu0 %v746
    %844 = vmatprep.subr.bf16.mxu0 0
    %845 = vmatpush1.bf16.msra.mxu0 %v743
    %846 = vmatprep.subr.bf16.mxu0 0
    %847 = vmatpush2.bf16.msra.mxu0 0
    %848 = vmatprep.subr.bf16.mxu0 0
    %849 = vmatpush2.bf16.msra.mxu0 0
    %850 = vmatprep.subr.bf16.mxu0 0
    %851 = vmatpush2.bf16.msra.mxu0 0
    %852 = vmatprep.subr.bf16.mxu0 0
    %853 = vmatpush2.bf16.msra.mxu0 0
    %854 = vmatprep.subr.bf16.mxu0 0
    %855 = vmatpush2.bf16.msra.mxu0 0
    %856 = vmatprep.subr.bf16.mxu0 0
    %857 = vmatpush2.bf16.msra.mxu0 0
    %858 = vmatprep.subr.bf16.mxu0 0
    %859 = vmatpush2.bf16.msra.mxu0 0
    %860 = vmatprep.subr.bf16.mxu0 0
    %861 = vmatpush2.bf16.msra.mxu0 0
    %862 = vmatprep.mubr.bf16.mxu0 0
    %863 = vmatmul.mubr.bf16.gmra.mxu0 %v628
    %v864 = vpop.f32.mrf.mxu0
    %v865 = vadd.f32 %v339, %v864
    %v866 = vpop.f32.mrf.mxu0
    %v867 = vpop.f32.mrf.mxu0
    %v868 = vpop.f32.mrf.mxu0
    %869 = vdwg.mxu0
    %v870 = vld [vmem:[#allocation8] sm:$0xff]
    %v871 = vld [vmem:[#allocation8 + $0x8] sm:$0xf]
    %v872 = vld [vmem:[#allocation8 + $0xc] sm:$0xff]
    %v873 = vld [vmem:[#allocation8 + $0x14] sm:$0xf]
    %v874 = vld [vmem:[#allocation8 + $0x18] sm:$0xff]
    %v875 = vld [vmem:[#allocation8 + $0x20] sm:$0xf]
    %v876 = vld [vmem:[#allocation8 + $0x24] sm:$0xff]
    %v877 = vld [vmem:[#allocation8 + $0x2c] sm:$0xf]
    %v878 = vld [vmem:[#allocation8 + $0x30] sm:$0xff]
    %v879 = vld [vmem:[#allocation8 + $0x38] sm:$0xf]
    %v880 = vld [vmem:[#allocation8 + $0x3c] sm:$0xff]
    %v881 = vld [vmem:[#allocation8 + $0x44] sm:$0xf]
    %v882 = vld [vmem:[#allocation8 + $0x48] sm:$0xff]
    %v883 = vld [vmem:[#allocation8 + $0x50] sm:$0xf]
    %v884 = vld [vmem:[#allocation8 + $0x54] sm:$0xff]
    %v885 = vld [vmem:[#allocation8 + $0x5c] sm:$0xf]
    %v886 = vld [vmem:[#allocation8 + $0x60] sm:$0xff]
    %v887 = vld [vmem:[#allocation8 + $0x68] sm:$0xf]
    %v888 = vld [vmem:[#allocation8 + $0x6c] sm:$0xff]
    %v889 = vld [vmem:[#allocation8 + $0x74] sm:$0xf]
    %v890 = vld [vmem:[#allocation8 + $0x78] sm:$0xff]
    %v891 = vld [vmem:[#allocation8 + $0x80] sm:$0xf]
    %v892 = vld [vmem:[#allocation8 + $0x84] sm:$0xff]
    %v893 = vld [vmem:[#allocation8 + $0x8c] sm:$0xf]
    %v894 = vld [vmem:[#allocation8 + $0x90] sm:$0xff]
    %v895 = vld [vmem:[#allocation8 + $0x98] sm:$0xf]
    %v896 = vld [vmem:[#allocation8 + $0x9c] sm:$0xff]
    %v897 = vld [vmem:[#allocation8 + $0xa4] sm:$0xf]
    %v898 = vld [vmem:[#allocation8 + $0xa8] sm:$0xff]
    %v899 = vld [vmem:[#allocation8 + $0xb0] sm:$0xf]
    %v900 = vld [vmem:[#allocation8 + $0xb4] sm:$0xff]
    %v901 = vld [vmem:[#allocation8 + $0xbc] sm:$0xf]
    %v934 = vunpack.c.l.b16 %v870
    %v935 = vunpack.c.h.b16 %v870
    %v936 = vunpack.c.l.b16 %v871
    %v937 = vunpack.c.l.b16 %v872
    %v938 = vunpack.c.h.b16 %v872
    %v939 = vunpack.c.l.b16 %v873
    %v940 = vunpack.c.l.b16 %v874
    %v941 = vunpack.c.h.b16 %v874
    %v942 = vunpack.c.l.b16 %v875
    %v943 = vunpack.c.l.b16 %v876
    %v944 = vunpack.c.h.b16 %v876
    %v945 = vunpack.c.l.b16 %v877
    %v946 = vunpack.c.l.b16 %v878
    %v947 = vunpack.c.h.b16 %v878
    %v948 = vunpack.c.l.b16 %v879
    %v949 = vunpack.c.l.b16 %v880
    %v950 = vunpack.c.h.b16 %v880
    %v951 = vunpack.c.l.b16 %v881
    %v952 = vunpack.c.l.b16 %v882
    %v953 = vunpack.c.h.b16 %v882
    %v954 = vunpack.c.l.b16 %v883
    %v955 = vunpack.c.l.b16 %v884
    %v956 = vunpack.c.h.b16 %v884
    %v957 = vunpack.c.l.b16 %v885
    %v958 = vunpack.c.l.b16 %v886
    %v959 = vunpack.c.h.b16 %v886
    %v960 = vunpack.c.l.b16 %v887
    %v961 = vunpack.c.l.b16 %v888
    %v962 = vunpack.c.h.b16 %v888
    %v963 = vunpack.c.l.b16 %v889
    %v964 = vunpack.c.l.b16 %v890
    %v965 = vunpack.c.h.b16 %v890
    %v966 = vunpack.c.l.b16 %v891
    %v967 = vunpack.c.l.b16 %v892
    %v968 = vunpack.c.h.b16 %v892
    %v969 = vunpack.c.l.b16 %v893
    %v970 = vunpack.c.l.b16 %v894
    %v971 = vunpack.c.h.b16 %v894
    %v972 = vunpack.c.l.b16 %v895
    %v973 = vunpack.c.l.b16 %v896
    %v974 = vunpack.c.h.b16 %v896
    %v975 = vunpack.c.l.b16 %v897
    %v976 = vunpack.c.l.b16 %v898
    %v977 = vunpack.c.h.b16 %v898
    %v978 = vunpack.c.l.b16 %v899
    %v979 = vunpack.c.l.b16 %v900
    %v980 = vunpack.c.h.b16 %v900
    %v981 = vunpack.c.l.b16 %v901
    %v982 = vpack.c.b16 %v937, %v934
    %v983 = vpack.c.b16 %v938, %v935
    %v984 = vpack.c.b16 %v939, %v936
    %v985 = vpack.c.b16 %v943, %v940
    %v986 = vpack.c.b16 %v944, %v941
    %v987 = vpack.c.b16 %v945, %v942
    %v988 = vpack.c.b16 %v949, %v946
    %v989 = vpack.c.b16 %v950, %v947
    %v990 = vpack.c.b16 %v951, %v948
    %v991 = vpack.c.b16 %v955, %v952
    %v992 = vpack.c.b16 %v956, %v953
    %v993 = vpack.c.b16 %v957, %v954
    %v994 = vpack.c.b16 %v961, %v958
    %v995 = vpack.c.b16 %v962, %v959
    %v996 = vpack.c.b16 %v963, %v960
    %v997 = vpack.c.b16 %v967, %v964
    %v998 = vpack.c.b16 %v968, %v965
    %v999 = vpack.c.b16 %v969, %v966
    %v1000 = vpack.c.b16 %v973, %v970
    %v1001 = vpack.c.b16 %v974, %v971
    %v1002 = vpack.c.b16 %v975, %v972
    %v1003 = vpack.c.b16 %v979, %v976
    %v1004 = vpack.c.b16 %v980, %v977
    %v1005 = vpack.c.b16 %v981, %v978
    %1030 = vmatprep.subr.bf16.mxu0 %v1004
    %1031 = vmatpush1.bf16.msra.mxu0 %v1003
    %1032 = vmatprep.subr.bf16.mxu0 %v1001
    %1033 = vmatpush1.bf16.msra.mxu0 %v1000
    %1034 = vmatprep.subr.bf16.mxu0 %v998
    %1035 = vmatpush1.bf16.msra.mxu0 %v997
    %1036 = vmatprep.subr.bf16.mxu0 %v995
    %1037 = vmatpush1.bf16.msra.mxu0 %v994
    %1038 = vmatprep.subr.bf16.mxu0 %v992
    %1039 = vmatpush1.bf16.msra.mxu0 %v991
    %1040 = vmatprep.subr.bf16.mxu0 %v989
    %1041 = vmatpush1.bf16.msra.mxu0 %v988
    %1042 = vmatprep.subr.bf16.mxu0 %v986
    %1043 = vmatpush1.bf16.msra.mxu0 %v985
    %1044 = vmatprep.subr.bf16.mxu0 %v983
    %1045 = vmatpush1.bf16.msra.mxu0 %v982
    %1046 = vmatprep.subr.bf16.mxu0 0
    %1047 = vmatpush2.bf16.msra.mxu0 0
    %1048 = vmatprep.subr.bf16.mxu0 0
    %1049 = vmatpush2.bf16.msra.mxu0 0
    %1050 = vmatprep.subr.bf16.mxu0 0
    %1051 = vmatpush2.bf16.msra.mxu0 0
    %1052 = vmatprep.subr.bf16.mxu0 0
    %1053 = vmatpush2.bf16.msra.mxu0 0
    %1054 = vmatprep.subr.bf16.mxu0 0
    %1055 = vmatpush2.bf16.msra.mxu0 0
    %1056 = vmatprep.subr.bf16.mxu0 0
    %1057 = vmatpush2.bf16.msra.mxu0 0
    %1058 = vmatprep.subr.bf16.mxu0 0
    %1059 = vmatpush2.bf16.msra.mxu0 0
    %1060 = vmatprep.subr.bf16.mxu0 0
    %1061 = vmatpush2.bf16.msra.mxu0 0
    %1062 = vmatprep.mubr.bf16.mxu0 0
    %1063 = vmatmul.mubr.bf16.gmra.mxu0 0
    %v1064 = vpop.f32.mrf.mxu0
    %v1065 = vadd.f32 0.0, %v1064
    %v1066 = vpop.f32.mrf.mxu0
    %v1067 = vadd.f32 0.0, %v1066
    %v1068 = vpop.f32.mrf.mxu0
    %v1069 = vpop.f32.mrf.mxu0
    %1070 = vdwg.mxu0
    %1071 = vmatprep.subr.bf16.mxu0 0
    %1072 = vmatpush1.bf16.msra.mxu0 %v1005
    %1073 = vmatprep.subr.bf16.mxu0 0
    %1074 = vmatpush1.bf16.msra.mxu0 %v1002
    %1075 = vmatprep.subr.bf16.mxu0 0
    %1076 = vmatpush1.bf16.msra.mxu0 %v999
    %1077 = vmatprep.subr.bf16.mxu0 0
    %1078 = vmatpush1.bf16.msra.mxu0 %v996
    %1079 = vmatprep.subr.bf16.mxu0 0
    %1080 = vmatpush1.bf16.msra.mxu0 %v993
    %1081 = vmatprep.subr.bf16.mxu0 0
    %1082 = vmatpush1.bf16.msra.mxu0 %v990
    %1083 = vmatprep.subr.bf16.mxu0 0
    %1084 = vmatpush1.bf16.msra.mxu0 %v987
    %1085 = vmatprep.subr.bf16.mxu0 0
    %1086 = vmatpush1.bf16.msra.mxu0 %v984
    %1087 = vmatprep.subr.bf16.mxu0 0
    %1088 = vmatpush2.bf16.msra.mxu0 0
    %1089 = vmatprep.subr.bf16.mxu0 0
    %1090 = vmatpush2.bf16.msra.mxu0 0
    %1091 = vmatprep.subr.bf16.mxu0 0
    %1092 = vmatpush2.bf16.msra.mxu0 0
    %1093 = vmatprep.subr.bf16.mxu0 0
    %1094 = vmatpush2.bf16.msra.mxu0 0
    %1095 = vmatprep.subr.bf16.mxu0 0
    %1096 = vmatpush2.bf16.msra.mxu0 0
    %1097 = vmatprep.subr.bf16.mxu0 0
    %1098 = vmatpush2.bf16.msra.mxu0 0
    %1099 = vmatprep.subr.bf16.mxu0 0
    %1100 = vmatpush2.bf16.msra.mxu0 0
    %1101 = vmatprep.subr.bf16.mxu0 0
    %1102 = vmatpush2.bf16.msra.mxu0 0
    %1103 = vmatprep.mubr.bf16.mxu0 0
    %1104 = vmatmul.mubr.bf16.gmra.mxu0 0
    %v1105 = vpop.f32.mrf.mxu0
    %v1106 = vadd.f32 0.0, %v1105
    %v1107 = vpop.f32.mrf.mxu0
    %v1108 = vpop.f32.mrf.mxu0
    %v1109 = vpop.f32.mrf.mxu0
    %1110 = vdwg.mxu0
    %v1111 = vadd.f32 %v824, %v1065
    %v1112 = vxor.u32 %v1111, 2147483648
    %v1113 = vmul.f32 %v1112, 1.442695
    %v1114 = vpow.pop %v1113
    %v1115 = vadd.f32 %v1114, 1.0
    %v1116 = vrcp.pop %v1115
    %v1117 = vmul.f32 1.0, %v1116
    %v1118 = vadd.f32 %v826, %v1067
    %v1119 = vxor.u32 %v1118, 2147483648
    %v1120 = vmul.f32 %v1119, 1.442695
    %v1121 = vpow.pop %v1120
    %v1122 = vadd.f32 %v1121, 1.0
    %v1123 = vrcp.pop %v1122
    %v1124 = vmul.f32 1.0, %v1123
    %v1125 = vadd.f32 %v1106, %v355
    %v1126 = vmul.f32 %v1117, %v1125
    %v1127 = vadd.f32 %v865, %v1126
    %v1128 = vtanh.pop %v1127
    %v1129 = vsub.f32 1.0, %v1124
    %v1130 = vmul.f32 %v1129, %v1128
    %v1131 = vmul.f32 %v1124, 0.0
    %v1132 = vadd.f32 %v1130, %v1131
    %v1134 = vlaneseq
    %v1135 = vshrl.u32 %v1134, 7
    %v1136 = vsub.s32 0, %v1135
    %v1137 = vrot.slane %v357, %v1136
    %v1139 = vmul.f32 %v1132, %v1137
    %1140 = vadd.xlane.f32.xlu0 %v1139
    %v1141 = vpop.xlane.xlu0 %1140
    %v1143 = vlaneseq
    %v1144 = vshrl.u32 %v1143, 7
    %v1145 = vsub.s32 0, %v1144
    %v1146 = vrot.slane %v358, %v1145
    %v1148 = vadd.f32 %v1141, %v1146
    %v1149 = vsub.f32 -inf, %v1148
    %v1150 = vmul.f32 %v1149, 1.442695
    %v1151 = vpow.pop %v1150
    %v1152 = vsub.f32 %v1148, %v1148
    %v1153 = vmul.f32 %v1152, 1.442695
    %v1154 = vpow.pop %v1153
    %v1155 = vmul.f32 %v1151, 0.0
    %v1156 = vadd.f32 %v1155, %v1154
    %1158 = vset.pattern.permute.xlu0 0
    %1159 = vperm.xlu0 %1158, %v1151
    %v1160 = vpop.permute.xlu0 %1159
    %v1162 = vmul.f32 %v1160, 0.0
    %1164 = vset.pattern.permute.xlu0 0
    %1165 = vperm.xlu0 %1164, %v1154
    %v1166 = vpop.permute.xlu0 %1165
    %v1168 = vmul.f32 %v1166, %v1132
    %v1169 = vadd.f32 %v1162, %v1168
    %s1170 = smul.u32 1, 3
    %s1171 = smul.addr %s1170, 8
    %s1172 = scalar_lea.vmem [#allocation2], %s1171
    %v1173 = vld [vmem:[%s1172] sm:$0xff]
    %v1174 = vld [vmem:[%s1172 + $0x8] sm:$0xff]
    %v1175 = vld [vmem:[%s1172 + $0x10] sm:$0xff]
    %1176 = vmatprep.subr.bf16.mxu0 %v499
    %1177 = vmatpush1.bf16.msra.mxu0 %v498
    %1178 = vmatprep.subr.bf16.mxu0 %v496
    %1179 = vmatpush1.bf16.msra.mxu0 %v495
    %1180 = vmatprep.subr.bf16.mxu0 %v493
    %1181 = vmatpush1.bf16.msra.mxu0 %v492
    %1182 = vmatprep.subr.bf16.mxu0 %v490
    %1183 = vmatpush1.bf16.msra.mxu0 %v489
    %1184 = vmatprep.subr.bf16.mxu0 %v487
    %1185 = vmatpush1.bf16.msra.mxu0 %v486
    %1186 = vmatprep.subr.bf16.mxu0 %v484
    %1187 = vmatpush1.bf16.msra.mxu0 %v483
    %1188 = vmatprep.subr.bf16.mxu0 %v481
    %1189 = vmatpush1.bf16.msra.mxu0 %v480
    %1190 = vmatprep.subr.bf16.mxu0 %v478
    %1191 = vmatpush1.bf16.msra.mxu0 %v477
    %1192 = vmatprep.subr.bf16.mxu0 0
    %1193 = vmatpush2.bf16.msra.mxu0 0
    %1194 = vmatprep.subr.bf16.mxu0 0
    %1195 = vmatpush2.bf16.msra.mxu0 0
    %1196 = vmatprep.subr.bf16.mxu0 0
    %1197 = vmatpush2.bf16.msra.mxu0 0
    %1198 = vmatprep.subr.bf16.mxu0 0
    %1199 = vmatpush2.bf16.msra.mxu0 0
    %1200 = vmatprep.subr.bf16.mxu0 0
    %1201 = vmatpush2.bf16.msra.mxu0 0
    %1202 = vmatprep.subr.bf16.mxu0 0
    %1203 = vmatpush2.bf16.msra.mxu0 0
    %1204 = vmatprep.subr.bf16.mxu0 0
    %1205 = vmatpush2.bf16.msra.mxu0 0
    %1206 = vmatprep.subr.bf16.mxu0 0
    %1207 = vmatpush2.bf16.msra.mxu0 0
    %1208 = vmatprep.mubr.bf16.mxu0 0
    %1209 = vmatmul.mubr.bf16.gmra.mxu0 %v628
    %v1210 = vpop.f32.mrf.mxu0
    %v1211 = vadd.f32 0.0, %v1210
    %v1212 = vpop.f32.mrf.mxu0
    %v1213 = vadd.f32 0.0, %v1212
    %v1214 = vpop.f32.mrf.mxu0
    %v1215 = vpop.f32.mrf.mxu0
    %1216 = vdwg.mxu0
    %1217 = vmatprep.subr.bf16.mxu0 0
    %1218 = vmatpush1.bf16.msra.mxu0 %v500
    %1219 = vmatprep.subr.bf16.mxu0 0
    %1220 = vmatpush1.bf16.msra.mxu0 %v497
    %1221 = vmatprep.subr.bf16.mxu0 0
    %1222 = vmatpush1.bf16.msra.mxu0 %v494
    %1223 = vmatprep.subr.bf16.mxu0 0
    %1224 = vmatpush1.bf16.msra.mxu0 %v491
    %1225 = vmatprep.subr.bf16.mxu0 0
    %1226 = vmatpush1.bf16.msra.mxu0 %v488
    %1227 = vmatprep.subr.bf16.mxu0 0
    %1228 = vmatpush1.bf16.msra.mxu0 %v485
    %1229 = vmatprep.subr.bf16.mxu0 0
    %1230 = vmatpush1.bf16.msra.mxu0 %v482
    %1231 = vmatprep.subr.bf16.mxu0 0
    %1232 = vmatpush1.bf16.msra.mxu0 %v479
    %1233 = vmatprep.subr.bf16.mxu0 0
    %1234 = vmatpush2.bf16.msra.mxu0 0
    %1235 = vmatprep.subr.bf16.mxu0 0
    %1236 = vmatpush2.bf16.msra.mxu0 0
    %1237 = vmatprep.subr.bf16.mxu0 0
    %1238 = vmatpush2.bf16.msra.mxu0 0
    %1239 = vmatprep.subr.bf16.mxu0 0
    %1240 = vmatpush2.bf16.msra.mxu0 0
    %1241 = vmatprep.subr.bf16.mxu0 0
    %1242 = vmatpush2.bf16.msra.mxu0 0
    %1243 = vmatprep.subr.bf16.mxu0 0
    %1244 = vmatpush2.bf16.msra.mxu0 0
    %1245 = vmatprep.subr.bf16.mxu0 0
    %1246 = vmatpush2.bf16.msra.mxu0 0
    %1247 = vmatprep.subr.bf16.mxu0 0
    %1248 = vmatpush2.bf16.msra.mxu0 0
    %1249 = vmatprep.mubr.bf16.mxu0 0
    %1250 = vmatmul.mubr.bf16.gmra.mxu0 %v628
    %v1251 = vpop.f32.mrf.mxu0
    %v1252 = vadd.f32 0.0, %v1251
    %v1253 = vpop.f32.mrf.mxu0
    %v1254 = vpop.f32.mrf.mxu0
    %v1255 = vpop.f32.mrf.mxu0
    %1256 = vdwg.mxu0
    %v1257 = vadd.f32 %v1173, %v1211
    %v1258 = vxor.u32 %v1257, 2147483648
    %v1259 = vmul.f32 %v1258, 1.442695
    %v1260 = vpow.pop %v1259
    %v1261 = vadd.f32 %v1260, 1.0
    %v1262 = vrcp.pop %v1261
    %v1263 = vmul.f32 1.0, %v1262
    %v1264 = vadd.f32 %v1174, %v1213
    %v1265 = vxor.u32 %v1264, 2147483648
    %v1266 = vmul.f32 %v1265, 1.442695
    %v1267 = vpow.pop %v1266
    %v1268 = vadd.f32 %v1267, 1.0
    %v1269 = vrcp.pop %v1268
    %v1270 = vmul.f32 1.0, %v1269
    %v1271 = vadd.f32 %v1252, %v348
    %v1272 = vmul.f32 %v1263, %v1271
    %v1273 = vadd.f32 %v1175, %v1272
    %v1274 = vtanh.pop %v1273
    %v1275 = vsub.f32 1.0, %v1270
    %v1276 = vmul.f32 %v1275, %v1274
    %v1277 = vmul.f32 %v1270, %v627
    %v1278 = vadd.f32 %v1276, %v1277
    %v1279 = vpack.c.bf16 %v1278, %v1278
    %1280 = vmatprep.subr.bf16.mxu0 %v763
    %1281 = vmatpush1.bf16.msra.mxu0 %v762
    %1282 = vmatprep.subr.bf16.mxu0 %v760
    %1283 = vmatpush1.bf16.msra.mxu0 %v759
    %1284 = vmatprep.subr.bf16.mxu0 %v757
    %1285 = vmatpush1.bf16.msra.mxu0 %v756
    %1286 = vmatprep.subr.bf16.mxu0 %v754
    %1287 = vmatpush1.bf16.msra.mxu0 %v753
    %1288 = vmatprep.subr.bf16.mxu0 %v751
    %1289 = vmatpush1.bf16.msra.mxu0 %v750
    %1290 = vmatprep.subr.bf16.mxu0 %v748
    %1291 = vmatpush1.bf16.msra.mxu0 %v747
    %1292 = vmatprep.subr.bf16.mxu0 %v745
    %1293 = vmatpush1.bf16.msra.mxu0 %v744
    %1294 = vmatprep.subr.bf16.mxu0 %v742
    %1295 = vmatpush1.bf16.msra.mxu0 %v741
    %1296 = vmatprep.subr.bf16.mxu0 0
    %1297 = vmatpush2.bf16.msra.mxu0 0
    %1298 = vmatprep.subr.bf16.mxu0 0
    %1299 = vmatpush2.bf16.msra.mxu0 0
    %1300 = vmatprep.subr.bf16.mxu0 0
    %1301 = vmatpush2.bf16.msra.mxu0 0
    %1302 = vmatprep.subr.bf16.mxu0 0
    %1303 = vmatpush2.bf16.msra.mxu0 0
    %1304 = vmatprep.subr.bf16.mxu0 0
    %1305 = vmatpush2.bf16.msra.mxu0 0
    %1306 = vmatprep.subr.bf16.mxu0 0
    %1307 = vmatpush2.bf16.msra.mxu0 0
    %1308 = vmatprep.subr.bf16.mxu0 0
    %1309 = vmatpush2.bf16.msra.mxu0 0
    %1310 = vmatprep.subr.bf16.mxu0 0
    %1311 = vmatpush2.bf16.msra.mxu0 0
    %1312 = vmatprep.mubr.bf16.mxu0 0
    %1313 = vmatmul.mubr.bf16.gmra.mxu0 %v1279
    %v1314 = vpop.f32.mrf.mxu0
    %v1315 = vadd.f32 %v331, %v1314
    %v1316 = vpop.f32.mrf.mxu0
    %v1317 = vadd.f32 %v335, %v1316
    %v1318 = vpop.f32.mrf.mxu0
    %v1319 = vpop.f32.mrf.mxu0
    %1320 = vdwg.mxu0
    %1321 = vmatprep.subr.bf16.mxu0 0
    %1322 = vmatpush1.bf16.msra.mxu0 %v764
    %1323 = vmatprep.subr.bf16.mxu0 0
    %1324 = vmatpush1.bf16.msra.mxu0 %v761
    %1325 = vmatprep.subr.bf16.mxu0 0
    %1326 = vmatpush1.bf16.msra.mxu0 %v758
    %1327 = vmatprep.subr.bf16.mxu0 0
    %1328 = vmatpush1.bf16.msra.mxu0 %v755
    %1329 = vmatprep.subr.bf16.mxu0 0
    %1330 = vmatpush1.bf16.msra.mxu0 %v752
    %1331 = vmatprep.subr.bf16.mxu0 0
    %1332 = vmatpush1.bf16.msra.mxu0 %v749
    %1333 = vmatprep.subr.bf16.mxu0 0
    %1334 = vmatpush1.bf16.msra.mxu0 %v746
    %1335 = vmatprep.subr.bf16.mxu0 0
    %1336 = vmatpush1.bf16.msra.mxu0 %v743
    %1337 = vmatprep.subr.bf16.mxu0 0
    %1338 = vmatpush2.bf16.msra.mxu0 0
    %1339 = vmatprep.subr.bf16.mxu0 0
    %1340 = vmatpush2.bf16.msra.mxu0 0
    %1341 = vmatprep.subr.bf16.mxu0 0
    %1342 = vmatpush2.bf16.msra.mxu0 0
    %1343 = vmatprep.subr.bf16.mxu0 0
    %1344 = vmatpush2.bf16.msra.mxu0 0
    %1345 = vmatprep.subr.bf16.mxu0 0
    %1346 = vmatpush2.bf16.msra.mxu0 0
    %1347 = vmatprep.subr.bf16.mxu0 0
    %1348 = vmatpush2.bf16.msra.mxu0 0
    %1349 = vmatprep.subr.bf16.mxu0 0
    %1350 = vmatpush2.bf16.msra.mxu0 0
    %1351 = vmatprep.subr.bf16.mxu0 0
    %1352 = vmatpush2.bf16.msra.mxu0 0
    %1353 = vmatprep.mubr.bf16.mxu0 0
    %1354 = vmatmul.mubr.bf16.gmra.mxu0 %v1279
    %v1355 = vpop.f32.mrf.mxu0
    %v1356 = vadd.f32 %v339, %v1355
    %v1357 = vpop.f32.mrf.mxu0
    %v1358 = vpop.f32.mrf.mxu0
    %v1359 = vpop.f32.mrf.mxu0
    %1360 = vdwg.mxu0
    %v1361 = vpack.c.bf16 %v1132, %v1132
    %1362 = vmatprep.subr.bf16.mxu0 %v1004
    %1363 = vmatpush1.bf16.msra.mxu0 %v1003
    %1364 = vmatprep.subr.bf16.mxu0 %v1001
    %1365 = vmatpush1.bf16.msra.mxu0 %v1000
    %1366 = vmatprep.subr.bf16.mxu0 %v998
    %1367 = vmatpush1.bf16.msra.mxu0 %v997
    %1368 = vmatprep.subr.bf16.mxu0 %v995
    %1369 = vmatpush1.bf16.msra.mxu0 %v994
    %1370 = vmatprep.subr.bf16.mxu0 %v992
    %1371 = vmatpush1.bf16.msra.mxu0 %v991
    %1372 = vmatprep.subr.bf16.mxu0 %v989
    %1373 = vmatpush1.bf16.msra.mxu0 %v988
    %1374 = vmatprep.subr.bf16.mxu0 %v986
    %1375 = vmatpush1.bf16.msra.mxu0 %v985
    %1376 = vmatprep.subr.bf16.mxu0 %v983
    %1377 = vmatpush1.bf16.msra.mxu0 %v982
    %1378 = vmatprep.subr.bf16.mxu0 0
    %1379 = vmatpush2.bf16.msra.mxu0 0
    %1380 = vmatprep.subr.bf16.mxu0 0
    %1381 = vmatpush2.bf16.msra.mxu0 0
    %1382 = vmatprep.subr.bf16.mxu0 0
    %1383 = vmatpush2.bf16.msra.mxu0 0
    %1384 = vmatprep.subr.bf16.mxu0 0
    %1385 = vmatpush2.bf16.msra.mxu0 0
    %1386 = vmatprep.subr.bf16.mxu0 0
    %1387 = vmatpush2.bf16.msra.mxu0 0
    %1388 = vmatprep.subr.bf16.mxu0 0
    %1389 = vmatpush2.bf16.msra.mxu0 0
    %1390 = vmatprep.subr.bf16.mxu0 0
    %1391 = vmatpush2.bf16.msra.mxu0 0
    %1392 = vmatprep.subr.bf16.mxu0 0
    %1393 = vmatpush2.bf16.msra.mxu0 0
    %1394 = vmatprep.mubr.bf16.mxu0 0
    %1395 = vmatmul.mubr.bf16.gmra.mxu0 %v1361
    %v1396 = vpop.f32.mrf.mxu0
    %v1397 = vadd.f32 0.0, %v1396
    %v1398 = vpop.f32.mrf.mxu0
    %v1399 = vadd.f32 0.0, %v1398
    %v1400 = vpop.f32.mrf.mxu0
    %v1401 = vpop.f32.mrf.mxu0
    %1402 = vdwg.mxu0
    %1403 = vmatprep.subr.bf16.mxu0 0
    %1404 = vmatpush1.bf16.msra.mxu0 %v1005
    %1405 = vmatprep.subr.bf16.mxu0 0
    %1406 = vmatpush1.bf16.msra.mxu0 %v1002
    %1407 = vmatprep.subr.bf16.mxu0 0
    %1408 = vmatpush1.bf16.msra.mxu0 %v999
    %1409 = vmatprep.subr.bf16.mxu0 0
    %1410 = vmatpush1.bf16.msra.mxu0 %v996
    %1411 = vmatprep.subr.bf16.mxu0 0
    %1412 = vmatpush1.bf16.msra.mxu0 %v993
    %1413 = vmatprep.subr.bf16.mxu0 0
    %1414 = vmatpush1.bf16.msra.mxu0 %v990
    %1415 = vmatprep.subr.bf16.mxu0 0
    %1416 = vmatpush1.bf16.msra.mxu0 %v987
    %1417 = vmatprep.subr.bf16.mxu0 0
    %1418 = vmatpush1.bf16.msra.mxu0 %v984
    %1419 = vmatprep.subr.bf16.mxu0 0
    %1420 = vmatpush2.bf16.msra.mxu0 0
    %1421 = vmatprep.subr.bf16.mxu0 0
    %1422 = vmatpush2.bf16.msra.mxu0 0
    %1423 = vmatprep.subr.bf16.mxu0 0
    %1424 = vmatpush2.bf16.msra.mxu0 0
    %1425 = vmatprep.subr.bf16.mxu0 0
    %1426 = vmatpush2.bf16.msra.mxu0 0
    %1427 = vmatprep.subr.bf16.mxu0 0
    %1428 = vmatpush2.bf16.msra.mxu0 0
    %1429 = vmatprep.subr.bf16.mxu0 0
    %1430 = vmatpush2.bf16.msra.mxu0 0
    %1431 = vmatprep.subr.bf16.mxu0 0
    %1432 = vmatpush2.bf16.msra.mxu0 0
    %1433 = vmatprep.subr.bf16.mxu0 0
    %1434 = vmatpush2.bf16.msra.mxu0 0
    %1435 = vmatprep.mubr.bf16.mxu0 0
    %1436 = vmatmul.mubr.bf16.gmra.mxu0 %v1361
    %v1437 = vpop.f32.mrf.mxu0
    %v1438 = vadd.f32 0.0, %v1437
    %v1439 = vpop.f32.mrf.mxu0
    %v1440 = vpop.f32.mrf.mxu0
    %v1441 = vpop.f32.mrf.mxu0
    %1442 = vdwg.mxu0
    %v1443 = vadd.f32 %v1315, %v1397
    %v1444 = vxor.u32 %v1443, 2147483648
    %v1445 = vmul.f32 %v1444, 1.442695
    %v1446 = vpow.pop %v1445
    %v1447 = vadd.f32 %v1446, 1.0
    %v1448 = vrcp.pop %v1447
    %v1449 = vmul.f32 1.0, %v1448
    %v1450 = vadd.f32 %v1317, %v1399
    %v1451 = vxor.u32 %v1450, 2147483648
    %v1452 = vmul.f32 %v1451, 1.442695
    %v1453 = vpow.pop %v1452
    %v1454 = vadd.f32 %v1453, 1.0
    %v1455 = vrcp.pop %v1454
    %v1456 = vmul.f32 1.0, %v1455
    %v1457 = vadd.f32 %v1438, %v355
    %v1458 = vmul.f32 %v1449, %v1457
    %v1459 = vadd.f32 %v1356, %v1458
    %v1460 = vtanh.pop %v1459
    %v1461 = vsub.f32 1.0, %v1456
    %v1462 = vmul.f32 %v1461, %v1460
    %v1463 = vmul.f32 %v1456, %v1132
    %v1464 = vadd.f32 %v1462, %v1463
    %v1465 = vmul.f32 %v1464, %v1137
    %1466 = vadd.xlane.f32.xlu0 %v1465
    %v1467 = vpop.xlane.xlu0 %1466
    %v1468 = vadd.f32 %v1467, %v1146
    %v1469 = vmax.f32 %v1148, %v1468
    %v1470 = vsub.f32 %v1148, %v1469
    %v1471 = vmul.f32 %v1470, 1.442695
    %v1472 = vpow.pop %v1471
    %v1473 = vsub.f32 %v1468, %v1469
    %v1474 = vmul.f32 %v1473, 1.442695
    %v1475 = vpow.pop %v1474
    %v1476 = vmul.f32 %v1472, %v1156
    %v1477 = vadd.f32 %v1476, %v1475
    %1479 = vset.pattern.permute.xlu0 0
    %1480 = vperm.xlu0 %1479, %v1472
    %v1481 = vpop.permute.xlu0 %1480
    %v1483 = vmul.f32 %v1481, %v1169
    %1485 = vset.pattern.permute.xlu0 0
    %1486 = vperm.xlu0 %1485, %v1475
    %v1487 = vpop.permute.xlu0 %1486
    %v1489 = vmul.f32 %v1487, %v1464
    %v1490 = vadd.f32 %v1483, %v1489
    %s1491 = smul.u32 2, 3
    %s1492 = smul.addr %s1491, 8
    %s1493 = scalar_lea.vmem [#allocation2], %s1492
    %v1494 = vld [vmem:[%s1493] sm:$0xff]
    %v1495 = vld [vmem:[%s1493 + $0x8] sm:$0xff]
    %v1496 = vld [vmem:[%s1493 + $0x10] sm:$0xff]
    %1497 = vmatprep.subr.bf16.mxu0 %v499
    %1498 = vmatpush1.bf16.msra.mxu0 %v498
    %1499 = vmatprep.subr.bf16.mxu0 %v496
    %1500 = vmatpush1.bf16.msra.mxu0 %v495
    %1501 = vmatprep.subr.bf16.mxu0 %v493
    %1502 = vmatpush1.bf16.msra.mxu0 %v492
    %1503 = vmatprep.subr.bf16.mxu0 %v490
    %1504 = vmatpush1.bf16.msra.mxu0 %v489
    %1505 = vmatprep.subr.bf16.mxu0 %v487
    %1506 = vmatpush1.bf16.msra.mxu0 %v486
    %1507 = vmatprep.subr.bf16.mxu0 %v484
    %1508 = vmatpush1.bf16.msra.mxu0 %v483
    %1509 = vmatprep.subr.bf16.mxu0 %v481
    %1510 = vmatpush1.bf16.msra.mxu0 %v480
    %1511 = vmatprep.subr.bf16.mxu0 %v478
    %1512 = vmatpush1.bf16.msra.mxu0 %v477
    %1513 = vmatprep.subr.bf16.mxu0 0
    %1514 = vmatpush2.bf16.msra.mxu0 0
    %1515 = vmatprep.subr.bf16.mxu0 0
    %1516 = vmatpush2.bf16.msra.mxu0 0
    %1517 = vmatprep.subr.bf16.mxu0 0
    %1518 = vmatpush2.bf16.msra.mxu0 0
    %1519 = vmatprep.subr.bf16.mxu0 0
    %1520 = vmatpush2.bf16.msra.mxu0 0
    %1521 = vmatprep.subr.bf16.mxu0 0
    %1522 = vmatpush2.bf16.msra.mxu0 0
    %1523 = vmatprep.subr.bf16.mxu0 0
    %1524 = vmatpush2.bf16.msra.mxu0 0
    %1525 = vmatprep.subr.bf16.mxu0 0
    %1526 = vmatpush2.bf16.msra.mxu0 0
    %1527 = vmatprep.subr.bf16.mxu0 0
    %1528 = vmatpush2.bf16.msra.mxu0 0
    %1529 = vmatprep.mubr.bf16.mxu0 0
    %1530 = vmatmul.mubr.bf16.gmra.mxu0 %v1279
    %v1531 = vpop.f32.mrf.mxu0
    %v1532 = vadd.f32 0.0, %v1531
    %v1533 = vpop.f32.mrf.mxu0
    %v1534 = vadd.f32 0.0, %v1533
    %v1535 = vpop.f32.mrf.mxu0
    %v1536 = vpop.f32.mrf.mxu0
    %1537 = vdwg.mxu0
    %1538 = vmatprep.subr.bf16.mxu0 0
    %1539 = vmatpush1.bf16.msra.mxu0 %v500
    %1540 = vmatprep.subr.bf16.mxu0 0
    %1541 = vmatpush1.bf16.msra.mxu0 %v497
    %1542 = vmatprep.subr.bf16.mxu0 0
    %1543 = vmatpush1.bf16.msra.mxu0 %v494
    %1544 = vmatprep.subr.bf16.mxu0 0
    %1545 = vmatpush1.bf16.msra.mxu0 %v491
    %1546 = vmatprep.subr.bf16.mxu0 0
    %1547 = vmatpush1.bf16.msra.mxu0 %v488
    %1548 = vmatprep.subr.bf16.mxu0 0
    %1549 = vmatpush1.bf16.msra.mxu0 %v485
    %1550 = vmatprep.subr.bf16.mxu0 0
    %1551 = vmatpush1.bf16.msra.mxu0 %v482
    %1552 = vmatprep.subr.bf16.mxu0 0
    %1553 = vmatpush1.bf16.msra.mxu0 %v479
    %1554 = vmatprep.subr.bf16.mxu0 0
    %1555 = vmatpush2.bf16.msra.mxu0 0
    %1556 = vmatprep.subr.bf16.mxu0 0
    %1557 = vmatpush2.bf16.msra.mxu0 0
    %1558 = vmatprep.subr.bf16.mxu0 0
    %1559 = vmatpush2.bf16.msra.mxu0 0
    %1560 = vmatprep.subr.bf16.mxu0 0
    %1561 = vmatpush2.bf16.msra.mxu0 0
    %1562 = vmatprep.subr.bf16.mxu0 0
    %1563 = vmatpush2.bf16.msra.mxu0 0
    %1564 = vmatprep.subr.bf16.mxu0 0
    %1565 = vmatpush2.bf16.msra.mxu0 0
    %1566 = vmatprep.subr.bf16.mxu0 0
    %1567 = vmatpush2.bf16.msra.mxu0 0
    %1568 = vmatprep.subr.bf16.mxu0 0
    %1569 = vmatpush2.bf16.msra.mxu0 0
    %1570 = vmatprep.mubr.bf16.mxu0 0
    %1571 = vmatmul.mubr.bf16.gmra.mxu0 %v1279
    %v1572 = vpop.f32.mrf.mxu0
    %v1573 = vadd.f32 0.0, %v1572
    %v1574 = vpop.f32.mrf.mxu0
    %v1575 = vpop.f32.mrf.mxu0
    %v1576 = vpop.f32.mrf.mxu0
    %1577 = vdwg.mxu0
    %v1578 = vadd.f32 %v1494, %v1532
    %v1579 = vxor.u32 %v1578, 2147483648
    %v1580 = vmul.f32 %v1579, 1.442695
    %v1581 = vpow.pop %v1580
    %v1582 = vadd.f32 %v1581, 1.0
    %v1583 = vrcp.pop %v1582
    %v1584 = vmul.f32 1.0, %v1583
    %v1585 = vadd.f32 %v1495, %v1534
    %v1586 = vxor.u32 %v1585, 2147483648
    %v1587 = vmul.f32 %v1586, 1.442695
    %v1588 = vpow.pop %v1587
    %v1589 = vadd.f32 %v1588, 1.0
    %v1590 = vrcp.pop %v1589
    %v1591 = vmul.f32 1.0, %v1590
    %v1592 = vadd.f32 %v1573, %v348
    %v1593 = vmul.f32 %v1584, %v1592
    %v1594 = vadd.f32 %v1496, %v1593
    %v1595 = vtanh.pop %v1594
    %v1596 = vsub.f32 1.0, %v1591
    %v1597 = vmul.f32 %v1596, %v1595
    %v1598 = vmul.f32 %v1591, %v1278
    %v1599 = vadd.f32 %v1597, %v1598
    %v1600 = vpack.c.bf16 %v1599, %v1599
    %1601 = vmatprep.subr.bf16.mxu0 %v763
    %1602 = vmatpush1.bf16.msra.mxu0 %v762
    %1603 = vmatprep.subr.bf16.mxu0 %v760
    %1604 = vmatpush1.bf16.msra.mxu0 %v759
    %1605 = vmatprep.subr.bf16.mxu0 %v757
    %1606 = vmatpush1.bf16.msra.mxu0 %v756
    %1607 = vmatprep.subr.bf16.mxu0 %v754
    %1608 = vmatpush1.bf16.msra.mxu0 %v753
    %1609 = vmatprep.subr.bf16.mxu0 %v751
    %1610 = vmatpush1.bf16.msra.mxu0 %v750
    %1611 = vmatprep.subr.bf16.mxu0 %v748
    %1612 = vmatpush1.bf16.msra.mxu0 %v747
    %1613 = vmatprep.subr.bf16.mxu0 %v745
    %1614 = vmatpush1.bf16.msra.mxu0 %v744
    %1615 = vmatprep.subr.bf16.mxu0 %v742
    %1616 = vmatpush1.bf16.msra.mxu0 %v741
    %1617 = vmatprep.subr.bf16.mxu0 0
    %1618 = vmatpush2.bf16.msra.mxu0 0
    %1619 = vmatprep.subr.bf16.mxu0 0
    %1620 = vmatpush2.bf16.msra.mxu0 0
    %1621 = vmatprep.subr.bf16.mxu0 0
    %1622 = vmatpush2.bf16.msra.mxu0 0
    %1623 = vmatprep.subr.bf16.mxu0 0
    %1624 = vmatpush2.bf16.msra.mxu0 0
    %1625 = vmatprep.subr.bf16.mxu0 0
    %1626 = vmatpush2.bf16.msra.mxu0 0
    %1627 = vmatprep.subr.bf16.mxu0 0
    %1628 = vmatpush2.bf16.msra.mxu0 0
    %1629 = vmatprep.subr.bf16.mxu0 0
    %1630 = vmatpush2.bf16.msra.mxu0 0
    %1631 = vmatprep.subr.bf16.mxu0 0
    %1632 = vmatpush2.bf16.msra.mxu0 0
    %1633 = vmatprep.mubr.bf16.mxu0 0
    %1634 = vmatmul.mubr.bf16.gmra.mxu0 %v1600
    %v1635 = vpop.f32.mrf.mxu0
    %v1636 = vadd.f32 %v331, %v1635
    %v1637 = vpop.f32.mrf.mxu0
    %v1638 = vadd.f32 %v335, %v1637
    %v1639 = vpop.f32.mrf.mxu0
    %v1640 = vpop.f32.mrf.mxu0
    %1641 = vdwg.mxu0
    %1642 = vmatprep.subr.bf16.mxu0 0
    %1643 = vmatpush1.bf16.msra.mxu0 %v764
    %1644 = vmatprep.subr.bf16.mxu0 0
    %1645 = vmatpush1.bf16.msra.mxu0 %v761
    %1646 = vmatprep.subr.bf16.mxu0 0
    %1647 = vmatpush1.bf16.msra.mxu0 %v758
    %1648 = vmatprep.subr.bf16.mxu0 0
    %1649 = vmatpush1.bf16.msra.mxu0 %v755
    %1650 = vmatprep.subr.bf16.mxu0 0
    %1651 = vmatpush1.bf16.msra.mxu0 %v752
    %1652 = vmatprep.subr.bf16.mxu0 0
    %1653 = vmatpush1.bf16.msra.mxu0 %v749
    %1654 = vmatprep.subr.bf16.mxu0 0
    %1655 = vmatpush1.bf16.msra.mxu0 %v746
    %1656 = vmatprep.subr.bf16.mxu0 0
    %1657 = vmatpush1.bf16.msra.mxu0 %v743
    %1658 = vmatprep.subr.bf16.mxu0 0
    %1659 = vmatpush2.bf16.msra.mxu0 0
    %1660 = vmatprep.subr.bf16.mxu0 0
    %1661 = vmatpush2.bf16.msra.mxu0 0
    %1662 = vmatprep.subr.bf16.mxu0 0
    %1663 = vmatpush2.bf16.msra.mxu0 0
    %1664 = vmatprep.subr.bf16.mxu0 0
    %1665 = vmatpush2.bf16.msra.mxu0 0
    %1666 = vmatprep.subr.bf16.mxu0 0
    %1667 = vmatpush2.bf16.msra.mxu0 0
    %1668 = vmatprep.subr.bf16.mxu0 0
    %1669 = vmatpush2.bf16.msra.mxu0 0
    %1670 = vmatprep.subr.bf16.mxu0 0
    %1671 = vmatpush2.bf16.msra.mxu0 0
    %1672 = vmatprep.subr.bf16.mxu0 0
    %1673 = vmatpush2.bf16.msra.mxu0 0
    %1674 = vmatprep.mubr.bf16.mxu0 0
    %1675 = vmatmul.mubr.bf16.gmra.mxu0 %v1600
    %v1676 = vpop.f32.mrf.mxu0
    %v1677 = vadd.f32 %v339, %v1676
    %v1678 = vpop.f32.mrf.mxu0
    %v1679 = vpop.f32.mrf.mxu0
    %v1680 = vpop.f32.mrf.mxu0
    %1681 = vdwg.mxu0
    %v1682 = vpack.c.bf16 %v1464, %v1464
    %1683 = vmatprep.subr.bf16.mxu0 %v1004
    %1684 = vmatpush1.bf16.msra.mxu0 %v1003
    %1685 = vmatprep.subr.bf16.mxu0 %v1001
    %1686 = vmatpush1.bf16.msra.mxu0 %v1000
    %1687 = vmatprep.subr.bf16.mxu0 %v998
    %1688 = vmatpush1.bf16.msra.mxu0 %v997
    %1689 = vmatprep.subr.bf16.mxu0 %v995
    %1690 = vmatpush1.bf16.msra.mxu0 %v994
    %1691 = vmatprep.subr.bf16.mxu0 %v992
    %1692 = vmatpush1.bf16.msra.mxu0 %v991
    %1693 = vmatprep.subr.bf16.mxu0 %v989
    %1694 = vmatpush1.bf16.msra.mxu0 %v988
    %1695 = vmatprep.subr.bf16.mxu0 %v986
    %1696 = vmatpush1.bf16.msra.mxu0 %v985
    %1697 = vmatprep.subr.bf16.mxu0 %v983
    %1698 = vmatpush1.bf16.msra.mxu0 %v982
    %1699 = vmatprep.subr.bf16.mxu0 0
    %1700 = vmatpush2.bf16.msra.mxu0 0
    %1701 = vmatprep.subr.bf16.mxu0 0
    %1702 = vmatpush2.bf16.msra.mxu0 0
    %1703 = vmatprep.subr.bf16.mxu0 0
    %1704 = vmatpush2.bf16.msra.mxu0 0
    %1705 = vmatprep.subr.bf16.mxu0 0
    %1706 = vmatpush2.bf16.msra.mxu0 0
    %1707 = vmatprep.subr.bf16.mxu0 0
    %1708 = vmatpush2.bf16.msra.mxu0 0
    %1709 = vmatprep.subr.bf16.mxu0 0
    %1710 = vmatpush2.bf16.msra.mxu0 0
    %1711 = vmatprep.subr.bf16.mxu0 0
    %1712 = vmatpush2.bf16.msra.mxu0 0
    %1713 = vmatprep.subr.bf16.mxu0 0
    %1714 = vmatpush2.bf16.msra.mxu0 0
    %1715 = vmatprep.mubr.bf16.mxu0 0
    %1716 = vmatmul.mubr.bf16.gmra.mxu0 %v1682
    %v1717 = vpop.f32.mrf.mxu0
    %v1718 = vadd.f32 0.0, %v1717
    %v1719 = vpop.f32.mrf.mxu0
    %v1720 = vadd.f32 0.0, %v1719
    %v1721 = vpop.f32.mrf.mxu0
    %v1722 = vpop.f32.mrf.mxu0
    %1723 = vdwg.mxu0
    %1724 = vmatprep.subr.bf16.mxu0 0
    %1725 = vmatpush1.bf16.msra.mxu0 %v1005
    %1726 = vmatprep.subr.bf16.mxu0 0
    %1727 = vmatpush1.bf16.msra.mxu0 %v1002
    %1728 = vmatprep.subr.bf16.mxu0 0
    %1729 = vmatpush1.bf16.msra.mxu0 %v999
    %1730 = vmatprep.subr.bf16.mxu0 0
    %1731 = vmatpush1.bf16.msra.mxu0 %v996
    %1732 = vmatprep.subr.bf16.mxu0 0
    %1733 = vmatpush1.bf16.msra.mxu0 %v993
    %1734 = vmatprep.subr.bf16.mxu0 0
    %1735 = vmatpush1.bf16.msra.mxu0 %v990
    %1736 = vmatprep.subr.bf16.mxu0 0
    %1737 = vmatpush1.bf16.msra.mxu0 %v987
    %1738 = vmatprep.subr.bf16.mxu0 0
    %1739 = vmatpush1.bf16.msra.mxu0 %v984
    %1740 = vmatprep.subr.bf16.mxu0 0
    %1741 = vmatpush2.bf16.msra.mxu0 0
    %1742 = vmatprep.subr.bf16.mxu0 0
    %1743 = vmatpush2.bf16.msra.mxu0 0
    %1744 = vmatprep.subr.bf16.mxu0 0
    %1745 = vmatpush2.bf16.msra.mxu0 0
    %1746 = vmatprep.subr.bf16.mxu0 0
    %1747 = vmatpush2.bf16.msra.mxu0 0
    %1748 = vmatprep.subr.bf16.mxu0 0
    %1749 = vmatpush2.bf16.msra.mxu0 0
    %1750 = vmatprep.subr.bf16.mxu0 0
    %1751 = vmatpush2.bf16.msra.mxu0 0
    %1752 = vmatprep.subr.bf16.mxu0 0
    %1753 = vmatpush2.bf16.msra.mxu0 0
    %1754 = vmatprep.subr.bf16.mxu0 0
    %1755 = vmatpush2.bf16.msra.mxu0 0
    %1756 = vmatprep.mubr.bf16.mxu0 0
    %1757 = vmatmul.mubr.bf16.gmra.mxu0 %v1682
    %v1758 = vpop.f32.mrf.mxu0
    %v1759 = vadd.f32 0.0, %v1758
    %v1760 = vpop.f32.mrf.mxu0
    %v1761 = vpop.f32.mrf.mxu0
    %v1762 = vpop.f32.mrf.mxu0
    %1763 = vdwg.mxu0
    %v1764 = vadd.f32 %v1636, %v1718
    %v1765 = vxor.u32 %v1764, 2147483648
    %v1766 = vmul.f32 %v1765, 1.442695
    %v1767 = vpow.pop %v1766
    %v1768 = vadd.f32 %v1767, 1.0
    %v1769 = vrcp.pop %v1768
    %v1770 = vmul.f32 1.0, %v1769
    %v1771 = vadd.f32 %v1638, %v1720
    %v1772 = vxor.u32 %v1771, 2147483648
    %v1773 = vmul.f32 %v1772, 1.442695
    %v1774 = vpow.pop %v1773
    %v1775 = vadd.f32 %v1774, 1.0
    %v1776 = vrcp.pop %v1775
    %v1777 = vmul.f32 1.0, %v1776
    %v1778 = vadd.f32 %v1759, %v355
    %v1779 = vmul.f32 %v1770, %v1778
    %v1780 = vadd.f32 %v1677, %v1779
    %v1781 = vtanh.pop %v1780
    %v1782 = vsub.f32 1.0, %v1777
    %v1783 = vmul.f32 %v1782, %v1781
    %v1784 = vmul.f32 %v1777, %v1464
    %v1785 = vadd.f32 %v1783, %v1784
    %v1786 = vmul.f32 %v1785, %v1137
    %1787 = vadd.xlane.f32.xlu0 %v1786
    %v1788 = vpop.xlane.xlu0 %1787
    %v1789 = vadd.f32 %v1788, %v1146
    %v1790 = vmax.f32 %v1469, %v1789
    %v1791 = vsub.f32 %v1469, %v1790
    %v1792 = vmul.f32 %v1791, 1.442695
    %v1793 = vpow.pop %v1792
    %v1794 = vsub.f32 %v1789, %v1790
    %v1795 = vmul.f32 %v1794, 1.442695
    %v1796 = vpow.pop %v1795
    %v1797 = vmul.f32 %v1793, %v1477
    %v1798 = vadd.f32 %v1797, %v1796
    %1800 = vset.pattern.permute.xlu0 0
    %1801 = vperm.xlu0 %1800, %v1793
    %v1802 = vpop.permute.xlu0 %1801
    %v1804 = vmul.f32 %v1802, %v1490
    %1806 = vset.pattern.permute.xlu0 0
    %1807 = vperm.xlu0 %1806, %v1796
    %v1808 = vpop.permute.xlu0 %1807
    %v1810 = vmul.f32 %v1808, %v1785
    %v1811 = vadd.f32 %v1804, %v1810
    %s1812 = smul.u32 3, 3
    %s1813 = smul.addr %s1812, 8
    %s1814 = scalar_lea.vmem [#allocation2], %s1813
    %v1815 = vld [vmem:[%s1814] sm:$0xff]
    %v1816 = vld [vmem:[%s1814 + $0x8] sm:$0xff]
    %v1817 = vld [vmem:[%s1814 + $0x10] sm:$0xff]
    %1818 = vmatprep.subr.bf16.mxu0 %v499
    %1819 = vmatpush1.bf16.msra.mxu0 %v498
    %1820 = vmatprep.subr.bf16.mxu0 %v496
    %1821 = vmatpush1.bf16.msra.mxu0 %v495
    %1822 = vmatprep.subr.bf16.mxu0 %v493
    %1823 = vmatpush1.bf16.msra.mxu0 %v492
    %1824 = vmatprep.subr.bf16.mxu0 %v490
    %1825 = vmatpush1.bf16.msra.mxu0 %v489
    %1826 = vmatprep.subr.bf16.mxu0 %v487
    %1827 = vmatpush1.bf16.msra.mxu0 %v486
    %1828 = vmatprep.subr.bf16.mxu0 %v484
    %1829 = vmatpush1.bf16.msra.mxu0 %v483
    %1830 = vmatprep.subr.bf16.mxu0 %v481
    %1831 = vmatpush1.bf16.msra.mxu0 %v480
    %1832 = vmatprep.subr.bf16.mxu0 %v478
    %1833 = vmatpush1.bf16.msra.mxu0 %v477
    %1834 = vmatprep.subr.bf16.mxu0 0
    %1835 = vmatpush2.bf16.msra.mxu0 0
    %1836 = vmatprep.subr.bf16.mxu0 0
    %1837 = vmatpush2.bf16.msra.mxu0 0
    %1838 = vmatprep.subr.bf16.mxu0 0
    %1839 = vmatpush2.bf16.msra.mxu0 0
    %1840 = vmatprep.subr.bf16.mxu0 0
    %1841 = vmatpush2.bf16.msra.mxu0 0
    %1842 = vmatprep.subr.bf16.mxu0 0
    %1843 = vmatpush2.bf16.msra.mxu0 0
    %1844 = vmatprep.subr.bf16.mxu0 0
    %1845 = vmatpush2.bf16.msra.mxu0 0
    %1846 = vmatprep.subr.bf16.mxu0 0
    %1847 = vmatpush2.bf16.msra.mxu0 0
    %1848 = vmatprep.subr.bf16.mxu0 0
    %1849 = vmatpush2.bf16.msra.mxu0 0
    %1850 = vmatprep.mubr.bf16.mxu0 0
    %1851 = vmatmul.mubr.bf16.gmra.mxu0 %v1600
    %v1852 = vpop.f32.mrf.mxu0
    %v1853 = vadd.f32 0.0, %v1852
    %v1854 = vpop.f32.mrf.mxu0
    %v1855 = vadd.f32 0.0, %v1854
    %v1856 = vpop.f32.mrf.mxu0
    %v1857 = vpop.f32.mrf.mxu0
    %1858 = vdwg.mxu0
    %1859 = vmatprep.subr.bf16.mxu0 0
    %1860 = vmatpush1.bf16.msra.mxu0 %v500
    %1861 = vmatprep.subr.bf16.mxu0 0
    %1862 = vmatpush1.bf16.msra.mxu0 %v497
    %1863 = vmatprep.subr.bf16.mxu0 0
    %1864 = vmatpush1.bf16.msra.mxu0 %v494
    %1865 = vmatprep.subr.bf16.mxu0 0
    %1866 = vmatpush1.bf16.msra.mxu0 %v491
    %1867 = vmatprep.subr.bf16.mxu0 0
    %1868 = vmatpush1.bf16.msra.mxu0 %v488
    %1869 = vmatprep.subr.bf16.mxu0 0
    %1870 = vmatpush1.bf16.msra.mxu0 %v485
    %1871 = vmatprep.subr.bf16.mxu0 0
    %1872 = vmatpush1.bf16.msra.mxu0 %v482
    %1873 = vmatprep.subr.bf16.mxu0 0
    %1874 = vmatpush1.bf16.msra.mxu0 %v479
    %1875 = vmatprep.subr.bf16.mxu0 0
    %1876 = vmatpush2.bf16.msra.mxu0 0
    %1877 = vmatprep.subr.bf16.mxu0 0
    %1878 = vmatpush2.bf16.msra.mxu0 0
    %1879 = vmatprep.subr.bf16.mxu0 0
    %1880 = vmatpush2.bf16.msra.mxu0 0
    %1881 = vmatprep.subr.bf16.mxu0 0
    %1882 = vmatpush2.bf16.msra.mxu0 0
    %1883 = vmatprep.subr.bf16.mxu0 0
    %1884 = vmatpush2.bf16.msra.mxu0 0
    %1885 = vmatprep.subr.bf16.mxu0 0
    %1886 = vmatpush2.bf16.msra.mxu0 0
    %1887 = vmatprep.subr.bf16.mxu0 0
    %1888 = vmatpush2.bf16.msra.mxu0 0
    %1889 = vmatprep.subr.bf16.mxu0 0
    %1890 = vmatpush2.bf16.msra.mxu0 0
    %1891 = vmatprep.mubr.bf16.mxu0 0
    %1892 = vmatmul.mubr.bf16.gmra.mxu0 %v1600
    %v1893 = vpop.f32.mrf.mxu0
    %v1894 = vadd.f32 0.0, %v1893
    %v1895 = vpop.f32.mrf.mxu0
    %v1896 = vpop.f32.mrf.mxu0
    %v1897 = vpop.f32.mrf.mxu0
    %1898 = vdwg.mxu0
    %v1899 = vadd.f32 %v1815, %v1853
    %v1900 = vxor.u32 %v1899, 2147483648
    %v1901 = vmul.f32 %v1900, 1.442695
    %v1902 = vpow.pop %v1901
    %v1903 = vadd.f32 %v1902, 1.0
    %v1904 = vrcp.pop %v1903
    %v1905 = vmul.f32 1.0, %v1904
    %v1906 = vadd.f32 %v1816, %v1855
    %v1907 = vxor.u32 %v1906, 2147483648
    %v1908 = vmul.f32 %v1907, 1.442695
    %v1909 = vpow.pop %v1908
    %v1910 = vadd.f32 %v1909, 1.0
    %v1911 = vrcp.pop %v1910
    %v1912 = vmul.f32 1.0, %v1911
    %v1913 = vadd.f32 %v1894, %v348
    %v1914 = vmul.f32 %v1905, %v1913
    %v1915 = vadd.f32 %v1817, %v1914
    %v1916 = vtanh.pop %v1915
    %v1917 = vsub.f32 1.0, %v1912
    %v1918 = vmul.f32 %v1917, %v1916
    %v1919 = vmul.f32 %v1912, %v1599
    %v1920 = vadd.f32 %v1918, %v1919
    %v1921 = vpack.c.bf16 %v1920, %v1920
    %1922 = vmatprep.subr.bf16.mxu0 %v763
    %1923 = vmatpush1.bf16.msra.mxu0 %v762
    %1924 = vmatprep.subr.bf16.mxu0 %v760
    %1925 = vmatpush1.bf16.msra.mxu0 %v759
    %1926 = vmatprep.subr.bf16.mxu0 %v757
    %1927 = vmatpush1.bf16.msra.mxu0 %v756
    %1928 = vmatprep.subr.bf16.mxu0 %v754
    %1929 = vmatpush1.bf16.msra.mxu0 %v753
    %1930 = vmatprep.subr.bf16.mxu0 %v751
    %1931 = vmatpush1.bf16.msra.mxu0 %v750
    %1932 = vmatprep.subr.bf16.mxu0 %v748
    %1933 = vmatpush1.bf16.msra.mxu0 %v747
    %1934 = vmatprep.subr.bf16.mxu0 %v745
    %1935 = vmatpush1.bf16.msra.mxu0 %v744
    %1936 = vmatprep.subr.bf16.mxu0 %v742
    %1937 = vmatpush1.bf16.msra.mxu0 %v741
    %1938 = vmatprep.subr.bf16.mxu0 0
    %1939 = vmatpush2.bf16.msra.mxu0 0
    %1940 = vmatprep.subr.bf16.mxu0 0
    %1941 = vmatpush2.bf16.msra.mxu0 0
    %1942 = vmatprep.subr.bf16.mxu0 0
    %1943 = vmatpush2.bf16.msra.mxu0 0
    %1944 = vmatprep.subr.bf16.mxu0 0
    %1945 = vmatpush2.bf16.msra.mxu0 0
    %1946 = vmatprep.subr.bf16.mxu0 0
    %1947 = vmatpush2.bf16.msra.mxu0 0
    %1948 = vmatprep.subr.bf16.mxu0 0
    %1949 = vmatpush2.bf16.msra.mxu0 0
    %1950 = vmatprep.subr.bf16.mxu0 0
    %1951 = vmatpush2.bf16.msra.mxu0 0
    %1952 = vmatprep.subr.bf16.mxu0 0
    %1953 = vmatpush2.bf16.msra.mxu0 0
    %1954 = vmatprep.mubr.bf16.mxu0 0
    %1955 = vmatmul.mubr.bf16.gmra.mxu0 %v1921
    %v1956 = vpop.f32.mrf.mxu0
    %v1957 = vadd.f32 %v331, %v1956
    %v1958 = vpop.f32.mrf.mxu0
    %v1959 = vadd.f32 %v335, %v1958
    %v1960 = vpop.f32.mrf.mxu0
    %v1961 = vpop.f32.mrf.mxu0
    %1962 = vdwg.mxu0
    %1963 = vmatprep.subr.bf16.mxu0 0
    %1964 = vmatpush1.bf16.msra.mxu0 %v764
    %1965 = vmatprep.subr.bf16.mxu0 0
    %1966 = vmatpush1.bf16.msra.mxu0 %v761
    %1967 = vmatprep.subr.bf16.mxu0 0
    %1968 = vmatpush1.bf16.msra.mxu0 %v758
    %1969 = vmatprep.subr.bf16.mxu0 0
    %1970 = vmatpush1.bf16.msra.mxu0 %v755
    %1971 = vmatprep.subr.bf16.mxu0 0
    %1972 = vmatpush1.bf16.msra.mxu0 %v752
    %1973 = vmatprep.subr.bf16.mxu0 0
    %1974 = vmatpush1.bf16.msra.mxu0 %v749
    %1975 = vmatprep.subr.bf16.mxu0 0
    %1976 = vmatpush1.bf16.msra.mxu0 %v746
    %1977 = vmatprep.subr.bf16.mxu0 0
    %1978 = vmatpush1.bf16.msra.mxu0 %v743
    %1979 = vmatprep.subr.bf16.mxu0 0
    %1980 = vmatpush2.bf16.msra.mxu0 0
    %1981 = vmatprep.subr.bf16.mxu0 0
    %1982 = vmatpush2.bf16.msra.mxu0 0
    %1983 = vmatprep.subr.bf16.mxu0 0
    %1984 = vmatpush2.bf16.msra.mxu0 0
    %1985 = vmatprep.subr.bf16.mxu0 0
    %1986 = vmatpush2.bf16.msra.mxu0 0
    %1987 = vmatprep.subr.bf16.mxu0 0
    %1988 = vmatpush2.bf16.msra.mxu0 0
    %1989 = vmatprep.subr.bf16.mxu0 0
    %1990 = vmatpush2.bf16.msra.mxu0 0
    %1991 = vmatprep.subr.bf16.mxu0 0
    %1992 = vmatpush2.bf16.msra.mxu0 0
    %1993 = vmatprep.subr.bf16.mxu0 0
    %1994 = vmatpush2.bf16.msra.mxu0 0
    %1995 = vmatprep.mubr.bf16.mxu0 0
    %1996 = vmatmul.mubr.bf16.gmra.mxu0 %v1921
    %v1997 = vpop.f32.mrf.mxu0
    %v1998 = vadd.f32 %v339, %v1997
    %v1999 = vpop.f32.mrf.mxu0
    %v2000 = vpop.f32.mrf.mxu0
    %v2001 = vpop.f32.mrf.mxu0
    %2002 = vdwg.mxu0
    %v2003 = vpack.c.bf16 %v1785, %v1785
    %2004 = vmatprep.subr.bf16.mxu0 %v1004
    %2005 = vmatpush1.bf16.msra.mxu0 %v1003
    %2006 = vmatprep.subr.bf16.mxu0 %v1001
    %2007 = vmatpush1.bf16.msra.mxu0 %v1000
    %2008 = vmatprep.subr.bf16.mxu0 %v998
    %2009 = vmatpush1.bf16.msra.mxu0 %v997
    %2010 = vmatprep.subr.bf16.mxu0 %v995
    %2011 = vmatpush1.bf16.msra.mxu0 %v994
    %2012 = vmatprep.subr.bf16.mxu0 %v992
    %2013 = vmatpush1.bf16.msra.mxu0 %v991
    %2014 = vmatprep.subr.bf16.mxu0 %v989
    %2015 = vmatpush1.bf16.msra.mxu0 %v988
    %2016 = vmatprep.subr.bf16.mxu0 %v986
    %2017 = vmatpush1.bf16.msra.mxu0 %v985
    %2018 = vmatprep.subr.bf16.mxu0 %v983
    %2019 = vmatpush1.bf16.msra.mxu0 %v982
    %2020 = vmatprep.subr.bf16.mxu0 0
    %2021 = vmatpush2.bf16.msra.mxu0 0
    %2022 = vmatprep.subr.bf16.mxu0 0
    %2023 = vmatpush2.bf16.msra.mxu0 0
    %2024 = vmatprep.subr.bf16.mxu0 0
    %2025 = vmatpush2.bf16.msra.mxu0 0
    %2026 = vmatprep.subr.bf16.mxu0 0
    %2027 = vmatpush2.bf16.msra.mxu0 0
    %2028 = vmatprep.subr.bf16.mxu0 0
    %2029 = vmatpush2.bf16.msra.mxu0 0
    %2030 = vmatprep.subr.bf16.mxu0 0
    %2031 = vmatpush2.bf16.msra.mxu0 0
    %2032 = vmatprep.subr.bf16.mxu0 0
    %2033 = vmatpush2.bf16.msra.mxu0 0
    %2034 = vmatprep.subr.bf16.mxu0 0
    %2035 = vmatpush2.bf16.msra.mxu0 0
    %2036 = vmatprep.mubr.bf16.mxu0 0
    %2037 = vmatmul.mubr.bf16.gmra.mxu0 %v2003
    %v2038 = vpop.f32.mrf.mxu0
    %v2039 = vadd.f32 0.0, %v2038
    %v2040 = vpop.f32.mrf.mxu0
    %v2041 = vadd.f32 0.0, %v2040
    %v2042 = vpop.f32.mrf.mxu0
    %v2043 = vpop.f32.mrf.mxu0
    %2044 = vdwg.mxu0
    %2045 = vmatprep.subr.bf16.mxu0 0
    %2046 = vmatpush1.bf16.msra.mxu0 %v1005
    %2047 = vmatprep.subr.bf16.mxu0 0
    %2048 = vmatpush1.bf16.msra.mxu0 %v1002
    %2049 = vmatprep.subr.bf16.mxu0 0
    %2050 = vmatpush1.bf16.msra.mxu0 %v999
    %2051 = vmatprep.subr.bf16.mxu0 0
    %2052 = vmatpush1.bf16.msra.mxu0 %v996
    %2053 = vmatprep.subr.bf16.mxu0 0
    %2054 = vmatpush1.bf16.msra.mxu0 %v993
    %2055 = vmatprep.subr.bf16.mxu0 0
    %2056 = vmatpush1.bf16.msra.mxu0 %v990
    %2057 = vmatprep.subr.bf16.mxu0 0
    %2058 = vmatpush1.bf16.msra.mxu0 %v987
    %2059 = vmatprep.subr.bf16.mxu0 0
    %2060 = vmatpush1.bf16.msra.mxu0 %v984
    %2061 = vmatprep.subr.bf16.mxu0 0
    %2062 = vmatpush2.bf16.msra.mxu0 0
    %2063 = vmatprep.subr.bf16.mxu0 0
    %2064 = vmatpush2.bf16.msra.mxu0 0
    %2065 = vmatprep.subr.bf16.mxu0 0
    %2066 = vmatpush2.bf16.msra.mxu0 0
    %2067 = vmatprep.subr.bf16.mxu0 0
    %2068 = vmatpush2.bf16.msra.mxu0 0
    %2069 = vmatprep.subr.bf16.mxu0 0
    %2070 = vmatpush2.bf16.msra.mxu0 0
    %2071 = vmatprep.subr.bf16.mxu0 0
    %2072 = vmatpush2.bf16.msra.mxu0 0
    %2073 = vmatprep.subr.bf16.mxu0 0
    %2074 = vmatpush2.bf16.msra.mxu0 0
    %2075 = vmatprep.subr.bf16.mxu0 0
    %2076 = vmatpush2.bf16.msra.mxu0 0
    %2077 = vmatprep.mubr.bf16.mxu0 0
    %2078 = vmatmul.mubr.bf16.gmra.mxu0 %v2003
    %v2079 = vpop.f32.mrf.mxu0
    %v2080 = vadd.f32 0.0, %v2079
    %v2081 = vpop.f32.mrf.mxu0
    %v2082 = vpop.f32.mrf.mxu0
    %v2083 = vpop.f32.mrf.mxu0
    %2084 = vdwg.mxu0
    %v2085 = vadd.f32 %v1957, %v2039
    %v2086 = vxor.u32 %v2085, 2147483648
    %v2087 = vmul.f32 %v2086, 1.442695
    %v2088 = vpow.pop %v2087
    %v2089 = vadd.f32 %v2088, 1.0
    %v2090 = vrcp.pop %v2089
    %v2091 = vmul.f32 1.0, %v2090
    %v2092 = vadd.f32 %v1959, %v2041
    %v2093 = vxor.u32 %v2092, 2147483648
    %v2094 = vmul.f32 %v2093, 1.442695
    %v2095 = vpow.pop %v2094
    %v2096 = vadd.f32 %v2095, 1.0
    %v2097 = vrcp.pop %v2096
    %v2098 = vmul.f32 1.0, %v2097
    %v2099 = vadd.f32 %v2080, %v355
    %v2100 = vmul.f32 %v2091, %v2099
    %v2101 = vadd.f32 %v1998, %v2100
    %v2102 = vtanh.pop %v2101
    %v2103 = vsub.f32 1.0, %v2098
    %v2104 = vmul.f32 %v2103, %v2102
    %v2105 = vmul.f32 %v2098, %v1785
    %v2106 = vadd.f32 %v2104, %v2105
    %v2107 = vmul.f32 %v2106, %v1137
    %2108 = vadd.xlane.f32.xlu0 %v2107
    %v2109 = vpop.xlane.xlu0 %2108
    %v2110 = vadd.f32 %v2109, %v1146
    %v2111 = vmax.f32 %v1790, %v2110
    %v2112 = vsub.f32 %v1790, %v2111
    %v2113 = vmul.f32 %v2112, 1.442695
    %v2114 = vpow.pop %v2113
    %v2115 = vsub.f32 %v2110, %v2111
    %v2116 = vmul.f32 %v2115, 1.442695
    %v2117 = vpow.pop %v2116
    %v2118 = vmul.f32 %v2114, %v1798
    %v2119 = vadd.f32 %v2118, %v2117
    %2121 = vset.pattern.permute.xlu0 0
    %2122 = vperm.xlu0 %2121, %v2114
    %v2123 = vpop.permute.xlu0 %2122
    %v2125 = vmul.f32 %v2123, %v1811
    %2127 = vset.pattern.permute.xlu0 0
    %2128 = vperm.xlu0 %2127, %v2117
    %v2129 = vpop.permute.xlu0 %2128
    %v2131 = vmul.f32 %v2129, %v2106
    %v2132 = vadd.f32 %v2125, %v2131
    %s2133 = smul.u32 4, 3
    %s2134 = smul.addr %s2133, 8
    %s2135 = scalar_lea.vmem [#allocation2], %s2134
    %v2136 = vld [vmem:[%s2135] sm:$0xff]
    %v2137 = vld [vmem:[%s2135 + $0x8] sm:$0xff]
    %v2138 = vld [vmem:[%s2135 + $0x10] sm:$0xff]
    %2139 = vmatprep.subr.bf16.mxu0 %v499
    %2140 = vmatpush1.bf16.msra.mxu0 %v498
    %2141 = vmatprep.subr.bf16.mxu0 %v496
    %2142 = vmatpush1.bf16.msra.mxu0 %v495
    %2143 = vmatprep.subr.bf16.mxu0 %v493
    %2144 = vmatpush1.bf16.msra.mxu0 %v492
    %2145 = vmatprep.subr.bf16.mxu0 %v490
    %2146 = vmatpush1.bf16.msra.mxu0 %v489
    %2147 = vmatprep.subr.bf16.mxu0 %v487
    %2148 = vmatpush1.bf16.msra.mxu0 %v486
    %2149 = vmatprep.subr.bf16.mxu0 %v484
    %2150 = vmatpush1.bf16.msra.mxu0 %v483
    %2151 = vmatprep.subr.bf16.mxu0 %v481
    %2152 = vmatpush1.bf16.msra.mxu0 %v480
    %2153 = vmatprep.subr.bf16.mxu0 %v478
    %2154 = vmatpush1.bf16.msra.mxu0 %v477
    %2155 = vmatprep.subr.bf16.mxu0 0
    %2156 = vmatpush2.bf16.msra.mxu0 0
    %2157 = vmatprep.subr.bf16.mxu0 0
    %2158 = vmatpush2.bf16.msra.mxu0 0
    %2159 = vmatprep.subr.bf16.mxu0 0
    %2160 = vmatpush2.bf16.msra.mxu0 0
    %2161 = vmatprep.subr.bf16.mxu0 0
    %2162 = vmatpush2.bf16.msra.mxu0 0
    %2163 = vmatprep.subr.bf16.mxu0 0
    %2164 = vmatpush2.bf16.msra.mxu0 0
    %2165 = vmatprep.subr.bf16.mxu0 0
    %2166 = vmatpush2.bf16.msra.mxu0 0
    %2167 = vmatprep.subr.bf16.mxu0 0
    %2168 = vmatpush2.bf16.msra.mxu0 0
    %2169 = vmatprep.subr.bf16.mxu0 0
    %2170 = vmatpush2.bf16.msra.mxu0 0
    %2171 = vmatprep.mubr.bf16.mxu0 0
    %2172 = vmatmul.mubr.bf16.gmra.mxu0 %v1921
    %v2173 = vpop.f32.mrf.mxu0
    %v2174 = vadd.f32 0.0, %v2173
    %v2175 = vpop.f32.mrf.mxu0
    %v2176 = vadd.f32 0.0, %v2175
    %v2177 = vpop.f32.mrf.mxu0
    %v2178 = vpop.f32.mrf.mxu0
    %2179 = vdwg.mxu0
    %2180 = vmatprep.subr.bf16.mxu0 0
    %2181 = vmatpush1.bf16.msra.mxu0 %v500
    %2182 = vmatprep.subr.bf16.mxu0 0
    %2183 = vmatpush1.bf16.msra.mxu0 %v497
    %2184 = vmatprep.subr.bf16.mxu0 0
    %2185 = vmatpush1.bf16.msra.mxu0 %v494
    %2186 = vmatprep.subr.bf16.mxu0 0
    %2187 = vmatpush1.bf16.msra.mxu0 %v491
    %2188 = vmatprep.subr.bf16.mxu0 0
    %2189 = vmatpush1.bf16.msra.mxu0 %v488
    %2190 = vmatprep.subr.bf16.mxu0 0
    %2191 = vmatpush1.bf16.msra.mxu0 %v485
    %2192 = vmatprep.subr.bf16.mxu0 0
    %2193 = vmatpush1.bf16.msra.mxu0 %v482
    %2194 = vmatprep.subr.bf16.mxu0 0
    %2195 = vmatpush1.bf16.msra.mxu0 %v479
    %2196 = vmatprep.subr.bf16.mxu0 0
    %2197 = vmatpush2.bf16.msra.mxu0 0
    %2198 = vmatprep.subr.bf16.mxu0 0
    %2199 = vmatpush2.bf16.msra.mxu0 0
    %2200 = vmatprep.subr.bf16.mxu0 0
    %2201 = vmatpush2.bf16.msra.mxu0 0
    %2202 = vmatprep.subr.bf16.mxu0 0
    %2203 = vmatpush2.bf16.msra.mxu0 0
    %2204 = vmatprep.subr.bf16.mxu0 0
    %2205 = vmatpush2.bf16.msra.mxu0 0
    %2206 = vmatprep.subr.bf16.mxu0 0
    %2207 = vmatpush2.bf16.msra.mxu0 0
    %2208 = vmatprep.subr.bf16.mxu0 0
    %2209 = vmatpush2.bf16.msra.mxu0 0
    %2210 = vmatprep.subr.bf16.mxu0 0
    %2211 = vmatpush2.bf16.msra.mxu0 0
    %2212 = vmatprep.mubr.bf16.mxu0 0
    %2213 = vmatmul.mubr.bf16.gmra.mxu0 %v1921
    %v2214 = vpop.f32.mrf.mxu0
    %v2215 = vadd.f32 0.0, %v2214
    %v2216 = vpop.f32.mrf.mxu0
    %v2217 = vpop.f32.mrf.mxu0
    %v2218 = vpop.f32.mrf.mxu0
    %2219 = vdwg.mxu0
    %v2220 = vadd.f32 %v2136, %v2174
    %v2221 = vxor.u32 %v2220, 2147483648
    %v2222 = vmul.f32 %v2221, 1.442695
    %v2223 = vpow.pop %v2222
    %v2224 = vadd.f32 %v2223, 1.0
    %v2225 = vrcp.pop %v2224
    %v2226 = vmul.f32 1.0, %v2225
    %v2227 = vadd.f32 %v2137, %v2176
    %v2228 = vxor.u32 %v2227, 2147483648
    %v2229 = vmul.f32 %v2228, 1.442695
    %v2230 = vpow.pop %v2229
    %v2231 = vadd.f32 %v2230, 1.0
    %v2232 = vrcp.pop %v2231
    %v2233 = vmul.f32 1.0, %v2232
    %v2234 = vadd.f32 %v2215, %v348
    %v2235 = vmul.f32 %v2226, %v2234
    %v2236 = vadd.f32 %v2138, %v2235
    %v2237 = vtanh.pop %v2236
    %v2238 = vsub.f32 1.0, %v2233
    %v2239 = vmul.f32 %v2238, %v2237
    %v2240 = vmul.f32 %v2233, %v1920
    %v2241 = vadd.f32 %v2239, %v2240
    %v2242 = vpack.c.bf16 %v2241, %v2241
    %2243 = vmatprep.subr.bf16.mxu0 %v763
    %2244 = vmatpush1.bf16.msra.mxu0 %v762
    %2245 = vmatprep.subr.bf16.mxu0 %v760
    %2246 = vmatpush1.bf16.msra.mxu0 %v759
    %2247 = vmatprep.subr.bf16.mxu0 %v757
    %2248 = vmatpush1.bf16.msra.mxu0 %v756
    %2249 = vmatprep.subr.bf16.mxu0 %v754
    %2250 = vmatpush1.bf16.msra.mxu0 %v753
    %2251 = vmatprep.subr.bf16.mxu0 %v751
    %2252 = vmatpush1.bf16.msra.mxu0 %v750
    %2253 = vmatprep.subr.bf16.mxu0 %v748
    %2254 = vmatpush1.bf16.msra.mxu0 %v747
    %2255 = vmatprep.subr.bf16.mxu0 %v745
    %2256 = vmatpush1.bf16.msra.mxu0 %v744
    %2257 = vmatprep.subr.bf16.mxu0 %v742
    %2258 = vmatpush1.bf16.msra.mxu0 %v741
    %2259 = vmatprep.subr.bf16.mxu0 0
    %2260 = vmatpush2.bf16.msra.mxu0 0
    %2261 = vmatprep.subr.bf16.mxu0 0
    %2262 = vmatpush2.bf16.msra.mxu0 0
    %2263 = vmatprep.subr.bf16.mxu0 0
    %2264 = vmatpush2.bf16.msra.mxu0 0
    %2265 = vmatprep.subr.bf16.mxu0 0
    %2266 = vmatpush2.bf16.msra.mxu0 0
    %2267 = vmatprep.subr.bf16.mxu0 0
    %2268 = vmatpush2.bf16.msra.mxu0 0
    %2269 = vmatprep.subr.bf16.mxu0 0
    %2270 = vmatpush2.bf16.msra.mxu0 0
    %2271 = vmatprep.subr.bf16.mxu0 0
    %2272 = vmatpush2.bf16.msra.mxu0 0
    %2273 = vmatprep.subr.bf16.mxu0 0
    %2274 = vmatpush2.bf16.msra.mxu0 0
    %2275 = vmatprep.mubr.bf16.mxu0 0
    %2276 = vmatmul.mubr.bf16.gmra.mxu0 %v2242
    %v2277 = vpop.f32.mrf.mxu0
    %v2278 = vadd.f32 %v331, %v2277
    %v2279 = vpop.f32.mrf.mxu0
    %v2280 = vadd.f32 %v335, %v2279
    %v2281 = vpop.f32.mrf.mxu0
    %v2282 = vpop.f32.mrf.mxu0
    %2283 = vdwg.mxu0
    %2284 = vmatprep.subr.bf16.mxu0 0
    %2285 = vmatpush1.bf16.msra.mxu0 %v764
    %2286 = vmatprep.subr.bf16.mxu0 0
    %2287 = vmatpush1.bf16.msra.mxu0 %v761
    %2288 = vmatprep.subr.bf16.mxu0 0
    %2289 = vmatpush1.bf16.msra.mxu0 %v758
    %2290 = vmatprep.subr.bf16.mxu0 0
    %2291 = vmatpush1.bf16.msra.mxu0 %v755
    %2292 = vmatprep.subr.bf16.mxu0 0
    %2293 = vmatpush1.bf16.msra.mxu0 %v752
    %2294 = vmatprep.subr.bf16.mxu0 0
    %2295 = vmatpush1.bf16.msra.mxu0 %v749
    %2296 = vmatprep.subr.bf16.mxu0 0
    %2297 = vmatpush1.bf16.msra.mxu0 %v746
    %2298 = vmatprep.subr.bf16.mxu0 0
    %2299 = vmatpush1.bf16.msra.mxu0 %v743
    %2300 = vmatprep.subr.bf16.mxu0 0
    %2301 = vmatpush2.bf16.msra.mxu0 0
    %2302 = vmatprep.subr.bf16.mxu0 0
    %2303 = vmatpush2.bf16.msra.mxu0 0
    %2304 = vmatprep.subr.bf16.mxu0 0
    %2305 = vmatpush2.bf16.msra.mxu0 0
    %2306 = vmatprep.subr.bf16.mxu0 0
    %2307 = vmatpush2.bf16.msra.mxu0 0
    %2308 = vmatprep.subr.bf16.mxu0 0
    %2309 = vmatpush2.bf16.msra.mxu0 0
    %2310 = vmatprep.subr.bf16.mxu0 0
    %2311 = vmatpush2.bf16.msra.mxu0 0
    %2312 = vmatprep.subr.bf16.mxu0 0
    %2313 = vmatpush2.bf16.msra.mxu0 0
    %2314 = vmatprep.subr.bf16.mxu0 0
    %2315 = vmatpush2.bf16.msra.mxu0 0
    %2316 = vmatprep.mubr.bf16.mxu0 0
    %2317 = vmatmul.mubr.bf16.gmra.mxu0 %v2242
    %v2318 = vpop.f32.mrf.mxu0
    %v2319 = vadd.f32 %v339, %v2318
    %v2320 = vpop.f32.mrf.mxu0
    %v2321 = vpop.f32.mrf.mxu0
    %v2322 = vpop.f32.mrf.mxu0
    %2323 = vdwg.mxu0
    %v2324 = vpack.c.bf16 %v2106, %v2106
    %2325 = vmatprep.subr.bf16.mxu0 %v1004
    %2326 = vmatpush1.bf16.msra.mxu0 %v1003
    %2327 = vmatprep.subr.bf16.mxu0 %v1001
    %2328 = vmatpush1.bf16.msra.mxu0 %v1000
    %2329 = vmatprep.subr.bf16.mxu0 %v998
    %2330 = vmatpush1.bf16.msra.mxu0 %v997
    %2331 = vmatprep.subr.bf16.mxu0 %v995
    %2332 = vmatpush1.bf16.msra.mxu0 %v994
    %2333 = vmatprep.subr.bf16.mxu0 %v992
    %2334 = vmatpush1.bf16.msra.mxu0 %v991
    %2335 = vmatprep.subr.bf16.mxu0 %v989
    %2336 = vmatpush1.bf16.msra.mxu0 %v988
    %2337 = vmatprep.subr.bf16.mxu0 %v986
    %2338 = vmatpush1.bf16.msra.mxu0 %v985
    %2339 = vmatprep.subr.bf16.mxu0 %v983
    %2340 = vmatpush1.bf16.msra.mxu0 %v982
    %2341 = vmatprep.subr.bf16.mxu0 0
    %2342 = vmatpush2.bf16.msra.mxu0 0
    %2343 = vmatprep.subr.bf16.mxu0 0
    %2344 = vmatpush2.bf16.msra.mxu0 0
    %2345 = vmatprep.subr.bf16.mxu0 0
    %2346 = vmatpush2.bf16.msra.mxu0 0
    %2347 = vmatprep.subr.bf16.mxu0 0
    %2348 = vmatpush2.bf16.msra.mxu0 0
    %2349 = vmatprep.subr.bf16.mxu0 0
    %2350 = vmatpush2.bf16.msra.mxu0 0
    %2351 = vmatprep.subr.bf16.mxu0 0
    %2352 = vmatpush2.bf16.msra.mxu0 0
    %2353 = vmatprep.subr.bf16.mxu0 0
    %2354 = vmatpush2.bf16.msra.mxu0 0
    %2355 = vmatprep.subr.bf16.mxu0 0
    %2356 = vmatpush2.bf16.msra.mxu0 0
    %2357 = vmatprep.mubr.bf16.mxu0 0
    %2358 = vmatmul.mubr.bf16.gmra.mxu0 %v2324
    %v2359 = vpop.f32.mrf.mxu0
    %v2360 = vadd.f32 0.0, %v2359
    %v2361 = vpop.f32.mrf.mxu0
    %v2362 = vadd.f32 0.0, %v2361
    %v2363 = vpop.f32.mrf.mxu0
    %v2364 = vpop.f32.mrf.mxu0
    %2365 = vdwg.mxu0
    %2366 = vmatprep.subr.bf16.mxu0 0
    %2367 = vmatpush1.bf16.msra.mxu0 %v1005
    %2368 = vmatprep.subr.bf16.mxu0 0
    %2369 = vmatpush1.bf16.msra.mxu0 %v1002
    %2370 = vmatprep.subr.bf16.mxu0 0
    %2371 = vmatpush1.bf16.msra.mxu0 %v999
    %2372 = vmatprep.subr.bf16.mxu0 0
    %2373 = vmatpush1.bf16.msra.mxu0 %v996
    %2374 = vmatprep.subr.bf16.mxu0 0
    %2375 = vmatpush1.bf16.msra.mxu0 %v993
    %2376 = vmatprep.subr.bf16.mxu0 0
    %2377 = vmatpush1.bf16.msra.mxu0 %v990
    %2378 = vmatprep.subr.bf16.mxu0 0
    %2379 = vmatpush1.bf16.msra.mxu0 %v987
    %2380 = vmatprep.subr.bf16.mxu0 0
    %2381 = vmatpush1.bf16.msra.mxu0 %v984
    %2382 = vmatprep.subr.bf16.mxu0 0
    %2383 = vmatpush2.bf16.msra.mxu0 0
    %2384 = vmatprep.subr.bf16.mxu0 0
    %2385 = vmatpush2.bf16.msra.mxu0 0
    %2386 = vmatprep.subr.bf16.mxu0 0
    %2387 = vmatpush2.bf16.msra.mxu0 0
    %2388 = vmatprep.subr.bf16.mxu0 0
    %2389 = vmatpush2.bf16.msra.mxu0 0
    %2390 = vmatprep.subr.bf16.mxu0 0
    %2391 = vmatpush2.bf16.msra.mxu0 0
    %2392 = vmatprep.subr.bf16.mxu0 0
    %2393 = vmatpush2.bf16.msra.mxu0 0
    %2394 = vmatprep.subr.bf16.mxu0 0
    %2395 = vmatpush2.bf16.msra.mxu0 0
    %2396 = vmatprep.subr.bf16.mxu0 0
    %2397 = vmatpush2.bf16.msra.mxu0 0
    %2398 = vmatprep.mubr.bf16.mxu0 0
    %2399 = vmatmul.mubr.bf16.gmra.mxu0 %v2324
    %v2400 = vpop.f32.mrf.mxu0
    %v2401 = vadd.f32 0.0, %v2400
    %v2402 = vpop.f32.mrf.mxu0
    %v2403 = vpop.f32.mrf.mxu0
    %v2404 = vpop.f32.mrf.mxu0
    %2405 = vdwg.mxu0
    %v2406 = vadd.f32 %v2278, %v2360
    %v2407 = vxor.u32 %v2406, 2147483648
    %v2408 = vmul.f32 %v2407, 1.442695
    %v2409 = vpow.pop %v2408
    %v2410 = vadd.f32 %v2409, 1.0
    %v2411 = vrcp.pop %v2410
    %v2412 = vmul.f32 1.0, %v2411
    %v2413 = vadd.f32 %v2280, %v2362
    %v2414 = vxor.u32 %v2413, 2147483648
    %v2415 = vmul.f32 %v2414, 1.442695
    %v2416 = vpow.pop %v2415
    %v2417 = vadd.f32 %v2416, 1.0
    %v2418 = vrcp.pop %v2417
    %v2419 = vmul.f32 1.0, %v2418
    %v2420 = vadd.f32 %v2401, %v355
    %v2421 = vmul.f32 %v2412, %v2420
    %v2422 = vadd.f32 %v2319, %v2421
    %v2423 = vtanh.pop %v2422
    %v2424 = vsub.f32 1.0, %v2419
    %v2425 = vmul.f32 %v2424, %v2423
    %v2426 = vmul.f32 %v2419, %v2106
    %v2427 = vadd.f32 %v2425, %v2426
    %v2428 = vmul.f32 %v2427, %v1137
    %2429 = vadd.xlane.f32.xlu0 %v2428
    %v2430 = vpop.xlane.xlu0 %2429
    %v2431 = vadd.f32 %v2430, %v1146
    %v2432 = vmax.f32 %v2111, %v2431
    %v2433 = vsub.f32 %v2111, %v2432
    %v2434 = vmul.f32 %v2433, 1.442695
    %v2435 = vpow.pop %v2434
    %v2436 = vsub.f32 %v2431, %v2432
    %v2437 = vmul.f32 %v2436, 1.442695
    %v2438 = vpow.pop %v2437
    %v2439 = vmul.f32 %v2435, %v2119
    %v2440 = vadd.f32 %v2439, %v2438
    %2442 = vset.pattern.permute.xlu0 0
    %2443 = vperm.xlu0 %2442, %v2435
    %v2444 = vpop.permute.xlu0 %2443
    %v2446 = vmul.f32 %v2444, %v2132
    %2448 = vset.pattern.permute.xlu0 0
    %2449 = vperm.xlu0 %2448, %v2438
    %v2450 = vpop.permute.xlu0 %2449
    %v2452 = vmul.f32 %v2450, %v2427
    %v2453 = vadd.f32 %v2446, %v2452
    %s2454 = smul.u32 5, 3
    %s2455 = smul.addr %s2454, 8
    %s2456 = scalar_lea.vmem [#allocation2], %s2455
    %v2457 = vld [vmem:[%s2456] sm:$0xff]
    %v2458 = vld [vmem:[%s2456 + $0x8] sm:$0xff]
    %v2459 = vld [vmem:[%s2456 + $0x10] sm:$0xff]
    %2460 = vmatprep.subr.bf16.mxu0 %v499
    %2461 = vmatpush1.bf16.msra.mxu0 %v498
    %2462 = vmatprep.subr.bf16.mxu0 %v496
    %2463 = vmatpush1.bf16.msra.mxu0 %v495
    %2464 = vmatprep.subr.bf16.mxu0 %v493
    %2465 = vmatpush1.bf16.msra.mxu0 %v492
    %2466 = vmatprep.subr.bf16.mxu0 %v490
    %2467 = vmatpush1.bf16.msra.mxu0 %v489
    %2468 = vmatprep.subr.bf16.mxu0 %v487
    %2469 = vmatpush1.bf16.msra.mxu0 %v486
    %2470 = vmatprep.subr.bf16.mxu0 %v484
    %2471 = vmatpush1.bf16.msra.mxu0 %v483
    %2472 = vmatprep.subr.bf16.mxu0 %v481
    %2473 = vmatpush1.bf16.msra.mxu0 %v480
    %2474 = vmatprep.subr.bf16.mxu0 %v478
    %2475 = vmatpush1.bf16.msra.mxu0 %v477
    %2476 = vmatprep.subr.bf16.mxu0 0
    %2477 = vmatpush2.bf16.msra.mxu0 0
    %2478 = vmatprep.subr.bf16.mxu0 0
    %2479 = vmatpush2.bf16.msra.mxu0 0
    %2480 = vmatprep.subr.bf16.mxu0 0
    %2481 = vmatpush2.bf16.msra.mxu0 0
    %2482 = vmatprep.subr.bf16.mxu0 0
    %2483 = vmatpush2.bf16.msra.mxu0 0
    %2484 = vmatprep.subr.bf16.mxu0 0
    %2485 = vmatpush2.bf16.msra.mxu0 0
    %2486 = vmatprep.subr.bf16.mxu0 0
    %2487 = vmatpush2.bf16.msra.mxu0 0
    %2488 = vmatprep.subr.bf16.mxu0 0
    %2489 = vmatpush2.bf16.msra.mxu0 0
    %2490 = vmatprep.subr.bf16.mxu0 0
    %2491 = vmatpush2.bf16.msra.mxu0 0
    %2492 = vmatprep.mubr.bf16.mxu0 0
    %2493 = vmatmul.mubr.bf16.gmra.mxu0 %v2242
    %v2494 = vpop.f32.mrf.mxu0
    %v2495 = vadd.f32 0.0, %v2494
    %v2496 = vpop.f32.mrf.mxu0
    %v2497 = vadd.f32 0.0, %v2496
    %v2498 = vpop.f32.mrf.mxu0
    %v2499 = vpop.f32.mrf.mxu0
    %2500 = vdwg.mxu0
    %2501 = vmatprep.subr.bf16.mxu0 0
    %2502 = vmatpush1.bf16.msra.mxu0 %v500
    %2503 = vmatprep.subr.bf16.mxu0 0
    %2504 = vmatpush1.bf16.msra.mxu0 %v497
    %2505 = vmatprep.subr.bf16.mxu0 0
    %2506 = vmatpush1.bf16.msra.mxu0 %v494
    %2507 = vmatprep.subr.bf16.mxu0 0
    %2508 = vmatpush1.bf16.msra.mxu0 %v491
    %2509 = vmatprep.subr.bf16.mxu0 0
    %2510 = vmatpush1.bf16.msra.mxu0 %v488
    %2511 = vmatprep.subr.bf16.mxu0 0
    %2512 = vmatpush1.bf16.msra.mxu0 %v485
    %2513 = vmatprep.subr.bf16.mxu0 0
    %2514 = vmatpush1.bf16.msra.mxu0 %v482
    %2515 = vmatprep.subr.bf16.mxu0 0
    %2516 = vmatpush1.bf16.msra.mxu0 %v479
    %2517 = vmatprep.subr.bf16.mxu0 0
    %2518 = vmatpush2.bf16.msra.mxu0 0
    %2519 = vmatprep.subr.bf16.mxu0 0
    %2520 = vmatpush2.bf16.msra.mxu0 0
    %2521 = vmatprep.subr.bf16.mxu0 0
    %2522 = vmatpush2.bf16.msra.mxu0 0
    %2523 = vmatprep.subr.bf16.mxu0 0
    %2524 = vmatpush2.bf16.msra.mxu0 0
    %2525 = vmatprep.subr.bf16.mxu0 0
    %2526 = vmatpush2.bf16.msra.mxu0 0
    %2527 = vmatprep.subr.bf16.mxu0 0
    %2528 = vmatpush2.bf16.msra.mxu0 0
    %2529 = vmatprep.subr.bf16.mxu0 0
    %2530 = vmatpush2.bf16.msra.mxu0 0
    %2531 = vmatprep.subr.bf16.mxu0 0
    %2532 = vmatpush2.bf16.msra.mxu0 0
    %2533 = vmatprep.mubr.bf16.mxu0 0
    %2534 = vmatmul.mubr.bf16.gmra.mxu0 %v2242
    %v2535 = vpop.f32.mrf.mxu0
    %v2536 = vadd.f32 0.0, %v2535
    %v2537 = vpop.f32.mrf.mxu0
    %v2538 = vpop.f32.mrf.mxu0
    %v2539 = vpop.f32.mrf.mxu0
    %2540 = vdwg.mxu0
    %v2541 = vadd.f32 %v2457, %v2495
    %v2542 = vxor.u32 %v2541, 2147483648
    %v2543 = vmul.f32 %v2542, 1.442695
    %v2544 = vpow.pop %v2543
    %v2545 = vadd.f32 %v2544, 1.0
    %v2546 = vrcp.pop %v2545
    %v2547 = vmul.f32 1.0, %v2546
    %v2548 = vadd.f32 %v2458, %v2497
    %v2549 = vxor.u32 %v2548, 2147483648
    %v2550 = vmul.f32 %v2549, 1.442695
    %v2551 = vpow.pop %v2550
    %v2552 = vadd.f32 %v2551, 1.0
    %v2553 = vrcp.pop %v2552
    %v2554 = vmul.f32 1.0, %v2553
    %v2555 = vadd.f32 %v2536, %v348
    %v2556 = vmul.f32 %v2547, %v2555
    %v2557 = vadd.f32 %v2459, %v2556
    %v2558 = vtanh.pop %v2557
    %v2559 = vsub.f32 1.0, %v2554
    %v2560 = vmul.f32 %v2559, %v2558
    %v2561 = vmul.f32 %v2554, %v2241
    %v2562 = vadd.f32 %v2560, %v2561
    %v2563 = vpack.c.bf16 %v2562, %v2562
    %2564 = vmatprep.subr.bf16.mxu0 %v763
    %2565 = vmatpush1.bf16.msra.mxu0 %v762
    %2566 = vmatprep.subr.bf16.mxu0 %v760
    %2567 = vmatpush1.bf16.msra.mxu0 %v759
    %2568 = vmatprep.subr.bf16.mxu0 %v757
    %2569 = vmatpush1.bf16.msra.mxu0 %v756
    %2570 = vmatprep.subr.bf16.mxu0 %v754
    %2571 = vmatpush1.bf16.msra.mxu0 %v753
    %2572 = vmatprep.subr.bf16.mxu0 %v751
    %2573 = vmatpush1.bf16.msra.mxu0 %v750
    %2574 = vmatprep.subr.bf16.mxu0 %v748
    %2575 = vmatpush1.bf16.msra.mxu0 %v747
    %2576 = vmatprep.subr.bf16.mxu0 %v745
    %2577 = vmatpush1.bf16.msra.mxu0 %v744
    %2578 = vmatprep.subr.bf16.mxu0 %v742
    %2579 = vmatpush1.bf16.msra.mxu0 %v741
    %2580 = vmatprep.subr.bf16.mxu0 0
    %2581 = vmatpush2.bf16.msra.mxu0 0
    %2582 = vmatprep.subr.bf16.mxu0 0
    %2583 = vmatpush2.bf16.msra.mxu0 0
    %2584 = vmatprep.subr.bf16.mxu0 0
    %2585 = vmatpush2.bf16.msra.mxu0 0
    %2586 = vmatprep.subr.bf16.mxu0 0
    %2587 = vmatpush2.bf16.msra.mxu0 0
    %2588 = vmatprep.subr.bf16.mxu0 0
    %2589 = vmatpush2.bf16.msra.mxu0 0
    %2590 = vmatprep.subr.bf16.mxu0 0
    %2591 = vmatpush2.bf16.msra.mxu0 0
    %2592 = vmatprep.subr.bf16.mxu0 0
    %2593 = vmatpush2.bf16.msra.mxu0 0
    %2594 = vmatprep.subr.bf16.mxu0 0
    %2595 = vmatpush2.bf16.msra.mxu0 0
    %2596 = vmatprep.mubr.bf16.mxu0 0
    %2597 = vmatmul.mubr.bf16.gmra.mxu0 %v2563
    %v2598 = vpop.f32.mrf.mxu0
    %v2599 = vadd.f32 %v331, %v2598
    %v2600 = vpop.f32.mrf.mxu0
    %v2601 = vadd.f32 %v335, %v2600
    %v2602 = vpop.f32.mrf.mxu0
    %v2603 = vpop.f32.mrf.mxu0
    %2604 = vdwg.mxu0
    %2605 = vmatprep.subr.bf16.mxu0 0
    %2606 = vmatpush1.bf16.msra.mxu0 %v764
    %2607 = vmatprep.subr.bf16.mxu0 0
    %2608 = vmatpush1.bf16.msra.mxu0 %v761
    %2609 = vmatprep.subr.bf16.mxu0 0
    %2610 = vmatpush1.bf16.msra.mxu0 %v758
    %2611 = vmatprep.subr.bf16.mxu0 0
    %2612 = vmatpush1.bf16.msra.mxu0 %v755
    %2613 = vmatprep.subr.bf16.mxu0 0
    %2614 = vmatpush1.bf16.msra.mxu0 %v752
    %2615 = vmatprep.subr.bf16.mxu0 0
    %2616 = vmatpush1.bf16.msra.mxu0 %v749
    %2617 = vmatprep.subr.bf16.mxu0 0
    %2618 = vmatpush1.bf16.msra.mxu0 %v746
    %2619 = vmatprep.subr.bf16.mxu0 0
    %2620 = vmatpush1.bf16.msra.mxu0 %v743
    %2621 = vmatprep.subr.bf16.mxu0 0
    %2622 = vmatpush2.bf16.msra.mxu0 0
    %2623 = vmatprep.subr.bf16.mxu0 0
    %2624 = vmatpush2.bf16.msra.mxu0 0
    %2625 = vmatprep.subr.bf16.mxu0 0
    %2626 = vmatpush2.bf16.msra.mxu0 0
    %2627 = vmatprep.subr.bf16.mxu0 0
    %2628 = vmatpush2.bf16.msra.mxu0 0
    %2629 = vmatprep.subr.bf16.mxu0 0
    %2630 = vmatpush2.bf16.msra.mxu0 0
    %2631 = vmatprep.subr.bf16.mxu0 0
    %2632 = vmatpush2.bf16.msra.mxu0 0
    %2633 = vmatprep.subr.bf16.mxu0 0
    %2634 = vmatpush2.bf16.msra.mxu0 0
    %2635 = vmatprep.subr.bf16.mxu0 0
    %2636 = vmatpush2.bf16.msra.mxu0 0
    %2637 = vmatprep.mubr.bf16.mxu0 0
    %2638 = vmatmul.mubr.bf16.gmra.mxu0 %v2563
    %v2639 = vpop.f32.mrf.mxu0
    %v2640 = vadd.f32 %v339, %v2639
    %v2641 = vpop.f32.mrf.mxu0
    %v2642 = vpop.f32.mrf.mxu0
    %v2643 = vpop.f32.mrf.mxu0
    %2644 = vdwg.mxu0
    %v2645 = vpack.c.bf16 %v2427, %v2427
    %2646 = vmatprep.subr.bf16.mxu0 %v1004
    %2647 = vmatpush1.bf16.msra.mxu0 %v1003
    %2648 = vmatprep.subr.bf16.mxu0 %v1001
    %2649 = vmatpush1.bf16.msra.mxu0 %v1000
    %2650 = vmatprep.subr.bf16.mxu0 %v998
    %2651 = vmatpush1.bf16.msra.mxu0 %v997
    %2652 = vmatprep.subr.bf16.mxu0 %v995
    %2653 = vmatpush1.bf16.msra.mxu0 %v994
    %2654 = vmatprep.subr.bf16.mxu0 %v992
    %2655 = vmatpush1.bf16.msra.mxu0 %v991
    %2656 = vmatprep.subr.bf16.mxu0 %v989
    %2657 = vmatpush1.bf16.msra.mxu0 %v988
    %2658 = vmatprep.subr.bf16.mxu0 %v986
    %2659 = vmatpush1.bf16.msra.mxu0 %v985
    %2660 = vmatprep.subr.bf16.mxu0 %v983
    %2661 = vmatpush1.bf16.msra.mxu0 %v982
    %2662 = vmatprep.subr.bf16.mxu0 0
    %2663 = vmatpush2.bf16.msra.mxu0 0
    %2664 = vmatprep.subr.bf16.mxu0 0
    %2665 = vmatpush2.bf16.msra.mxu0 0
    %2666 = vmatprep.subr.bf16.mxu0 0
    %2667 = vmatpush2.bf16.msra.mxu0 0
    %2668 = vmatprep.subr.bf16.mxu0 0
    %2669 = vmatpush2.bf16.msra.mxu0 0
    %2670 = vmatprep.subr.bf16.mxu0 0
    %2671 = vmatpush2.bf16.msra.mxu0 0
    %2672 = vmatprep.subr.bf16.mxu0 0
    %2673 = vmatpush2.bf16.msra.mxu0 0
    %2674 = vmatprep.subr.bf16.mxu0 0
    %2675 = vmatpush2.bf16.msra.mxu0 0
    %2676 = vmatprep.subr.bf16.mxu0 0
    %2677 = vmatpush2.bf16.msra.mxu0 0
    %2678 = vmatprep.mubr.bf16.mxu0 0
    %2679 = vmatmul.mubr.bf16.gmra.mxu0 %v2645
    %v2680 = vpop.f32.mrf.mxu0
    %v2681 = vadd.f32 0.0, %v2680
    %v2682 = vpop.f32.mrf.mxu0
    %v2683 = vadd.f32 0.0, %v2682
    %v2684 = vpop.f32.mrf.mxu0
    %v2685 = vpop.f32.mrf.mxu0
    %2686 = vdwg.mxu0
    %2687 = vmatprep.subr.bf16.mxu0 0
    %2688 = vmatpush1.bf16.msra.mxu0 %v1005
    %2689 = vmatprep.subr.bf16.mxu0 0
    %2690 = vmatpush1.bf16.msra.mxu0 %v1002
    %2691 = vmatprep.subr.bf16.mxu0 0
    %2692 = vmatpush1.bf16.msra.mxu0 %v999
    %2693 = vmatprep.subr.bf16.mxu0 0
    %2694 = vmatpush1.bf16.msra.mxu0 %v996
    %2695 = vmatprep.subr.bf16.mxu0 0
    %2696 = vmatpush1.bf16.msra.mxu0 %v993
    %2697 = vmatprep.subr.bf16.mxu0 0
    %2698 = vmatpush1.bf16.msra.mxu0 %v990
    %2699 = vmatprep.subr.bf16.mxu0 0
    %2700 = vmatpush1.bf16.msra.mxu0 %v987
    %2701 = vmatprep.subr.bf16.mxu0 0
    %2702 = vmatpush1.bf16.msra.mxu0 %v984
    %2703 = vmatprep.subr.bf16.mxu0 0
    %2704 = vmatpush2.bf16.msra.mxu0 0
    %2705 = vmatprep.subr.bf16.mxu0 0
    %2706 = vmatpush2.bf16.msra.mxu0 0
    %2707 = vmatprep.subr.bf16.mxu0 0
    %2708 = vmatpush2.bf16.msra.mxu0 0
    %2709 = vmatprep.subr.bf16.mxu0 0
    %2710 = vmatpush2.bf16.msra.mxu0 0
    %2711 = vmatprep.subr.bf16.mxu0 0
    %2712 = vmatpush2.bf16.msra.mxu0 0
    %2713 = vmatprep.subr.bf16.mxu0 0
    %2714 = vmatpush2.bf16.msra.mxu0 0
    %2715 = vmatprep.subr.bf16.mxu0 0
    %2716 = vmatpush2.bf16.msra.mxu0 0
    %2717 = vmatprep.subr.bf16.mxu0 0
    %2718 = vmatpush2.bf16.msra.mxu0 0
    %2719 = vmatprep.mubr.bf16.mxu0 0
    %2720 = vmatmul.mubr.bf16.gmra.mxu0 %v2645
    %v2721 = vpop.f32.mrf.mxu0
    %v2722 = vadd.f32 0.0, %v2721
    %v2723 = vpop.f32.mrf.mxu0
    %v2724 = vpop.f32.mrf.mxu0
    %v2725 = vpop.f32.mrf.mxu0
    %2726 = vdwg.mxu0
    %v2727 = vadd.f32 %v2599, %v2681
    %v2728 = vxor.u32 %v2727, 2147483648
    %v2729 = vmul.f32 %v2728, 1.442695
    %v2730 = vpow.pop %v2729
    %v2731 = vadd.f32 %v2730, 1.0
    %v2732 = vrcp.pop %v2731
    %v2733 = vmul.f32 1.0, %v2732
    %v2734 = vadd.f32 %v2601, %v2683
    %v2735 = vxor.u32 %v2734, 2147483648
    %v2736 = vmul.f32 %v2735, 1.442695
    %v2737 = vpow.pop %v2736
    %v2738 = vadd.f32 %v2737, 1.0
    %v2739 = vrcp.pop %v2738
    %v2740 = vmul.f32 1.0, %v2739
    %v2741 = vadd.f32 %v2722, %v355
    %v2742 = vmul.f32 %v2733, %v2741
    %v2743 = vadd.f32 %v2640, %v2742
    %v2744 = vtanh.pop %v2743
    %v2745 = vsub.f32 1.0, %v2740
    %v2746 = vmul.f32 %v2745, %v2744
    %v2747 = vmul.f32 %v2740, %v2427
    %v2748 = vadd.f32 %v2746, %v2747
    %v2749 = vmul.f32 %v2748, %v1137
    %2750 = vadd.xlane.f32.xlu0 %v2749
    %v2751 = vpop.xlane.xlu0 %2750
    %v2752 = vadd.f32 %v2751, %v1146
    %v2753 = vmax.f32 %v2432, %v2752
    %v2754 = vsub.f32 %v2432, %v2753
    %v2755 = vmul.f32 %v2754, 1.442695
    %v2756 = vpow.pop %v2755
    %v2757 = vsub.f32 %v2752, %v2753
    %v2758 = vmul.f32 %v2757, 1.442695
    %v2759 = vpow.pop %v2758
    %v2760 = vmul.f32 %v2756, %v2440
    %v2761 = vadd.f32 %v2760, %v2759
    %2763 = vset.pattern.permute.xlu0 0
    %2764 = vperm.xlu0 %2763, %v2756
    %v2765 = vpop.permute.xlu0 %2764
    %v2767 = vmul.f32 %v2765, %v2453
    %2769 = vset.pattern.permute.xlu0 0
    %2770 = vperm.xlu0 %2769, %v2759
    %v2771 = vpop.permute.xlu0 %2770
    %v2773 = vmul.f32 %v2771, %v2748
    %v2774 = vadd.f32 %v2767, %v2773
    %s2775 = smul.u32 6, 3
    %s2776 = smul.addr %s2775, 8
    %s2777 = scalar_lea.vmem [#allocation2], %s2776
    %v2778 = vld [vmem:[%s2777] sm:$0xff]
    %v2779 = vld [vmem:[%s2777 + $0x8] sm:$0xff]
    %v2780 = vld [vmem:[%s2777 + $0x10] sm:$0xff]
    %2781 = vmatprep.subr.bf16.mxu0 %v499
    %2782 = vmatpush1.bf16.msra.mxu0 %v498
    %2783 = vmatprep.subr.bf16.mxu0 %v496
    %2784 = vmatpush1.bf16.msra.mxu0 %v495
    %2785 = vmatprep.subr.bf16.mxu0 %v493
    %2786 = vmatpush1.bf16.msra.mxu0 %v492
    %2787 = vmatprep.subr.bf16.mxu0 %v490
    %2788 = vmatpush1.bf16.msra.mxu0 %v489
    %2789 = vmatprep.subr.bf16.mxu0 %v487
    %2790 = vmatpush1.bf16.msra.mxu0 %v486
    %2791 = vmatprep.subr.bf16.mxu0 %v484
    %2792 = vmatpush1.bf16.msra.mxu0 %v483
    %2793 = vmatprep.subr.bf16.mxu0 %v481
    %2794 = vmatpush1.bf16.msra.mxu0 %v480
    %2795 = vmatprep.subr.bf16.mxu0 %v478
    %2796 = vmatpush1.bf16.msra.mxu0 %v477
    %2797 = vmatprep.subr.bf16.mxu0 0
    %2798 = vmatpush2.bf16.msra.mxu0 0
    %2799 = vmatprep.subr.bf16.mxu0 0
    %2800 = vmatpush2.bf16.msra.mxu0 0
    %2801 = vmatprep.subr.bf16.mxu0 0
    %2802 = vmatpush2.bf16.msra.mxu0 0
    %2803 = vmatprep.subr.bf16.mxu0 0
    %2804 = vmatpush2.bf16.msra.mxu0 0
    %2805 = vmatprep.subr.bf16.mxu0 0
    %2806 = vmatpush2.bf16.msra.mxu0 0
    %2807 = vmatprep.subr.bf16.mxu0 0
    %2808 = vmatpush2.bf16.msra.mxu0 0
    %2809 = vmatprep.subr.bf16.mxu0 0
    %2810 = vmatpush2.bf16.msra.mxu0 0
    %2811 = vmatprep.subr.bf16.mxu0 0
    %2812 = vmatpush2.bf16.msra.mxu0 0
    %2813 = vmatprep.mubr.bf16.mxu0 0
    %2814 = vmatmul.mubr.bf16.gmra.mxu0 %v2563
    %v2815 = vpop.f32.mrf.mxu0
    %v2816 = vadd.f32 0.0, %v2815
    %v2817 = vpop.f32.mrf.mxu0
    %v2818 = vadd.f32 0.0, %v2817
    %v2819 = vpop.f32.mrf.mxu0
    %v2820 = vpop.f32.mrf.mxu0
    %2821 = vdwg.mxu0
    %2822 = vmatprep.subr.bf16.mxu0 0
    %2823 = vmatpush1.bf16.msra.mxu0 %v500
    %2824 = vmatprep.subr.bf16.mxu0 0
    %2825 = vmatpush1.bf16.msra.mxu0 %v497
    %2826 = vmatprep.subr.bf16.mxu0 0
    %2827 = vmatpush1.bf16.msra.mxu0 %v494
    %2828 = vmatprep.subr.bf16.mxu0 0
    %2829 = vmatpush1.bf16.msra.mxu0 %v491
    %2830 = vmatprep.subr.bf16.mxu0 0
    %2831 = vmatpush1.bf16.msra.mxu0 %v488
    %2832 = vmatprep.subr.bf16.mxu0 0
    %2833 = vmatpush1.bf16.msra.mxu0 %v485
    %2834 = vmatprep.subr.bf16.mxu0 0
    %2835 = vmatpush1.bf16.msra.mxu0 %v482
    %2836 = vmatprep.subr.bf16.mxu0 0
    %2837 = vmatpush1.bf16.msra.mxu0 %v479
    %2838 = vmatprep.subr.bf16.mxu0 0
    %2839 = vmatpush2.bf16.msra.mxu0 0
    %2840 = vmatprep.subr.bf16.mxu0 0
    %2841 = vmatpush2.bf16.msra.mxu0 0
    %2842 = vmatprep.subr.bf16.mxu0 0
    %2843 = vmatpush2.bf16.msra.mxu0 0
    %2844 = vmatprep.subr.bf16.mxu0 0
    %2845 = vmatpush2.bf16.msra.mxu0 0
    %2846 = vmatprep.subr.bf16.mxu0 0
    %2847 = vmatpush2.bf16.msra.mxu0 0
    %2848 = vmatprep.subr.bf16.mxu0 0
    %2849 = vmatpush2.bf16.msra.mxu0 0
    %2850 = vmatprep.subr.bf16.mxu0 0
    %2851 = vmatpush2.bf16.msra.mxu0 0
    %2852 = vmatprep.subr.bf16.mxu0 0
    %2853 = vmatpush2.bf16.msra.mxu0 0
    %2854 = vmatprep.mubr.bf16.mxu0 0
    %2855 = vmatmul.mubr.bf16.gmra.mxu0 %v2563
    %v2856 = vpop.f32.mrf.mxu0
    %v2857 = vadd.f32 0.0, %v2856
    %v2858 = vpop.f32.mrf.mxu0
    %v2859 = vpop.f32.mrf.mxu0
    %v2860 = vpop.f32.mrf.mxu0
    %2861 = vdwg.mxu0
    %v2862 = vadd.f32 %v2778, %v2816
    %v2863 = vxor.u32 %v2862, 2147483648
    %v2864 = vmul.f32 %v2863, 1.442695
    %v2865 = vpow.pop %v2864
    %v2866 = vadd.f32 %v2865, 1.0
    %v2867 = vrcp.pop %v2866
    %v2868 = vmul.f32 1.0, %v2867
    %v2869 = vadd.f32 %v2779, %v2818
    %v2870 = vxor.u32 %v2869, 2147483648
    %v2871 = vmul.f32 %v2870, 1.442695
    %v2872 = vpow.pop %v2871
    %v2873 = vadd.f32 %v2872, 1.0
    %v2874 = vrcp.pop %v2873
    %v2875 = vmul.f32 1.0, %v2874
    %v2876 = vadd.f32 %v2857, %v348
    %v2877 = vmul.f32 %v2868, %v2876
    %v2878 = vadd.f32 %v2780, %v2877
    %v2879 = vtanh.pop %v2878
    %v2880 = vsub.f32 1.0, %v2875
    %v2881 = vmul.f32 %v2880, %v2879
    %v2882 = vmul.f32 %v2875, %v2562
    %v2883 = vadd.f32 %v2881, %v2882
    %v2884 = vpack.c.bf16 %v2883, %v2883
    %2885 = vmatprep.subr.bf16.mxu0 %v763
    %2886 = vmatpush1.bf16.msra.mxu0 %v762
    %2887 = vmatprep.subr.bf16.mxu0 %v760
    %2888 = vmatpush1.bf16.msra.mxu0 %v759
    %2889 = vmatprep.subr.bf16.mxu0 %v757
    %2890 = vmatpush1.bf16.msra.mxu0 %v756
    %2891 = vmatprep.subr.bf16.mxu0 %v754
    %2892 = vmatpush1.bf16.msra.mxu0 %v753
    %2893 = vmatprep.subr.bf16.mxu0 %v751
    %2894 = vmatpush1.bf16.msra.mxu0 %v750
    %2895 = vmatprep.subr.bf16.mxu0 %v748
    %2896 = vmatpush1.bf16.msra.mxu0 %v747
    %2897 = vmatprep.subr.bf16.mxu0 %v745
    %2898 = vmatpush1.bf16.msra.mxu0 %v744
    %2899 = vmatprep.subr.bf16.mxu0 %v742
    %2900 = vmatpush1.bf16.msra.mxu0 %v741
    %2901 = vmatprep.subr.bf16.mxu0 0
    %2902 = vmatpush2.bf16.msra.mxu0 0
    %2903 = vmatprep.subr.bf16.mxu0 0
    %2904 = vmatpush2.bf16.msra.mxu0 0
    %2905 = vmatprep.subr.bf16.mxu0 0
    %2906 = vmatpush2.bf16.msra.mxu0 0
    %2907 = vmatprep.subr.bf16.mxu0 0
    %2908 = vmatpush2.bf16.msra.mxu0 0
    %2909 = vmatprep.subr.bf16.mxu0 0
    %2910 = vmatpush2.bf16.msra.mxu0 0
    %2911 = vmatprep.subr.bf16.mxu0 0
    %2912 = vmatpush2.bf16.msra.mxu0 0
    %2913 = vmatprep.subr.bf16.mxu0 0
    %2914 = vmatpush2.bf16.msra.mxu0 0
    %2915 = vmatprep.subr.bf16.mxu0 0
    %2916 = vmatpush2.bf16.msra.mxu0 0
    %2917 = vmatprep.mubr.bf16.mxu0 0
    %2918 = vmatmul.mubr.bf16.gmra.mxu0 %v2884
    %v2919 = vpop.f32.mrf.mxu0
    %v2920 = vadd.f32 %v331, %v2919
    %v2921 = vpop.f32.mrf.mxu0
    %v2922 = vadd.f32 %v335, %v2921
    %v2923 = vpop.f32.mrf.mxu0
    %v2924 = vpop.f32.mrf.mxu0
    %2925 = vdwg.mxu0
    %2926 = vmatprep.subr.bf16.mxu0 0
    %2927 = vmatpush1.bf16.msra.mxu0 %v764
    %2928 = vmatprep.subr.bf16.mxu0 0
    %2929 = vmatpush1.bf16.msra.mxu0 %v761
    %2930 = vmatprep.subr.bf16.mxu0 0
    %2931 = vmatpush1.bf16.msra.mxu0 %v758
    %2932 = vmatprep.subr.bf16.mxu0 0
    %2933 = vmatpush1.bf16.msra.mxu0 %v755
    %2934 = vmatprep.subr.bf16.mxu0 0
    %2935 = vmatpush1.bf16.msra.mxu0 %v752
    %2936 = vmatprep.subr.bf16.mxu0 0
    %2937 = vmatpush1.bf16.msra.mxu0 %v749
    %2938 = vmatprep.subr.bf16.mxu0 0
    %2939 = vmatpush1.bf16.msra.mxu0 %v746
    %2940 = vmatprep.subr.bf16.mxu0 0
    %2941 = vmatpush1.bf16.msra.mxu0 %v743
    %2942 = vmatprep.subr.bf16.mxu0 0
    %2943 = vmatpush2.bf16.msra.mxu0 0
    %2944 = vmatprep.subr.bf16.mxu0 0
    %2945 = vmatpush2.bf16.msra.mxu0 0
    %2946 = vmatprep.subr.bf16.mxu0 0
    %2947 = vmatpush2.bf16.msra.mxu0 0
    %2948 = vmatprep.subr.bf16.mxu0 0
    %2949 = vmatpush2.bf16.msra.mxu0 0
    %2950 = vmatprep.subr.bf16.mxu0 0
    %2951 = vmatpush2.bf16.msra.mxu0 0
    %2952 = vmatprep.subr.bf16.mxu0 0
    %2953 = vmatpush2.bf16.msra.mxu0 0
    %2954 = vmatprep.subr.bf16.mxu0 0
    %2955 = vmatpush2.bf16.msra.mxu0 0
    %2956 = vmatprep.subr.bf16.mxu0 0
    %2957 = vmatpush2.bf16.msra.mxu0 0
    %2958 = vmatprep.mubr.bf16.mxu0 0
    %2959 = vmatmul.mubr.bf16.gmra.mxu0 %v2884
    %v2960 = vpop.f32.mrf.mxu0
    %v2961 = vadd.f32 %v339, %v2960
    %v2962 = vpop.f32.mrf.mxu0
    %v2963 = vpop.f32.mrf.mxu0
    %v2964 = vpop.f32.mrf.mxu0
    %2965 = vdwg.mxu0
    %v2966 = vpack.c.bf16 %v2748, %v2748
    %2967 = vmatprep.subr.bf16.mxu0 %v1004
    %2968 = vmatpush1.bf16.msra.mxu0 %v1003
    %2969 = vmatprep.subr.bf16.mxu0 %v1001
    %2970 = vmatpush1.bf16.msra.mxu0 %v1000
    %2971 = vmatprep.subr.bf16.mxu0 %v998
    %2972 = vmatpush1.bf16.msra.mxu0 %v997
    %2973 = vmatprep.subr.bf16.mxu0 %v995
    %2974 = vmatpush1.bf16.msra.mxu0 %v994
    %2975 = vmatprep.subr.bf16.mxu0 %v992
    %2976 = vmatpush1.bf16.msra.mxu0 %v991
    %2977 = vmatprep.subr.bf16.mxu0 %v989
    %2978 = vmatpush1.bf16.msra.mxu0 %v988
    %2979 = vmatprep.subr.bf16.mxu0 %v986
    %2980 = vmatpush1.bf16.msra.mxu0 %v985
    %2981 = vmatprep.subr.bf16.mxu0 %v983
    %2982 = vmatpush1.bf16.msra.mxu0 %v982
    %2983 = vmatprep.subr.bf16.mxu0 0
    %2984 = vmatpush2.bf16.msra.mxu0 0
    %2985 = vmatprep.subr.bf16.mxu0 0
    %2986 = vmatpush2.bf16.msra.mxu0 0
    %2987 = vmatprep.subr.bf16.mxu0 0
    %2988 = vmatpush2.bf16.msra.mxu0 0
    %2989 = vmatprep.subr.bf16.mxu0 0
    %2990 = vmatpush2.bf16.msra.mxu0 0
    %2991 = vmatprep.subr.bf16.mxu0 0
    %2992 = vmatpush2.bf16.msra.mxu0 0
    %2993 = vmatprep.subr.bf16.mxu0 0
    %2994 = vmatpush2.bf16.msra.mxu0 0
    %2995 = vmatprep.subr.bf16.mxu0 0
    %2996 = vmatpush2.bf16.msra.mxu0 0
    %2997 = vmatprep.subr.bf16.mxu0 0
    %2998 = vmatpush2.bf16.msra.mxu0 0
    %2999 = vmatprep.mubr.bf16.mxu0 0
    %3000 = vmatmul.mubr.bf16.gmra.mxu0 %v2966
    %v3001 = vpop.f32.mrf.mxu0
    %v3002 = vadd.f32 0.0, %v3001
    %v3003 = vpop.f32.mrf.mxu0
    %v3004 = vadd.f32 0.0, %v3003
    %v3005 = vpop.f32.mrf.mxu0
    %v3006 = vpop.f32.mrf.mxu0
    %3007 = vdwg.mxu0
    %3008 = vmatprep.subr.bf16.mxu0 0
    %3009 = vmatpush1.bf16.msra.mxu0 %v1005
    %3010 = vmatprep.subr.bf16.mxu0 0
    %3011 = vmatpush1.bf16.msra.mxu0 %v1002
    %3012 = vmatprep.subr.bf16.mxu0 0
    %3013 = vmatpush1.bf16.msra.mxu0 %v999
    %3014 = vmatprep.subr.bf16.mxu0 0
    %3015 = vmatpush1.bf16.msra.mxu0 %v996
    %3016 = vmatprep.subr.bf16.mxu0 0
    %3017 = vmatpush1.bf16.msra.mxu0 %v993
    %3018 = vmatprep.subr.bf16.mxu0 0
    %3019 = vmatpush1.bf16.msra.mxu0 %v990
    %3020 = vmatprep.subr.bf16.mxu0 0
    %3021 = vmatpush1.bf16.msra.mxu0 %v987
    %3022 = vmatprep.subr.bf16.mxu0 0
    %3023 = vmatpush1.bf16.msra.mxu0 %v984
    %3024 = vmatprep.subr.bf16.mxu0 0
    %3025 = vmatpush2.bf16.msra.mxu0 0
    %3026 = vmatprep.subr.bf16.mxu0 0
    %3027 = vmatpush2.bf16.msra.mxu0 0
    %3028 = vmatprep.subr.bf16.mxu0 0
    %3029 = vmatpush2.bf16.msra.mxu0 0
    %3030 = vmatprep.subr.bf16.mxu0 0
    %3031 = vmatpush2.bf16.msra.mxu0 0
    %3032 = vmatprep.subr.bf16.mxu0 0
    %3033 = vmatpush2.bf16.msra.mxu0 0
    %3034 = vmatprep.subr.bf16.mxu0 0
    %3035 = vmatpush2.bf16.msra.mxu0 0
    %3036 = vmatprep.subr.bf16.mxu0 0
    %3037 = vmatpush2.bf16.msra.mxu0 0
    %3038 = vmatprep.subr.bf16.mxu0 0
    %3039 = vmatpush2.bf16.msra.mxu0 0
    %3040 = vmatprep.mubr.bf16.mxu0 0
    %3041 = vmatmul.mubr.bf16.gmra.mxu0 %v2966
    %v3042 = vpop.f32.mrf.mxu0
    %v3043 = vadd.f32 0.0, %v3042
    %v3044 = vpop.f32.mrf.mxu0
    %v3045 = vpop.f32.mrf.mxu0
    %v3046 = vpop.f32.mrf.mxu0
    %3047 = vdwg.mxu0
    %v3048 = vadd.f32 %v2920, %v3002
    %v3049 = vxor.u32 %v3048, 2147483648
    %v3050 = vmul.f32 %v3049, 1.442695
    %v3051 = vpow.pop %v3050
    %v3052 = vadd.f32 %v3051, 1.0
    %v3053 = vrcp.pop %v3052
    %v3054 = vmul.f32 1.0, %v3053
    %v3055 = vadd.f32 %v2922, %v3004
    %v3056 = vxor.u32 %v3055, 2147483648
    %v3057 = vmul.f32 %v3056, 1.442695
    %v3058 = vpow.pop %v3057
    %v3059 = vadd.f32 %v3058, 1.0
    %v3060 = vrcp.pop %v3059
    %v3061 = vmul.f32 1.0, %v3060
    %v3062 = vadd.f32 %v3043, %v355
    %v3063 = vmul.f32 %v3054, %v3062
    %v3064 = vadd.f32 %v2961, %v3063
    %v3065 = vtanh.pop %v3064
    %v3066 = vsub.f32 1.0, %v3061
    %v3067 = vmul.f32 %v3066, %v3065
    %v3068 = vmul.f32 %v3061, %v2748
    %v3069 = vadd.f32 %v3067, %v3068
    %v3070 = vmul.f32 %v3069, %v1137
    %3071 = vadd.xlane.f32.xlu0 %v3070
    %v3072 = vpop.xlane.xlu0 %3071
    %v3073 = vadd.f32 %v3072, %v1146
    %v3074 = vmax.f32 %v2753, %v3073
    %v3075 = vsub.f32 %v2753, %v3074
    %v3076 = vmul.f32 %v3075, 1.442695
    %v3077 = vpow.pop %v3076
    %v3078 = vsub.f32 %v3073, %v3074
    %v3079 = vmul.f32 %v3078, 1.442695
    %v3080 = vpow.pop %v3079
    %v3081 = vmul.f32 %v3077, %v2761
    %v3082 = vadd.f32 %v3081, %v3080
    %3084 = vset.pattern.permute.xlu0 0
    %3085 = vperm.xlu0 %3084, %v3077
    %v3086 = vpop.permute.xlu0 %3085
    %v3088 = vmul.f32 %v3086, %v2774
    %3090 = vset.pattern.permute.xlu0 0
    %3091 = vperm.xlu0 %3090, %v3080
    %v3092 = vpop.permute.xlu0 %3091
    %v3094 = vmul.f32 %v3092, %v3069
    %v3095 = vadd.f32 %v3088, %v3094
    %s3096 = smul.u32 7, 3
    %s3097 = smul.addr %s3096, 8
    %s3098 = scalar_lea.vmem [#allocation2], %s3097
    %v3099 = vld [vmem:[%s3098] sm:$0xff]
    %v3100 = vld [vmem:[%s3098 + $0x8] sm:$0xff]
    %v3101 = vld [vmem:[%s3098 + $0x10] sm:$0xff]
    %3102 = vmatprep.subr.bf16.mxu0 %v499
    %3103 = vmatpush1.bf16.msra.mxu0 %v498
    %3104 = vmatprep.subr.bf16.mxu0 %v496
    %3105 = vmatpush1.bf16.msra.mxu0 %v495
    %3106 = vmatprep.subr.bf16.mxu0 %v493
    %3107 = vmatpush1.bf16.msra.mxu0 %v492
    %3108 = vmatprep.subr.bf16.mxu0 %v490
    %3109 = vmatpush1.bf16.msra.mxu0 %v489
    %3110 = vmatprep.subr.bf16.mxu0 %v487
    %3111 = vmatpush1.bf16.msra.mxu0 %v486
    %3112 = vmatprep.subr.bf16.mxu0 %v484
    %3113 = vmatpush1.bf16.msra.mxu0 %v483
    %3114 = vmatprep.subr.bf16.mxu0 %v481
    %3115 = vmatpush1.bf16.msra.mxu0 %v480
    %3116 = vmatprep.subr.bf16.mxu0 %v478
    %3117 = vmatpush1.bf16.msra.mxu0 %v477
    %3118 = vmatprep.subr.bf16.mxu0 0
    %3119 = vmatpush2.bf16.msra.mxu0 0
    %3120 = vmatprep.subr.bf16.mxu0 0
    %3121 = vmatpush2.bf16.msra.mxu0 0
    %3122 = vmatprep.subr.bf16.mxu0 0
    %3123 = vmatpush2.bf16.msra.mxu0 0
    %3124 = vmatprep.subr.bf16.mxu0 0
    %3125 = vmatpush2.bf16.msra.mxu0 0
    %3126 = vmatprep.subr.bf16.mxu0 0
    %3127 = vmatpush2.bf16.msra.mxu0 0
    %3128 = vmatprep.subr.bf16.mxu0 0
    %3129 = vmatpush2.bf16.msra.mxu0 0
    %3130 = vmatprep.subr.bf16.mxu0 0
    %3131 = vmatpush2.bf16.msra.mxu0 0
    %3132 = vmatprep.subr.bf16.mxu0 0
    %3133 = vmatpush2.bf16.msra.mxu0 0
    %3134 = vmatprep.mubr.bf16.mxu0 0
    %3135 = vmatmul.mubr.bf16.gmra.mxu0 %v2884
    %v3136 = vpop.f32.mrf.mxu0
    %v3137 = vadd.f32 0.0, %v3136
    %v3138 = vpop.f32.mrf.mxu0
    %v3139 = vadd.f32 0.0, %v3138
    %v3140 = vpop.f32.mrf.mxu0
    %v3141 = vpop.f32.mrf.mxu0
    %3142 = vdwg.mxu0
    %3143 = vmatprep.subr.bf16.mxu0 0
    %3144 = vmatpush1.bf16.msra.mxu0 %v500
    %3145 = vmatprep.subr.bf16.mxu0 0
    %3146 = vmatpush1.bf16.msra.mxu0 %v497
    %3147 = vmatprep.subr.bf16.mxu0 0
    %3148 = vmatpush1.bf16.msra.mxu0 %v494
    %3149 = vmatprep.subr.bf16.mxu0 0
    %3150 = vmatpush1.bf16.msra.mxu0 %v491
    %3151 = vmatprep.subr.bf16.mxu0 0
    %3152 = vmatpush1.bf16.msra.mxu0 %v488
    %3153 = vmatprep.subr.bf16.mxu0 0
    %3154 = vmatpush1.bf16.msra.mxu0 %v485
    %3155 = vmatprep.subr.bf16.mxu0 0
    %3156 = vmatpush1.bf16.msra.mxu0 %v482
    %3157 = vmatprep.subr.bf16.mxu0 0
    %3158 = vmatpush1.bf16.msra.mxu0 %v479
    %3159 = vmatprep.subr.bf16.mxu0 0
    %3160 = vmatpush2.bf16.msra.mxu0 0
    %3161 = vmatprep.subr.bf16.mxu0 0
    %3162 = vmatpush2.bf16.msra.mxu0 0
    %3163 = vmatprep.subr.bf16.mxu0 0
    %3164 = vmatpush2.bf16.msra.mxu0 0
    %3165 = vmatprep.subr.bf16.mxu0 0
    %3166 = vmatpush2.bf16.msra.mxu0 0
    %3167 = vmatprep.subr.bf16.mxu0 0
    %3168 = vmatpush2.bf16.msra.mxu0 0
    %3169 = vmatprep.subr.bf16.mxu0 0
    %3170 = vmatpush2.bf16.msra.mxu0 0
    %3171 = vmatprep.subr.bf16.mxu0 0
    %3172 = vmatpush2.bf16.msra.mxu0 0
    %3173 = vmatprep.subr.bf16.mxu0 0
    %3174 = vmatpush2.bf16.msra.mxu0 0
    %3175 = vmatprep.mubr.bf16.mxu0 0
    %3176 = vmatmul.mubr.bf16.gmra.mxu0 %v2884
    %v3177 = vpop.f32.mrf.mxu0
    %v3178 = vadd.f32 0.0, %v3177
    %v3179 = vpop.f32.mrf.mxu0
    %v3180 = vpop.f32.mrf.mxu0
    %v3181 = vpop.f32.mrf.mxu0
    %3182 = vdwg.mxu0
    %v3183 = vadd.f32 %v3099, %v3137
    %v3184 = vxor.u32 %v3183, 2147483648
    %v3185 = vmul.f32 %v3184, 1.442695
    %v3186 = vpow.pop %v3185
    %v3187 = vadd.f32 %v3186, 1.0
    %v3188 = vrcp.pop %v3187
    %v3189 = vmul.f32 1.0, %v3188
    %v3190 = vadd.f32 %v3100, %v3139
    %v3191 = vxor.u32 %v3190, 2147483648
    %v3192 = vmul.f32 %v3191, 1.442695
    %v3193 = vpow.pop %v3192
    %v3194 = vadd.f32 %v3193, 1.0
    %v3195 = vrcp.pop %v3194
    %v3196 = vmul.f32 1.0, %v3195
    %v3197 = vadd.f32 %v3178, %v348
    %v3198 = vmul.f32 %v3189, %v3197
    %v3199 = vadd.f32 %v3101, %v3198
    %v3200 = vtanh.pop %v3199
    %v3201 = vsub.f32 1.0, %v3196
    %v3202 = vmul.f32 %v3201, %v3200
    %v3203 = vmul.f32 %v3196, %v2883
    %v3204 = vadd.f32 %v3202, %v3203
    %v3205 = vpack.c.bf16 %v3204, %v3204
    %3206 = vmatprep.subr.bf16.mxu0 %v763
    %3207 = vmatpush1.bf16.msra.mxu0 %v762
    %3208 = vmatprep.subr.bf16.mxu0 %v760
    %3209 = vmatpush1.bf16.msra.mxu0 %v759
    %3210 = vmatprep.subr.bf16.mxu0 %v757
    %3211 = vmatpush1.bf16.msra.mxu0 %v756
    %3212 = vmatprep.subr.bf16.mxu0 %v754
    %3213 = vmatpush1.bf16.msra.mxu0 %v753
    %3214 = vmatprep.subr.bf16.mxu0 %v751
    %3215 = vmatpush1.bf16.msra.mxu0 %v750
    %3216 = vmatprep.subr.bf16.mxu0 %v748
    %3217 = vmatpush1.bf16.msra.mxu0 %v747
    %3218 = vmatprep.subr.bf16.mxu0 %v745
    %3219 = vmatpush1.bf16.msra.mxu0 %v744
    %3220 = vmatprep.subr.bf16.mxu0 %v742
    %3221 = vmatpush1.bf16.msra.mxu0 %v741
    %3222 = vmatprep.subr.bf16.mxu0 0
    %3223 = vmatpush2.bf16.msra.mxu0 0
    %3224 = vmatprep.subr.bf16.mxu0 0
    %3225 = vmatpush2.bf16.msra.mxu0 0
    %3226 = vmatprep.subr.bf16.mxu0 0
    %3227 = vmatpush2.bf16.msra.mxu0 0
    %3228 = vmatprep.subr.bf16.mxu0 0
    %3229 = vmatpush2.bf16.msra.mxu0 0
    %3230 = vmatprep.subr.bf16.mxu0 0
    %3231 = vmatpush2.bf16.msra.mxu0 0
    %3232 = vmatprep.subr.bf16.mxu0 0
    %3233 = vmatpush2.bf16.msra.mxu0 0
    %3234 = vmatprep.subr.bf16.mxu0 0
    %3235 = vmatpush2.bf16.msra.mxu0 0
    %3236 = vmatprep.subr.bf16.mxu0 0
    %3237 = vmatpush2.bf16.msra.mxu0 0
    %3238 = vmatprep.mubr.bf16.mxu0 0
    %3239 = vmatmul.mubr.bf16.gmra.mxu0 %v3205
    %v3240 = vpop.f32.mrf.mxu0
    %v3241 = vadd.f32 %v331, %v3240
    %v3242 = vpop.f32.mrf.mxu0
    %v3243 = vadd.f32 %v335, %v3242
    %v3244 = vpop.f32.mrf.mxu0
    %v3245 = vpop.f32.mrf.mxu0
    %3246 = vdwg.mxu0
    %3247 = vmatprep.subr.bf16.mxu0 0
    %3248 = vmatpush1.bf16.msra.mxu0 %v764
    %3249 = vmatprep.subr.bf16.mxu0 0
    %3250 = vmatpush1.bf16.msra.mxu0 %v761
    %3251 = vmatprep.subr.bf16.mxu0 0
    %3252 = vmatpush1.bf16.msra.mxu0 %v758
    %3253 = vmatprep.subr.bf16.mxu0 0
    %3254 = vmatpush1.bf16.msra.mxu0 %v755
    %3255 = vmatprep.subr.bf16.mxu0 0
    %3256 = vmatpush1.bf16.msra.mxu0 %v752
    %3257 = vmatprep.subr.bf16.mxu0 0
    %3258 = vmatpush1.bf16.msra.mxu0 %v749
    %3259 = vmatprep.subr.bf16.mxu0 0
    %3260 = vmatpush1.bf16.msra.mxu0 %v746
    %3261 = vmatprep.subr.bf16.mxu0 0
    %3262 = vmatpush1.bf16.msra.mxu0 %v743
    %3263 = vmatprep.subr.bf16.mxu0 0
    %3264 = vmatpush2.bf16.msra.mxu0 0
    %3265 = vmatprep.subr.bf16.mxu0 0
    %3266 = vmatpush2.bf16.msra.mxu0 0
    %3267 = vmatprep.subr.bf16.mxu0 0
    %3268 = vmatpush2.bf16.msra.mxu0 0
    %3269 = vmatprep.subr.bf16.mxu0 0
    %3270 = vmatpush2.bf16.msra.mxu0 0
    %3271 = vmatprep.subr.bf16.mxu0 0
    %3272 = vmatpush2.bf16.msra.mxu0 0
    %3273 = vmatprep.subr.bf16.mxu0 0
    %3274 = vmatpush2.bf16.msra.mxu0 0
    %3275 = vmatprep.subr.bf16.mxu0 0
    %3276 = vmatpush2.bf16.msra.mxu0 0
    %3277 = vmatprep.subr.bf16.mxu0 0
    %3278 = vmatpush2.bf16.msra.mxu0 0
    %3279 = vmatprep.mubr.bf16.mxu0 0
    %3280 = vmatmul.mubr.bf16.gmra.mxu0 %v3205
    %v3281 = vpop.f32.mrf.mxu0
    %v3282 = vadd.f32 %v339, %v3281
    %v3283 = vpop.f32.mrf.mxu0
    %v3284 = vpop.f32.mrf.mxu0
    %v3285 = vpop.f32.mrf.mxu0
    %3286 = vdwg.mxu0
    %v3287 = vpack.c.bf16 %v3069, %v3069
    %3288 = vmatprep.subr.bf16.mxu0 %v1004
    %3289 = vmatpush1.bf16.msra.mxu0 %v1003
    %3290 = vmatprep.subr.bf16.mxu0 %v1001
    %3291 = vmatpush1.bf16.msra.mxu0 %v1000
    %3292 = vmatprep.subr.bf16.mxu0 %v998
    %3293 = vmatpush1.bf16.msra.mxu0 %v997
    %3294 = vmatprep.subr.bf16.mxu0 %v995
    %3295 = vmatpush1.bf16.msra.mxu0 %v994
    %3296 = vmatprep.subr.bf16.mxu0 %v992
    %3297 = vmatpush1.bf16.msra.mxu0 %v991
    %3298 = vmatprep.subr.bf16.mxu0 %v989
    %3299 = vmatpush1.bf16.msra.mxu0 %v988
    %3300 = vmatprep.subr.bf16.mxu0 %v986
    %3301 = vmatpush1.bf16.msra.mxu0 %v985
    %3302 = vmatprep.subr.bf16.mxu0 %v983
    %3303 = vmatpush1.bf16.msra.mxu0 %v982
    %3304 = vmatprep.subr.bf16.mxu0 0
    %3305 = vmatpush2.bf16.msra.mxu0 0
    %3306 = vmatprep.subr.bf16.mxu0 0
    %3307 = vmatpush2.bf16.msra.mxu0 0
    %3308 = vmatprep.subr.bf16.mxu0 0
    %3309 = vmatpush2.bf16.msra.mxu0 0
    %3310 = vmatprep.subr.bf16.mxu0 0
    %3311 = vmatpush2.bf16.msra.mxu0 0
    %3312 = vmatprep.subr.bf16.mxu0 0
    %3313 = vmatpush2.bf16.msra.mxu0 0
    %3314 = vmatprep.subr.bf16.mxu0 0
    %3315 = vmatpush2.bf16.msra.mxu0 0
    %3316 = vmatprep.subr.bf16.mxu0 0
    %3317 = vmatpush2.bf16.msra.mxu0 0
    %3318 = vmatprep.subr.bf16.mxu0 0
    %3319 = vmatpush2.bf16.msra.mxu0 0
    %3320 = vmatprep.mubr.bf16.mxu0 0
    %3321 = vmatmul.mubr.bf16.gmra.mxu0 %v3287
    %v3322 = vpop.f32.mrf.mxu0
    %v3323 = vadd.f32 0.0, %v3322
    %v3324 = vpop.f32.mrf.mxu0
    %v3325 = vadd.f32 0.0, %v3324
    %v3326 = vpop.f32.mrf.mxu0
    %v3327 = vpop.f32.mrf.mxu0
    %3328 = vdwg.mxu0
    %3329 = vmatprep.subr.bf16.mxu0 0
    %3330 = vmatpush1.bf16.msra.mxu0 %v1005
    %3331 = vmatprep.subr.bf16.mxu0 0
    %3332 = vmatpush1.bf16.msra.mxu0 %v1002
    %3333 = vmatprep.subr.bf16.mxu0 0
    %3334 = vmatpush1.bf16.msra.mxu0 %v999
    %3335 = vmatprep.subr.bf16.mxu0 0
    %3336 = vmatpush1.bf16.msra.mxu0 %v996
    %3337 = vmatprep.subr.bf16.mxu0 0
    %3338 = vmatpush1.bf16.msra.mxu0 %v993
    %3339 = vmatprep.subr.bf16.mxu0 0
    %3340 = vmatpush1.bf16.msra.mxu0 %v990
    %3341 = vmatprep.subr.bf16.mxu0 0
    %3342 = vmatpush1.bf16.msra.mxu0 %v987
    %3343 = vmatprep.subr.bf16.mxu0 0
    %3344 = vmatpush1.bf16.msra.mxu0 %v984
    %3345 = vmatprep.subr.bf16.mxu0 0
    %3346 = vmatpush2.bf16.msra.mxu0 0
    %3347 = vmatprep.subr.bf16.mxu0 0
    %3348 = vmatpush2.bf16.msra.mxu0 0
    %3349 = vmatprep.subr.bf16.mxu0 0
    %3350 = vmatpush2.bf16.msra.mxu0 0
    %3351 = vmatprep.subr.bf16.mxu0 0
    %3352 = vmatpush2.bf16.msra.mxu0 0
    %3353 = vmatprep.subr.bf16.mxu0 0
    %3354 = vmatpush2.bf16.msra.mxu0 0
    %3355 = vmatprep.subr.bf16.mxu0 0
    %3356 = vmatpush2.bf16.msra.mxu0 0
    %3357 = vmatprep.subr.bf16.mxu0 0
    %3358 = vmatpush2.bf16.msra.mxu0 0
    %3359 = vmatprep.subr.bf16.mxu0 0
    %3360 = vmatpush2.bf16.msra.mxu0 0
    %3361 = vmatprep.mubr.bf16.mxu0 0
    %3362 = vmatmul.mubr.bf16.gmra.mxu0 %v3287
    %v3363 = vpop.f32.mrf.mxu0
    %v3364 = vadd.f32 0.0, %v3363
    %v3365 = vpop.f32.mrf.mxu0
    %v3366 = vpop.f32.mrf.mxu0
    %v3367 = vpop.f32.mrf.mxu0
    %3368 = vdwg.mxu0
    %v3369 = vadd.f32 %v3241, %v3323
    %v3370 = vxor.u32 %v3369, 2147483648
    %v3371 = vmul.f32 %v3370, 1.442695
    %v3372 = vpow.pop %v3371
    %v3373 = vadd.f32 %v3372, 1.0
    %v3374 = vrcp.pop %v3373
    %v3375 = vmul.f32 1.0, %v3374
    %v3376 = vadd.f32 %v3243, %v3325
    %v3377 = vxor.u32 %v3376, 2147483648
    %v3378 = vmul.f32 %v3377, 1.442695
    %v3379 = vpow.pop %v3378
    %v3380 = vadd.f32 %v3379, 1.0
    %v3381 = vrcp.pop %v3380
    %v3382 = vmul.f32 1.0, %v3381
    %v3383 = vadd.f32 %v3364, %v355
    %v3384 = vmul.f32 %v3375, %v3383
    %v3385 = vadd.f32 %v3282, %v3384
    %v3386 = vtanh.pop %v3385
    %v3387 = vsub.f32 1.0, %v3382
    %v3388 = vmul.f32 %v3387, %v3386
    %v3389 = vmul.f32 %v3382, %v3069
    %v3390 = vadd.f32 %v3388, %v3389
    %v3391 = vmul.f32 %v3390, %v1137
    %3392 = vadd.xlane.f32.xlu0 %v3391
    %v3393 = vpop.xlane.xlu0 %3392
    %v3394 = vadd.f32 %v3393, %v1146
    %v3395 = vmax.f32 %v3074, %v3394
    %v3396 = vsub.f32 %v3074, %v3395
    %v3397 = vmul.f32 %v3396, 1.442695
    %v3398 = vpow.pop %v3397
    %v3399 = vsub.f32 %v3394, %v3395
    %v3400 = vmul.f32 %v3399, 1.442695
    %v3401 = vpow.pop %v3400
    %v3402 = vmul.f32 %v3398, %v3082
    %v3403 = vadd.f32 %v3402, %v3401
    %3405 = vset.pattern.permute.xlu0 0
    %3406 = vperm.xlu0 %3405, %v3398
    %v3407 = vpop.permute.xlu0 %3406
    %v3409 = vmul.f32 %v3407, %v3095
    %3411 = vset.pattern.permute.xlu0 0
    %3412 = vperm.xlu0 %3411, %v3401
    %v3413 = vpop.permute.xlu0 %3412
    %v3415 = vmul.f32 %v3413, %v3390
    %v3416 = vadd.f32 %v3409, %v3415
    %3418 = vset.pattern.permute.xlu0 0
    %3419 = vperm.xlu0 %3418, %v3403
    %v3420 = vpop.permute.xlu0 %3419
    %v3422 = vrcp.pop %v3420
    %v3423 = vmul.f32 %v3416, %v3422
    %v3424 = vld [vmem:[#allocation9] sm:$0xff]
    %v3425 = vld [vmem:[#allocation9 + $0x8] sm:$0xff]
    %v3426 = vld [vmem:[#allocation9 + $0x10] sm:$0xff]
    %v3427 = vld [vmem:[#allocation9 + $0x18] sm:$0xff]
    %v3428 = vld [vmem:[#allocation9 + $0x20] sm:$0xff]
    %v3429 = vld [vmem:[#allocation9 + $0x28] sm:$0xff]
    %v3430 = vld [vmem:[#allocation9 + $0x30] sm:$0xff]
    %v3431 = vld [vmem:[#allocation9 + $0x38] sm:$0xff]
    %v3432 = vld [vmem:[#allocation9 + $0x40] sm:$0xff]
    %v3433 = vld [vmem:[#allocation9 + $0x48] sm:$0xff]
    %v3434 = vld [vmem:[#allocation9 + $0x50] sm:$0xff]
    %v3435 = vld [vmem:[#allocation9 + $0x58] sm:$0xff]
    %v3436 = vld [vmem:[#allocation9 + $0x60] sm:$0xff]
    %v3437 = vld [vmem:[#allocation9 + $0x68] sm:$0xff]
    %v3438 = vld [vmem:[#allocation9 + $0x70] sm:$0xff]
    %v3439 = vld [vmem:[#allocation9 + $0x78] sm:$0xff]
    %v3440 = vld [vmem:[%s12] sm:$0x1]
    %v3442 = vlaneseq
    %v3443 = vshrl.u32 %v3442, 7
    %v3444 = vsub.s32 0, %v3443
    %v3445 = vrot.slane %v3440, %v3444
    %3447 = vmatprep.subr.mxu0 0.0
    %3448 = vmatpush1.msra.mxu0 %v3439
    %3449 = vmatprep.subr.mxu0 0.0
    %3450 = vmatpush1.msra.mxu0 %v3438
    %3451 = vmatprep.subr.mxu0 0.0
    %3452 = vmatpush1.msra.mxu0 %v3437
    %3453 = vmatprep.subr.mxu0 0.0
    %3454 = vmatpush1.msra.mxu0 %v3436
    %3455 = vmatprep.subr.mxu0 0.0
    %3456 = vmatpush1.msra.mxu0 %v3435
    %3457 = vmatprep.subr.mxu0 0.0
    %3458 = vmatpush1.msra.mxu0 %v3434
    %3459 = vmatprep.subr.mxu0 0.0
    %3460 = vmatpush1.msra.mxu0 %v3433
    %3461 = vmatprep.subr.mxu0 0.0
    %3462 = vmatpush1.msra.mxu0 %v3432
    %3463 = vmatprep.subr.mxu0 0.0
    %3464 = vmatpush1.msra.mxu0 %v3431
    %3465 = vmatprep.subr.mxu0 0.0
    %3466 = vmatpush1.msra.mxu0 %v3430
    %3467 = vmatprep.subr.mxu0 0.0
    %3468 = vmatpush1.msra.mxu0 %v3429
    %3469 = vmatprep.subr.mxu0 0.0
    %3470 = vmatpush1.msra.mxu0 %v3428
    %3471 = vmatprep.subr.mxu0 0.0
    %3472 = vmatpush1.msra.mxu0 %v3427
    %3473 = vmatprep.subr.mxu0 0.0
    %3474 = vmatpush1.msra.mxu0 %v3426
    %3475 = vmatprep.subr.mxu0 0.0
    %3476 = vmatpush1.msra.mxu0 %v3425
    %3477 = vmatprep.subr.mxu0 0.0
    %3478 = vmatpush1.msra.mxu0 %v3424
    %3479 = vmatprep.subr.mxu0 0.0
    %3480 = vmatpush2.msra.mxu0 0.0
    %3481 = vmatprep.subr.mxu0 0.0
    %3482 = vmatpush2.msra.mxu0 0.0
    %3483 = vmatprep.subr.mxu0 0.0
    %3484 = vmatpush2.msra.mxu0 0.0
    %3485 = vmatprep.subr.mxu0 0.0
    %3486 = vmatpush2.msra.mxu0 0.0
    %3487 = vmatprep.subr.mxu0 0.0
    %3488 = vmatpush2.msra.mxu0 0.0
    %3489 = vmatprep.subr.mxu0 0.0
    %3490 = vmatpush2.msra.mxu0 0.0
    %3491 = vmatprep.subr.mxu0 0.0
    %3492 = vmatpush2.msra.mxu0 0.0
    %3493 = vmatprep.subr.mxu0 0.0
    %3494 = vmatpush2.msra.mxu0 0.0
    %3495 = vmatprep.subr.mxu0 0.0
    %3496 = vmatpush2.msra.mxu0 0.0
    %3497 = vmatprep.subr.mxu0 0.0
    %3498 = vmatpush2.msra.mxu0 0.0
    %3499 = vmatprep.subr.mxu0 0.0
    %3500 = vmatpush2.msra.mxu0 0.0
    %3501 = vmatprep.subr.mxu0 0.0
    %3502 = vmatpush2.msra.mxu0 0.0
    %3503 = vmatprep.subr.mxu0 0.0
    %3504 = vmatpush2.msra.mxu0 0.0
    %3505 = vmatprep.subr.mxu0 0.0
    %3506 = vmatpush2.msra.mxu0 0.0
    %3507 = vmatprep.subr.mxu0 0.0
    %3508 = vmatpush2.msra.mxu0 0.0
    %3509 = vmatprep.subr.mxu0 0.0
    %3510 = vmatpush2.msra.mxu0 0.0
    %3511 = vmatprep.mubr.f32.mxu0 0.0
    %3512 = vmatmul.mubr.f32.gmra.mxu0 %v3423
    %v3513 = vpop.f32.mrf.mxu0
    %v3514 = vadd.f32 %v3445, %v3513
    %v3515 = vpop.f32.mrf.mxu0
    %3516 = vdwg.mxu0
    %3517 = vst [vmem:[%s13] sm:$0xff] %v3514
    // Predicated region
    $region70: #{gru_with_attention_forward.1} parent=1 // pred_check
      _
    $region71: #{gru_with_attention_forward.1} parent=1 // pred_check_branch
      %3519 = sbr.rel (0) target = $region73
    $region72: #{gru_with_attention_forward.1} parent=1 // pred_region
      _
    $region73: #{gru_with_attention_forward.1} parent=1 // pred_fallthru
      _
    // Predicated region
    $region74: #{gru_with_attention_forward.1} parent=1 // pred_check
      _
    $region75: #{gru_with_attention_forward.1} parent=1 // pred_check_branch
      %3521 = sbr.rel (0) target = $region77
    $region76: #{gru_with_attention_forward.1} parent=1 // pred_region
      _
    $region77: #{gru_with_attention_forward.1} parent=1 // pred_fallthru
      _
    %3522 = vsyncpa [#allocation5], 1
    %3523 = vsyncpa [#allocation7], 1
    %3524 = vsyncpa [#allocation10], 1

</llo_original>
